<compile_context>
chip_gen: v7x
topology: tpu7x:2x2x1
jax: 0.10.0
libtpu: 0.0.40
codegen_flags: <defaults>
</compile_context>

<pallas_src>
import jax
import jax.numpy as jnp
from jax import lax
from jax.experimental import pallas as pl
from jax.experimental.pallas import tpu as pltpu


# ----------------------------- fused Pallas kernel -----------------------------

def fused_kernel(x_ref, scale_ref, shift_ref, e_ref, wlane_ref, r_ref,
                 pw2_ref, msel_ref, fcwt_ref, fcb_ref, a_ref, bm_ref,
                 cw_ref, cb_ref, out_ref):
    C = x_ref.shape[1]
    bs = r_ref.shape[0]
    Hi = r_ref.shape[1]
    Wi = e_ref.shape[1]

    e_mat = e_ref[...]                                           # (W, Wi) selector

    # --- proj: BN(eval) + ReLU + 1x1 conv, fused with depth_to_space ---
    # xe[c][h, Wo] = relu(bn(x))[c, h, Wo // bs]   (lane expansion via MXU selector)
    xe = []
    for c in range(C):
        xn = jnp.maximum(x_ref[0, c] * scale_ref[c] + shift_ref[c], 0.0)   # (H, W)
        xe.append(jnp.dot(xn, e_mat, preferred_element_type=jnp.float32))  # (H, Wi)

    # D_b1[h, Wo] = sum_c wp[b1*bs + Wo%bs, c] * xe[c][h, Wo]   (VPU FMAs)
    # d2s[h*bs + b1, :] = D_b1[h, :]                            (row placement, MXU)
    d2s = jnp.zeros((Hi, Wi), jnp.float32)
    for b1 in range(bs):
        d_b1 = jnp.zeros_like(xe[0])
        for c in range(C):
            row = b1 * C + c
            d_b1 = d_b1 + wlane_ref[row:row + 1, :] * xe[c]
        d2s = d2s + jnp.dot(r_ref[b1], d_b1, preferred_element_type=jnp.float32)

    # --- 32x32 avg pool (flattened) + fc + ReLU ---
    # z[r, f] = sum_{c in col-block f%w} d2s[r, c] / 1024, masked to row-block f//w
    z = jnp.dot(d2s, pw2_ref[...], preferred_element_type=jnp.float32) * msel_ref[...]
    # pooled @ fcW^T == colwise-sum(z @ fcW^T)  (sum and matmul commute)
    g = jnp.maximum(
        jnp.sum(jnp.dot(z, fcwt_ref[...], preferred_element_type=jnp.float32),
                axis=0, keepdims=True) + fcb_ref[...], 0.0)               # (1, F)

    # --- bilinear upsample (align_corners=False) as a single expansion matmul ---
    # up[r, c] = sum_f A[r, f] * g[f] * Bm[f, c]
    up = jnp.dot(a_ref[...] * g, bm_ref[...], preferred_element_type=jnp.float32)

    # --- 3x3 conv (2->2) with in-kernel halo: roll + edge masks, no padded copy ---
    rows = lax.broadcasted_iota(jnp.int32, (Hi, Wi), 0)
    cols = lax.broadcasted_iota(jnp.int32, (Hi, Wi), 1)
    row_ok = {d: (rows + d >= 0) & (rows + d < Hi) for d in (-1, 1)}
    col_ok = {d: (cols + d >= 0) & (cols + d < Wi) for d in (-1, 1)}

    def shifted(p, dh, dw):
        q = p
        if dh != 0:
            q = pltpu.roll(q, shift=(-dh) % Hi, axis=0)
        if dw != 0:
            q = pltpu.roll(q, shift=(-dw) % Wi, axis=1)
        if dh != 0:
            q = jnp.where(row_ok[dh], q, 0.0)
        if dw != 0:
            q = jnp.where(col_ok[dw], q, 0.0)
        return q

    acc0 = jnp.zeros((Hi, Wi), jnp.float32) + cb_ref[0]
    acc1 = jnp.zeros((Hi, Wi), jnp.float32) + cb_ref[1]
    for ci, plane in enumerate((d2s, up)):                  # concat order: [d2s, up]
        for kh in range(3):
            for kw in range(3):
                s = shifted(plane, kh - 1, kw - 1)          # computed once, used twice
                acc0 = acc0 + cw_ref[0 * 18 + ci * 9 + kh * 3 + kw] * s
                acc1 = acc1 + cw_ref[1 * 18 + ci * 9 + kh * 3 + kw] * s

    # --- channel softmax + weighted sum ---
    m = jnp.maximum(acc0, acc1)
    e0 = jnp.exp(acc0 - m)
    e1 = jnp.exp(acc1 - m)
    inv = pl.reciprocal(e0 + e1, approx=True)
    out_ref[0, 0] = d2s * (e0 * inv) + up * (e1 * inv)


# ----------------------------- glue helpers -----------------------------

def bilinear_matrix(out_size, in_size):
    """1-D bilinear interpolation weights, PyTorch align_corners=False semantics."""
    i = jnp.arange(out_size, dtype=jnp.float32)
    scale = in_size / out_size
    src = jnp.maximum((i + 0.5) * scale - 0.5, 0.0)
    i0 = jnp.clip(jnp.floor(src).astype(jnp.int32), 0, in_size - 1)
    i1 = jnp.minimum(i0 + 1, in_size - 1)
    lam = src - i0.astype(jnp.float32)
    rows = jnp.arange(out_size)
    A = jnp.zeros((out_size, in_size), jnp.float32)
    A = A.at[rows, i0].add(1.0 - lam)
    A = A.at[rows, i1].add(lam)
    return A


# ----------------------------- forward pass -----------------------------

def d2s_block_truncated(x, params):
    N, C, H, W = x.shape
    bs = params["block_size"]
    Hi, Wi = H * bs, W * bs                   # == image_size (multiples of 32)
    h, w = Hi // 32, Wi // 32
    F = h * w

    # BN(eval) folded into per-channel scale/shift scalars.
    gamma, beta, rmean, rvar = params["bn"]
    inv_std = gamma / jnp.sqrt(rvar + 1e-5)
    scale = inv_std.astype(jnp.float32)                     # (C,)
    shift = (beta - rmean * inv_std).astype(jnp.float32)    # (C,)

    wp = params["proj_w"].reshape(bs * bs, C)               # (bs^2, C)

    wo = jnp.arange(Wi)
    ho = jnp.arange(Hi)
    f = jnp.arange(F)

    # Lane-expansion selector: E[w', Wo] = [Wo // bs == w']
    E = (wo[None, :] // bs == jnp.arange(W)[:, None]).astype(jnp.float32)    # (W, Wi)
    # Lane-periodic 1x1-conv weights: wlane[b1*C+c, Wo] = wp[b1*bs + Wo%bs, c]
    b2 = wo % bs
    wlane = jnp.stack([wp[b1 * bs + b2, c]
                       for b1 in range(bs) for c in range(C)], axis=0)       # (bs*C, Wi)
    # Row-placement selectors: R[b1, Ho, h'] = [Ho == h'*bs + b1]
    R = jnp.stack([(ho[:, None] == jnp.arange(H)[None, :] * bs + b1).astype(jnp.float32)
                   for b1 in range(bs)], axis=0)                             # (bs, Hi, H)

    # Pooling (flattened, mean folded in): PW2[c, f] = [c//32 == f%w]/1024,
    # Msel[r, f] = [r//32 == f//w]
    PW2 = ((wo[:, None] // 32) == (f[None, :] % w)).astype(jnp.float32) / 1024.0
    Msel = ((ho[:, None] // 32) == (f[None, :] // w)).astype(jnp.float32)

    fcWT = params["fc_w"].T.astype(jnp.float32)              # (F, F)
    fcb = params["fc_b"].reshape(1, F).astype(jnp.float32)   # (1, F)

    # Bilinear upsample factored as up = (A * g) @ Bm
    ah = bilinear_matrix(Hi, h)                              # (Hi, h)
    aw = bilinear_matrix(Wi, w)                              # (Wi, w)
    A = ah[:, f // w]                                        # (Hi, F)
    Bm = aw[:, f % w].T                                      # (F, Wi)

    cw = params["conv_w"].reshape(-1).astype(jnp.float32)    # (36,)
    cb = params["conv_b"].astype(jnp.float32)                # (2,)

    smem = pl.BlockSpec(memory_space=pltpu.MemorySpace.SMEM)

    out = pl.pallas_call(
        fused_kernel,
        out_shape=jax.ShapeDtypeStruct((N, 1, Hi, Wi), jnp.float32),
        grid=(N,),
        in_specs=[
            pl.BlockSpec((1, C, H, W), lambda b: (b, 0, 0, 0)),   # x (NCHW, no transpose)
            smem,                                                 # scale (C,)
            smem,                                                 # shift (C,)
            pl.BlockSpec((W, Wi), lambda b: (0, 0)),              # E
            pl.BlockSpec((bs * C, Wi), lambda b: (0, 0)),         # wlane
            pl.BlockSpec((bs, Hi, H), lambda b: (0, 0, 0)),       # R
            pl.BlockSpec((Wi, F), lambda b: (0, 0)),              # PW2
            pl.BlockSpec((Hi, F), lambda b: (0, 0)),              # Msel
            pl.BlockSpec((F, F), lambda b: (0, 0)),               # fcW^T
            pl.BlockSpec((1, F), lambda b: (0, 0)),               # fc bias
            pl.BlockSpec((Hi, F), lambda b: (0, 0)),              # A (upsample rows)
            pl.BlockSpec((F, Wi), lambda b: (0, 0)),              # Bm (upsample cols)
            smem,                                                 # conv weights (36,)
            smem,                                                 # conv bias (2,)
        ],
        out_specs=pl.BlockSpec((1, 1, Hi, Wi), lambda b: (b, 0, 0, 0)),
        compiler_params=pltpu.CompilerParams(
            dimension_semantics=("parallel",)),                   # 2 TCs on v7x
    )(x, scale, shift, E, wlane, R, PW2, Msel, fcWT, fcb, A, Bm, cw, cb)
    return out


# ----------------------------- main -----------------------------

if __name__ == "__main__":
    N, C_in, bs = 2, 4, 2
    image_size = (64, 128)                        # multiples of 32, = (H*bs, W*bs)
    H, W = image_size[0] // bs, image_size[1] // bs
    fc_ch = (image_size[0] // 32) * (image_size[1] // 32)

    key = jax.random.PRNGKey(0)
    keys = jax.random.split(key, 9)
    params = {
        "block_size": bs,
        "bn": (
            1.0 + 0.1 * jax.random.normal(keys[0], (C_in,), jnp.float32),          # gamma
            0.1 * jax.random.normal(keys[1], (C_in,), jnp.float32),                # beta
            0.1 * jax.random.normal(keys[2], (C_in,), jnp.float32),                # running_mean
            1.0 + 0.1 * jnp.abs(jax.random.normal(keys[3], (C_in,), jnp.float32)), # running_var
        ),
        "proj_w": 0.1 * jax.random.normal(keys[4], (bs * bs, C_in, 1, 1), jnp.float32),
        "fc_w": 0.1 * jax.random.normal(keys[5], (fc_ch, fc_ch), jnp.float32),
        "fc_b": 0.1 * jax.random.normal(keys[6], (fc_ch,), jnp.float32),
        "conv_w": 0.1 * jax.random.normal(keys[7], (2, 2, 3, 3), jnp.float32),
        "conv_b": 0.1 * jax.random.normal(keys[8], (2,), jnp.float32),
    }

    x = jax.random.normal(jax.random.PRNGKey(0), (N, C_in, H, W), jnp.float32)

    out = d2s_block_truncated(x, params)
    jax.block_until_ready(out)
    assert out.shape == (N, 1, image_size[0], image_size[1])
    print("KERNEL_OK")
</pallas_src>

<mosaic_0001>
module attributes {stable_mosaic.version = 11 : i64} {
  func.func @fused_kernel(%arg0: i32, %arg1: memref<1x4x32x64xf32, #tpu.memory_space<vmem>>, %arg2: memref<4xf32, #tpu.memory_space<smem>>, %arg3: memref<4xf32, #tpu.memory_space<smem>>, %arg4: memref<64x128xf32, #tpu.memory_space<vmem>>, %arg5: memref<8x128xf32, #tpu.memory_space<vmem>>, %arg6: memref<2x64x32xf32, #tpu.memory_space<vmem>>, %arg7: memref<128x8xf32, #tpu.memory_space<vmem>>, %arg8: memref<64x8xf32, #tpu.memory_space<vmem>>, %arg9: memref<8x8xf32, #tpu.memory_space<vmem>>, %arg10: memref<1x8xf32, #tpu.memory_space<vmem>>, %arg11: memref<64x8xf32, #tpu.memory_space<vmem>>, %arg12: memref<8x128xf32, #tpu.memory_space<vmem>>, %arg13: memref<36xf32, #tpu.memory_space<smem>>, %arg14: memref<2xf32, #tpu.memory_space<smem>>, %arg15: memref<1x1x64x128xf32, #tpu.memory_space<vmem>>) attributes {dimension_semantics = [#tpu.dimension_semantics<parallel>], iteration_bounds = array<i64: 2>, scalar_prefetch = 0 : i64, scratch_operands = 0 : i64, tpu.core_type = #tpu.core_type<tc>, window_params = [{transform_indices = @transform_0, window_bounds = array<i64: 1, 4, 32, 64>}, {transform_indices = @transform_1, window_bounds = array<i64: 4>}, {transform_indices = @transform_2, window_bounds = array<i64: 4>}, {pipeline_mode = #tpu.pipeline_mode<synchronous>, transform_indices = @transform_3, window_bounds = array<i64: 64, 128>}, {pipeline_mode = #tpu.pipeline_mode<synchronous>, transform_indices = @transform_4, window_bounds = array<i64: 8, 128>}, {pipeline_mode = #tpu.pipeline_mode<synchronous>, transform_indices = @transform_5, window_bounds = array<i64: 2, 64, 32>}, {pipeline_mode = #tpu.pipeline_mode<synchronous>, transform_indices = @transform_6, window_bounds = array<i64: 128, 8>}, {pipeline_mode = #tpu.pipeline_mode<synchronous>, transform_indices = @transform_7, window_bounds = array<i64: 64, 8>}, {pipeline_mode = #tpu.pipeline_mode<synchronous>, transform_indices = @transform_8, window_bounds = array<i64: 8, 8>}, {pipeline_mode = #tpu.pipeline_mode<synchronous>, transform_indices = @transform_9, window_bounds = array<i64: 1, 8>}, {pipeline_mode = #tpu.pipeline_mode<synchronous>, transform_indices = @transform_10, window_bounds = array<i64: 64, 8>}, {pipeline_mode = #tpu.pipeline_mode<synchronous>, transform_indices = @transform_11, window_bounds = array<i64: 8, 128>}, {transform_indices = @transform_12, window_bounds = array<i64: 36>}, {transform_indices = @transform_13, window_bounds = array<i64: 2>}, {transform_indices = @transform_14, window_bounds = array<i64: 1, 1, 64, 128>}]} {
    %c0 = arith.constant 0 : index
    %c0_0 = arith.constant 0 : index
    %0 = vector.load %arg4[%c0, %c0_0] : memref<64x128xf32, #tpu.memory_space<vmem>>, vector<64x128xf32>
    %c0_1 = arith.constant 0 : index
    %c0_2 = arith.constant 0 : index
    %c0_3 = arith.constant 0 : index
    %c0_4 = arith.constant 0 : index
    %1 = vector.load %arg1[%c0_1, %c0_2, %c0_3, %c0_4] : memref<1x4x32x64xf32, #tpu.memory_space<vmem>>, vector<1x1x32x64xf32>
    %2 = vector.shape_cast %1 : vector<1x1x32x64xf32> to vector<32x64xf32>
    %c0_5 = arith.constant 0 : index
    %3 = memref.load %arg2[%c0_5] : memref<4xf32, #tpu.memory_space<smem>>
    %4 = vector.broadcast %3 : f32 to vector<32x64xf32>
    %5 = arith.mulf %2, %4 : vector<32x64xf32>
    %c0_6 = arith.constant 0 : index
    %6 = memref.load %arg3[%c0_6] : memref<4xf32, #tpu.memory_space<smem>>
    %7 = vector.broadcast %6 : f32 to vector<32x64xf32>
    %8 = arith.addf %5, %7 : vector<32x64xf32>
    %cst = arith.constant 0.000000e+00 : f32
    %9 = vector.broadcast %cst : f32 to vector<32x64xf32>
    %10 = arith.maximumf %8, %9 : vector<32x64xf32>
    %cst_7 = arith.constant dense<0.000000e+00> : vector<32x128xf32>
    %11 = tpu.matmul %10, %0, %cst_7 {dimension_numbers = #tpu.dot_dimension_numbers<[1], [0], [0], [1], [0, 0, 1, 1], [], []>} : vector<32x64xf32>, vector<64x128xf32>, vector<32x128xf32> -> vector<32x128xf32>
    %c0_8 = arith.constant 0 : index
    %c1 = arith.constant 1 : index
    %c0_9 = arith.constant 0 : index
    %c0_10 = arith.constant 0 : index
    %12 = vector.load %arg1[%c0_8, %c1, %c0_9, %c0_10] : memref<1x4x32x64xf32, #tpu.memory_space<vmem>>, vector<1x1x32x64xf32>
    %13 = vector.shape_cast %12 : vector<1x1x32x64xf32> to vector<32x64xf32>
    %c1_11 = arith.constant 1 : index
    %14 = memref.load %arg2[%c1_11] : memref<4xf32, #tpu.memory_space<smem>>
    %15 = vector.broadcast %14 : f32 to vector<32x64xf32>
    %16 = arith.mulf %13, %15 : vector<32x64xf32>
    %c1_12 = arith.constant 1 : index
    %17 = memref.load %arg3[%c1_12] : memref<4xf32, #tpu.memory_space<smem>>
    %18 = vector.broadcast %17 : f32 to vector<32x64xf32>
    %19 = arith.addf %16, %18 : vector<32x64xf32>
    %cst_13 = arith.constant 0.000000e+00 : f32
    %20 = vector.broadcast %cst_13 : f32 to vector<32x64xf32>
    %21 = arith.maximumf %19, %20 : vector<32x64xf32>
    %cst_14 = arith.constant dense<0.000000e+00> : vector<32x128xf32>
    %22 = tpu.matmul %21, %0, %cst_14 {dimension_numbers = #tpu.dot_dimension_numbers<[1], [0], [0], [1], [0, 0, 1, 1], [], []>} : vector<32x64xf32>, vector<64x128xf32>, vector<32x128xf32> -> vector<32x128xf32>
    %c0_15 = arith.constant 0 : index
    %c2 = arith.constant 2 : index
    %c0_16 = arith.constant 0 : index
    %c0_17 = arith.constant 0 : index
    %23 = vector.load %arg1[%c0_15, %c2, %c0_16, %c0_17] : memref<1x4x32x64xf32, #tpu.memory_space<vmem>>, vector<1x1x32x64xf32>
    %24 = vector.shape_cast %23 : vector<1x1x32x64xf32> to vector<32x64xf32>
    %c2_18 = arith.constant 2 : index
    %25 = memref.load %arg2[%c2_18] : memref<4xf32, #tpu.memory_space<smem>>
    %26 = vector.broadcast %25 : f32 to vector<32x64xf32>
    %27 = arith.mulf %24, %26 : vector<32x64xf32>
    %c2_19 = arith.constant 2 : index
    %28 = memref.load %arg3[%c2_19] : memref<4xf32, #tpu.memory_space<smem>>
    %29 = vector.broadcast %28 : f32 to vector<32x64xf32>
    %30 = arith.addf %27, %29 : vector<32x64xf32>
    %cst_20 = arith.constant 0.000000e+00 : f32
    %31 = vector.broadcast %cst_20 : f32 to vector<32x64xf32>
    %32 = arith.maximumf %30, %31 : vector<32x64xf32>
    %cst_21 = arith.constant dense<0.000000e+00> : vector<32x128xf32>
    %33 = tpu.matmul %32, %0, %cst_21 {dimension_numbers = #tpu.dot_dimension_numbers<[1], [0], [0], [1], [0, 0, 1, 1], [], []>} : vector<32x64xf32>, vector<64x128xf32>, vector<32x128xf32> -> vector<32x128xf32>
    %c0_22 = arith.constant 0 : index
    %c3 = arith.constant 3 : index
    %c0_23 = arith.constant 0 : index
    %c0_24 = arith.constant 0 : index
    %34 = vector.load %arg1[%c0_22, %c3, %c0_23, %c0_24] : memref<1x4x32x64xf32, #tpu.memory_space<vmem>>, vector<1x1x32x64xf32>
    %35 = vector.shape_cast %34 : vector<1x1x32x64xf32> to vector<32x64xf32>
    %c3_25 = arith.constant 3 : index
    %36 = memref.load %arg2[%c3_25] : memref<4xf32, #tpu.memory_space<smem>>
    %37 = vector.broadcast %36 : f32 to vector<32x64xf32>
    %38 = arith.mulf %35, %37 : vector<32x64xf32>
    %c3_26 = arith.constant 3 : index
    %39 = memref.load %arg3[%c3_26] : memref<4xf32, #tpu.memory_space<smem>>
    %40 = vector.broadcast %39 : f32 to vector<32x64xf32>
    %41 = arith.addf %38, %40 : vector<32x64xf32>
    %cst_27 = arith.constant 0.000000e+00 : f32
    %42 = vector.broadcast %cst_27 : f32 to vector<32x64xf32>
    %43 = arith.maximumf %41, %42 : vector<32x64xf32>
    %cst_28 = arith.constant dense<0.000000e+00> : vector<32x128xf32>
    %44 = tpu.matmul %43, %0, %cst_28 {dimension_numbers = #tpu.dot_dimension_numbers<[1], [0], [0], [1], [0, 0, 1, 1], [], []>} : vector<32x64xf32>, vector<64x128xf32>, vector<32x128xf32> -> vector<32x128xf32>
    %cst_29 = arith.constant 0.000000e+00 : f32
    %45 = vector.broadcast %cst_29 : f32 to vector<64x128xf32>
    %cst_30 = arith.constant 0.000000e+00 : f32
    %46 = vector.broadcast %cst_30 : f32 to vector<32x128xf32>
    %c0_31 = arith.constant 0 : index
    %c0_32 = arith.constant 0 : index
    %47 = vector.load %arg5[%c0_31, %c0_32] : memref<8x128xf32, #tpu.memory_space<vmem>>, vector<1x128xf32>
    %48 = vector.broadcast %47 : vector<1x128xf32> to vector<32x128xf32>
    %49 = arith.mulf %48, %11 : vector<32x128xf32>
    %50 = arith.addf %46, %49 : vector<32x128xf32>
    %c1_33 = arith.constant 1 : index
    %c0_34 = arith.constant 0 : index
    %51 = vector.load %arg5[%c1_33, %c0_34] : memref<8x128xf32, #tpu.memory_space<vmem>>, vector<1x128xf32>
    %52 = vector.broadcast %51 : vector<1x128xf32> to vector<32x128xf32>
    %53 = arith.mulf %52, %22 : vector<32x128xf32>
    %54 = arith.addf %50, %53 : vector<32x128xf32>
    %c2_35 = arith.constant 2 : index
    %c0_36 = arith.constant 0 : index
    %55 = vector.load %arg5[%c2_35, %c0_36] : memref<8x128xf32, #tpu.memory_space<vmem>>, vector<1x128xf32>
    %56 = vector.broadcast %55 : vector<1x128xf32> to vector<32x128xf32>
    %57 = arith.mulf %56, %33 : vector<32x128xf32>
    %58 = arith.addf %54, %57 : vector<32x128xf32>
    %c3_37 = arith.constant 3 : index
    %c0_38 = arith.constant 0 : index
    %59 = vector.load %arg5[%c3_37, %c0_38] : memref<8x128xf32, #tpu.memory_space<vmem>>, vector<1x128xf32>
    %60 = vector.broadcast %59 : vector<1x128xf32> to vector<32x128xf32>
    %61 = arith.mulf %60, %44 : vector<32x128xf32>
    %62 = arith.addf %58, %61 : vector<32x128xf32>
    %c0_39 = arith.constant 0 : index
    %c0_40 = arith.constant 0 : index
    %c0_41 = arith.constant 0 : index
    %63 = vector.load %arg6[%c0_39, %c0_40, %c0_41] : memref<2x64x32xf32, #tpu.memory_space<vmem>>, vector<1x64x32xf32>
    %64 = vector.shape_cast %63 : vector<1x64x32xf32> to vector<64x32xf32>
    %cst_42 = arith.constant dense<0.000000e+00> : vector<64x128xf32>
    %65 = tpu.matmul %64, %62, %cst_42 {dimension_numbers = #tpu.dot_dimension_numbers<[1], [0], [0], [1], [0, 0, 1, 1], [], []>} : vector<64x32xf32>, vector<32x128xf32>, vector<64x128xf32> -> vector<64x128xf32>
    %66 = arith.addf %45, %65 : vector<64x128xf32>
    %cst_43 = arith.constant 0.000000e+00 : f32
    %67 = vector.broadcast %cst_43 : f32 to vector<32x128xf32>
    %c4 = arith.constant 4 : index
    %c0_44 = arith.constant 0 : index
    %68 = vector.load %arg5[%c4, %c0_44] : memref<8x128xf32, #tpu.memory_space<vmem>>, vector<1x128xf32>
    %69 = vector.broadcast %68 : vector<1x128xf32> to vector<32x128xf32>
    %70 = arith.mulf %69, %11 : vector<32x128xf32>
    %71 = arith.addf %67, %70 : vector<32x128xf32>
    %c5 = arith.constant 5 : index
    %c0_45 = arith.constant 0 : index
    %72 = vector.load %arg5[%c5, %c0_45] : memref<8x128xf32, #tpu.memory_space<vmem>>, vector<1x128xf32>
    %73 = vector.broadcast %72 : vector<1x128xf32> to vector<32x128xf32>
    %74 = arith.mulf %73, %22 : vector<32x128xf32>
    %75 = arith.addf %71, %74 : vector<32x128xf32>
    %c6 = arith.constant 6 : index
    %c0_46 = arith.constant 0 : index
    %76 = vector.load %arg5[%c6, %c0_46] : memref<8x128xf32, #tpu.memory_space<vmem>>, vector<1x128xf32>
    %77 = vector.broadcast %76 : vector<1x128xf32> to vector<32x128xf32>
    %78 = arith.mulf %77, %33 : vector<32x128xf32>
    %79 = arith.addf %75, %78 : vector<32x128xf32>
    %c7 = arith.constant 7 : index
    %c0_47 = arith.constant 0 : index
    %80 = vector.load %arg5[%c7, %c0_47] : memref<8x128xf32, #tpu.memory_space<vmem>>, vector<1x128xf32>
    %81 = vector.broadcast %80 : vector<1x128xf32> to vector<32x128xf32>
    %82 = arith.mulf %81, %44 : vector<32x128xf32>
    %83 = arith.addf %79, %82 : vector<32x128xf32>
    %c1_48 = arith.constant 1 : index
    %c0_49 = arith.constant 0 : index
    %c0_50 = arith.constant 0 : index
    %84 = vector.load %arg6[%c1_48, %c0_49, %c0_50] : memref<2x64x32xf32, #tpu.memory_space<vmem>>, vector<1x64x32xf32>
    %85 = vector.shape_cast %84 : vector<1x64x32xf32> to vector<64x32xf32>
    %cst_51 = arith.constant dense<0.000000e+00> : vector<64x128xf32>
    %86 = tpu.matmul %85, %83, %cst_51 {dimension_numbers = #tpu.dot_dimension_numbers<[1], [0], [0], [1], [0, 0, 1, 1], [], []>} : vector<64x32xf32>, vector<32x128xf32>, vector<64x128xf32> -> vector<64x128xf32>
    %87 = arith.addf %66, %86 : vector<64x128xf32>
    %c0_52 = arith.constant 0 : index
    %c0_53 = arith.constant 0 : index
    %88 = vector.load %arg7[%c0_52, %c0_53] : memref<128x8xf32, #tpu.memory_space<vmem>>, vector<128x8xf32>
    %cst_54 = arith.constant dense<0.000000e+00> : vector<64x8xf32>
    %89 = tpu.matmul %87, %88, %cst_54 {dimension_numbers = #tpu.dot_dimension_numbers<[1], [0], [0], [1], [0, 0, 1, 1], [], []>} : vector<64x128xf32>, vector<128x8xf32>, vector<64x8xf32> -> vector<64x8xf32>
    %c0_55 = arith.constant 0 : index
    %c0_56 = arith.constant 0 : index
    %90 = vector.load %arg8[%c0_55, %c0_56] : memref<64x8xf32, #tpu.memory_space<vmem>>, vector<64x8xf32>
    %91 = arith.mulf %89, %90 : vector<64x8xf32>
    %c0_57 = arith.constant 0 : index
    %c0_58 = arith.constant 0 : index
    %92 = vector.load %arg9[%c0_57, %c0_58] : memref<8x8xf32, #tpu.memory_space<vmem>>, vector<8x8xf32>
    %cst_59 = arith.constant dense<0.000000e+00> : vector<64x8xf32>
    %93 = tpu.matmul %91, %92, %cst_59 {dimension_numbers = #tpu.dot_dimension_numbers<[1], [0], [0], [1], [0, 0, 1, 1], [], []>} : vector<64x8xf32>, vector<8x8xf32>, vector<64x8xf32> -> vector<64x8xf32>
    %cst_60 = arith.constant dense<0.000000e+00> : vector<8xf32>
    %94 = vector.multi_reduction <add>, %93, %cst_60 [0] : vector<64x8xf32> to vector<8xf32>
    %95 = vector.shape_cast %94 : vector<8xf32> to vector<1x8xf32>
    %c0_61 = arith.constant 0 : index
    %c0_62 = arith.constant 0 : index
    %96 = vector.load %arg10[%c0_61, %c0_62] : memref<1x8xf32, #tpu.memory_space<vmem>>, vector<1x8xf32>
    %97 = arith.addf %95, %96 : vector<1x8xf32>
    %cst_63 = arith.constant 0.000000e+00 : f32
    %98 = vector.broadcast %cst_63 : f32 to vector<1x8xf32>
    %99 = arith.maximumf %97, %98 : vector<1x8xf32>
    %c0_64 = arith.constant 0 : index
    %c0_65 = arith.constant 0 : index
    %100 = vector.load %arg11[%c0_64, %c0_65] : memref<64x8xf32, #tpu.memory_space<vmem>>, vector<64x8xf32>
    %101 = vector.broadcast %99 : vector<1x8xf32> to vector<64x8xf32>
    %102 = arith.mulf %100, %101 : vector<64x8xf32>
    %c0_66 = arith.constant 0 : index
    %c0_67 = arith.constant 0 : index
    %103 = vector.load %arg12[%c0_66, %c0_67] : memref<8x128xf32, #tpu.memory_space<vmem>>, vector<8x128xf32>
    %cst_68 = arith.constant dense<0.000000e+00> : vector<64x128xf32>
    %104 = tpu.matmul %102, %103, %cst_68 {dimension_numbers = #tpu.dot_dimension_numbers<[1], [0], [0], [1], [0, 0, 1, 1], [], []>} : vector<64x8xf32>, vector<8x128xf32>, vector<64x128xf32> -> vector<64x128xf32>
    %105 = tpu.iota {dimensions = array<i32: 0>} : vector<64x128xi32>
    %106 = tpu.iota {dimensions = array<i32: 1>} : vector<64x128xi32>
    %c-1_i32 = arith.constant -1 : i32
    %107 = vector.broadcast %c-1_i32 : i32 to vector<64x128xi32>
    %108 = arith.addi %105, %107 : vector<64x128xi32>
    %c0_i32 = arith.constant 0 : i32
    %109 = vector.broadcast %c0_i32 : i32 to vector<64x128xi32>
    %110 = arith.cmpi sge, %108, %109 : vector<64x128xi32>
    %c-1_i32_69 = arith.constant -1 : i32
    %111 = vector.broadcast %c-1_i32_69 : i32 to vector<64x128xi32>
    %112 = arith.addi %105, %111 : vector<64x128xi32>
    %c64_i32 = arith.constant 64 : i32
    %113 = vector.broadcast %c64_i32 : i32 to vector<64x128xi32>
    %114 = arith.cmpi slt, %112, %113 : vector<64x128xi32>
    %115 = arith.andi %110, %114 : vector<64x128xi1>
    %c1_i32 = arith.constant 1 : i32
    %116 = vector.broadcast %c1_i32 : i32 to vector<64x128xi32>
    %117 = arith.addi %105, %116 : vector<64x128xi32>
    %c0_i32_70 = arith.constant 0 : i32
    %118 = vector.broadcast %c0_i32_70 : i32 to vector<64x128xi32>
    %119 = arith.cmpi sge, %117, %118 : vector<64x128xi32>
    %c1_i32_71 = arith.constant 1 : i32
    %120 = vector.broadcast %c1_i32_71 : i32 to vector<64x128xi32>
    %121 = arith.addi %105, %120 : vector<64x128xi32>
    %c64_i32_72 = arith.constant 64 : i32
    %122 = vector.broadcast %c64_i32_72 : i32 to vector<64x128xi32>
    %123 = arith.cmpi slt, %121, %122 : vector<64x128xi32>
    %124 = arith.andi %119, %123 : vector<64x128xi1>
    %c-1_i32_73 = arith.constant -1 : i32
    %125 = vector.broadcast %c-1_i32_73 : i32 to vector<64x128xi32>
    %126 = arith.addi %106, %125 : vector<64x128xi32>
    %c0_i32_74 = arith.constant 0 : i32
    %127 = vector.broadcast %c0_i32_74 : i32 to vector<64x128xi32>
    %128 = arith.cmpi sge, %126, %127 : vector<64x128xi32>
    %c-1_i32_75 = arith.constant -1 : i32
    %129 = vector.broadcast %c-1_i32_75 : i32 to vector<64x128xi32>
    %130 = arith.addi %106, %129 : vector<64x128xi32>
    %c128_i32 = arith.constant 128 : i32
    %131 = vector.broadcast %c128_i32 : i32 to vector<64x128xi32>
    %132 = arith.cmpi slt, %130, %131 : vector<64x128xi32>
    %133 = arith.andi %128, %132 : vector<64x128xi1>
    %c1_i32_76 = arith.constant 1 : i32
    %134 = vector.broadcast %c1_i32_76 : i32 to vector<64x128xi32>
    %135 = arith.addi %106, %134 : vector<64x128xi32>
    %c0_i32_77 = arith.constant 0 : i32
    %136 = vector.broadcast %c0_i32_77 : i32 to vector<64x128xi32>
    %137 = arith.cmpi sge, %135, %136 : vector<64x128xi32>
    %c1_i32_78 = arith.constant 1 : i32
    %138 = vector.broadcast %c1_i32_78 : i32 to vector<64x128xi32>
    %139 = arith.addi %106, %138 : vector<64x128xi32>
    %c128_i32_79 = arith.constant 128 : i32
    %140 = vector.broadcast %c128_i32_79 : i32 to vector<64x128xi32>
    %141 = arith.cmpi slt, %139, %140 : vector<64x128xi32>
    %142 = arith.andi %137, %141 : vector<64x128xi1>
    %cst_80 = arith.constant 0.000000e+00 : f32
    %143 = vector.broadcast %cst_80 : f32 to vector<64x128xf32>
    %c0_81 = arith.constant 0 : index
    %144 = memref.load %arg14[%c0_81] : memref<2xf32, #tpu.memory_space<smem>>
    %145 = vector.broadcast %144 : f32 to vector<64x128xf32>
    %146 = arith.addf %143, %145 : vector<64x128xf32>
    %cst_82 = arith.constant 0.000000e+00 : f32
    %147 = vector.broadcast %cst_82 : f32 to vector<64x128xf32>
    %c1_83 = arith.constant 1 : index
    %148 = memref.load %arg14[%c1_83] : memref<2xf32, #tpu.memory_space<smem>>
    %149 = vector.broadcast %148 : f32 to vector<64x128xf32>
    %150 = arith.addf %147, %149 : vector<64x128xf32>
    %c1_i32_84 = arith.constant 1 : i32
    %151 = tpu.dynamic_rotate %87 by %c1_i32_84 dim 0 : vector<64x128xf32>, i32 -> vector<64x128xf32>
    %c1_i32_85 = arith.constant 1 : i32
    %152 = tpu.dynamic_rotate %151 by %c1_i32_85 dim 1 : vector<64x128xf32>, i32 -> vector<64x128xf32>
    %cst_86 = arith.constant 0.000000e+00 : f32
    %153 = vector.broadcast %cst_86 : f32 to vector<64x128xf32>
    %154 = arith.select %115, %152, %153 : vector<64x128xi1>, vector<64x128xf32>
    %cst_87 = arith.constant 0.000000e+00 : f32
    %155 = vector.broadcast %cst_87 : f32 to vector<64x128xf32>
    %156 = arith.select %133, %154, %155 : vector<64x128xi1>, vector<64x128xf32>
    %c0_88 = arith.constant 0 : index
    %157 = memref.load %arg13[%c0_88] : memref<36xf32, #tpu.memory_space<smem>>
    %158 = vector.broadcast %157 : f32 to vector<64x128xf32>
    %159 = arith.mulf %158, %156 : vector<64x128xf32>
    %160 = arith.addf %146, %159 : vector<64x128xf32>
    %c18 = arith.constant 18 : index
    %161 = memref.load %arg13[%c18] : memref<36xf32, #tpu.memory_space<smem>>
    %162 = vector.broadcast %161 : f32 to vector<64x128xf32>
    %163 = arith.mulf %162, %156 : vector<64x128xf32>
    %164 = arith.addf %150, %163 : vector<64x128xf32>
    %c1_i32_89 = arith.constant 1 : i32
    %165 = tpu.dynamic_rotate %87 by %c1_i32_89 dim 0 : vector<64x128xf32>, i32 -> vector<64x128xf32>
    %cst_90 = arith.constant 0.000000e+00 : f32
    %166 = vector.broadcast %cst_90 : f32 to vector<64x128xf32>
    %167 = arith.select %115, %165, %166 : vector<64x128xi1>, vector<64x128xf32>
    %c1_91 = arith.constant 1 : index
    %168 = memref.load %arg13[%c1_91] : memref<36xf32, #tpu.memory_space<smem>>
    %169 = vector.broadcast %168 : f32 to vector<64x128xf32>
    %170 = arith.mulf %169, %167 : vector<64x128xf32>
    %171 = arith.addf %160, %170 : vector<64x128xf32>
    %c19 = arith.constant 19 : index
    %172 = memref.load %arg13[%c19] : memref<36xf32, #tpu.memory_space<smem>>
    %173 = vector.broadcast %172 : f32 to vector<64x128xf32>
    %174 = arith.mulf %173, %167 : vector<64x128xf32>
    %175 = arith.addf %164, %174 : vector<64x128xf32>
    %c1_i32_92 = arith.constant 1 : i32
    %176 = tpu.dynamic_rotate %87 by %c1_i32_92 dim 0 : vector<64x128xf32>, i32 -> vector<64x128xf32>
    %c127_i32 = arith.constant 127 : i32
    %177 = tpu.dynamic_rotate %176 by %c127_i32 dim 1 : vector<64x128xf32>, i32 -> vector<64x128xf32>
    %cst_93 = arith.constant 0.000000e+00 : f32
    %178 = vector.broadcast %cst_93 : f32 to vector<64x128xf32>
    %179 = arith.select %115, %177, %178 : vector<64x128xi1>, vector<64x128xf32>
    %cst_94 = arith.constant 0.000000e+00 : f32
    %180 = vector.broadcast %cst_94 : f32 to vector<64x128xf32>
    %181 = arith.select %142, %179, %180 : vector<64x128xi1>, vector<64x128xf32>
    %c2_95 = arith.constant 2 : index
    %182 = memref.load %arg13[%c2_95] : memref<36xf32, #tpu.memory_space<smem>>
    %183 = vector.broadcast %182 : f32 to vector<64x128xf32>
    %184 = arith.mulf %183, %181 : vector<64x128xf32>
    %185 = arith.addf %171, %184 : vector<64x128xf32>
    %c20 = arith.constant 20 : index
    %186 = memref.load %arg13[%c20] : memref<36xf32, #tpu.memory_space<smem>>
    %187 = vector.broadcast %186 : f32 to vector<64x128xf32>
    %188 = arith.mulf %187, %181 : vector<64x128xf32>
    %189 = arith.addf %175, %188 : vector<64x128xf32>
    %c1_i32_96 = arith.constant 1 : i32
    %190 = tpu.dynamic_rotate %87 by %c1_i32_96 dim 1 : vector<64x128xf32>, i32 -> vector<64x128xf32>
    %cst_97 = arith.constant 0.000000e+00 : f32
    %191 = vector.broadcast %cst_97 : f32 to vector<64x128xf32>
    %192 = arith.select %133, %190, %191 : vector<64x128xi1>, vector<64x128xf32>
    %c3_98 = arith.constant 3 : index
    %193 = memref.load %arg13[%c3_98] : memref<36xf32, #tpu.memory_space<smem>>
    %194 = vector.broadcast %193 : f32 to vector<64x128xf32>
    %195 = arith.mulf %194, %192 : vector<64x128xf32>
    %196 = arith.addf %185, %195 : vector<64x128xf32>
    %c21 = arith.constant 21 : index
    %197 = memref.load %arg13[%c21] : memref<36xf32, #tpu.memory_space<smem>>
    %198 = vector.broadcast %197 : f32 to vector<64x128xf32>
    %199 = arith.mulf %198, %192 : vector<64x128xf32>
    %200 = arith.addf %189, %199 : vector<64x128xf32>
    %c4_99 = arith.constant 4 : index
    %201 = memref.load %arg13[%c4_99] : memref<36xf32, #tpu.memory_space<smem>>
    %202 = vector.broadcast %201 : f32 to vector<64x128xf32>
    %203 = arith.mulf %202, %87 : vector<64x128xf32>
    %204 = arith.addf %196, %203 : vector<64x128xf32>
    %c22 = arith.constant 22 : index
    %205 = memref.load %arg13[%c22] : memref<36xf32, #tpu.memory_space<smem>>
    %206 = vector.broadcast %205 : f32 to vector<64x128xf32>
    %207 = arith.mulf %206, %87 : vector<64x128xf32>
    %208 = arith.addf %200, %207 : vector<64x128xf32>
    %c127_i32_100 = arith.constant 127 : i32
    %209 = tpu.dynamic_rotate %87 by %c127_i32_100 dim 1 : vector<64x128xf32>, i32 -> vector<64x128xf32>
    %cst_101 = arith.constant 0.000000e+00 : f32
    %210 = vector.broadcast %cst_101 : f32 to vector<64x128xf32>
    %211 = arith.select %142, %209, %210 : vector<64x128xi1>, vector<64x128xf32>
    %c5_102 = arith.constant 5 : index
    %212 = memref.load %arg13[%c5_102] : memref<36xf32, #tpu.memory_space<smem>>
    %213 = vector.broadcast %212 : f32 to vector<64x128xf32>
    %214 = arith.mulf %213, %211 : vector<64x128xf32>
    %215 = arith.addf %204, %214 : vector<64x128xf32>
    %c23 = arith.constant 23 : index
    %216 = memref.load %arg13[%c23] : memref<36xf32, #tpu.memory_space<smem>>
    %217 = vector.broadcast %216 : f32 to vector<64x128xf32>
    %218 = arith.mulf %217, %211 : vector<64x128xf32>
    %219 = arith.addf %208, %218 : vector<64x128xf32>
    %c63_i32 = arith.constant 63 : i32
    %220 = tpu.dynamic_rotate %87 by %c63_i32 dim 0 : vector<64x128xf32>, i32 -> vector<64x128xf32>
    %c1_i32_103 = arith.constant 1 : i32
    %221 = tpu.dynamic_rotate %220 by %c1_i32_103 dim 1 : vector<64x128xf32>, i32 -> vector<64x128xf32>
    %cst_104 = arith.constant 0.000000e+00 : f32
    %222 = vector.broadcast %cst_104 : f32 to vector<64x128xf32>
    %223 = arith.select %124, %221, %222 : vector<64x128xi1>, vector<64x128xf32>
    %cst_105 = arith.constant 0.000000e+00 : f32
    %224 = vector.broadcast %cst_105 : f32 to vector<64x128xf32>
    %225 = arith.select %133, %223, %224 : vector<64x128xi1>, vector<64x128xf32>
    %c6_106 = arith.constant 6 : index
    %226 = memref.load %arg13[%c6_106] : memref<36xf32, #tpu.memory_space<smem>>
    %227 = vector.broadcast %226 : f32 to vector<64x128xf32>
    %228 = arith.mulf %227, %225 : vector<64x128xf32>
    %229 = arith.addf %215, %228 : vector<64x128xf32>
    %c24 = arith.constant 24 : index
    %230 = memref.load %arg13[%c24] : memref<36xf32, #tpu.memory_space<smem>>
    %231 = vector.broadcast %230 : f32 to vector<64x128xf32>
    %232 = arith.mulf %231, %225 : vector<64x128xf32>
    %233 = arith.addf %219, %232 : vector<64x128xf32>
    %c63_i32_107 = arith.constant 63 : i32
    %234 = tpu.dynamic_rotate %87 by %c63_i32_107 dim 0 : vector<64x128xf32>, i32 -> vector<64x128xf32>
    %cst_108 = arith.constant 0.000000e+00 : f32
    %235 = vector.broadcast %cst_108 : f32 to vector<64x128xf32>
    %236 = arith.select %124, %234, %235 : vector<64x128xi1>, vector<64x128xf32>
    %c7_109 = arith.constant 7 : index
    %237 = memref.load %arg13[%c7_109] : memref<36xf32, #tpu.memory_space<smem>>
    %238 = vector.broadcast %237 : f32 to vector<64x128xf32>
    %239 = arith.mulf %238, %236 : vector<64x128xf32>
    %240 = arith.addf %229, %239 : vector<64x128xf32>
    %c25 = arith.constant 25 : index
    %241 = memref.load %arg13[%c25] : memref<36xf32, #tpu.memory_space<smem>>
    %242 = vector.broadcast %241 : f32 to vector<64x128xf32>
    %243 = arith.mulf %242, %236 : vector<64x128xf32>
    %244 = arith.addf %233, %243 : vector<64x128xf32>
    %c63_i32_110 = arith.constant 63 : i32
    %245 = tpu.dynamic_rotate %87 by %c63_i32_110 dim 0 : vector<64x128xf32>, i32 -> vector<64x128xf32>
    %c127_i32_111 = arith.constant 127 : i32
    %246 = tpu.dynamic_rotate %245 by %c127_i32_111 dim 1 : vector<64x128xf32>, i32 -> vector<64x128xf32>
    %cst_112 = arith.constant 0.000000e+00 : f32
    %247 = vector.broadcast %cst_112 : f32 to vector<64x128xf32>
    %248 = arith.select %124, %246, %247 : vector<64x128xi1>, vector<64x128xf32>
    %cst_113 = arith.constant 0.000000e+00 : f32
    %249 = vector.broadcast %cst_113 : f32 to vector<64x128xf32>
    %250 = arith.select %142, %248, %249 : vector<64x128xi1>, vector<64x128xf32>
    %c8 = arith.constant 8 : index
    %251 = memref.load %arg13[%c8] : memref<36xf32, #tpu.memory_space<smem>>
    %252 = vector.broadcast %251 : f32 to vector<64x128xf32>
    %253 = arith.mulf %252, %250 : vector<64x128xf32>
    %254 = arith.addf %240, %253 : vector<64x128xf32>
    %c26 = arith.constant 26 : index
    %255 = memref.load %arg13[%c26] : memref<36xf32, #tpu.memory_space<smem>>
    %256 = vector.broadcast %255 : f32 to vector<64x128xf32>
    %257 = arith.mulf %256, %250 : vector<64x128xf32>
    %258 = arith.addf %244, %257 : vector<64x128xf32>
    %c1_i32_114 = arith.constant 1 : i32
    %259 = tpu.dynamic_rotate %104 by %c1_i32_114 dim 0 : vector<64x128xf32>, i32 -> vector<64x128xf32>
    %c1_i32_115 = arith.constant 1 : i32
    %260 = tpu.dynamic_rotate %259 by %c1_i32_115 dim 1 : vector<64x128xf32>, i32 -> vector<64x128xf32>
    %cst_116 = arith.constant 0.000000e+00 : f32
    %261 = vector.broadcast %cst_116 : f32 to vector<64x128xf32>
    %262 = arith.select %115, %260, %261 : vector<64x128xi1>, vector<64x128xf32>
    %cst_117 = arith.constant 0.000000e+00 : f32
    %263 = vector.broadcast %cst_117 : f32 to vector<64x128xf32>
    %264 = arith.select %133, %262, %263 : vector<64x128xi1>, vector<64x128xf32>
    %c9 = arith.constant 9 : index
    %265 = memref.load %arg13[%c9] : memref<36xf32, #tpu.memory_space<smem>>
    %266 = vector.broadcast %265 : f32 to vector<64x128xf32>
    %267 = arith.mulf %266, %264 : vector<64x128xf32>
    %268 = arith.addf %254, %267 : vector<64x128xf32>
    %c27 = arith.constant 27 : index
    %269 = memref.load %arg13[%c27] : memref<36xf32, #tpu.memory_space<smem>>
    %270 = vector.broadcast %269 : f32 to vector<64x128xf32>
    %271 = arith.mulf %270, %264 : vector<64x128xf32>
    %272 = arith.addf %258, %271 : vector<64x128xf32>
    %c1_i32_118 = arith.constant 1 : i32
    %273 = tpu.dynamic_rotate %104 by %c1_i32_118 dim 0 : vector<64x128xf32>, i32 -> vector<64x128xf32>
    %cst_119 = arith.constant 0.000000e+00 : f32
    %274 = vector.broadcast %cst_119 : f32 to vector<64x128xf32>
    %275 = arith.select %115, %273, %274 : vector<64x128xi1>, vector<64x128xf32>
    %c10 = arith.constant 10 : index
    %276 = memref.load %arg13[%c10] : memref<36xf32, #tpu.memory_space<smem>>
    %277 = vector.broadcast %276 : f32 to vector<64x128xf32>
    %278 = arith.mulf %277, %275 : vector<64x128xf32>
    %279 = arith.addf %268, %278 : vector<64x128xf32>
    %c28 = arith.constant 28 : index
    %280 = memref.load %arg13[%c28] : memref<36xf32, #tpu.memory_space<smem>>
    %281 = vector.broadcast %280 : f32 to vector<64x128xf32>
    %282 = arith.mulf %281, %275 : vector<64x128xf32>
    %283 = arith.addf %272, %282 : vector<64x128xf32>
    %c1_i32_120 = arith.constant 1 : i32
    %284 = tpu.dynamic_rotate %104 by %c1_i32_120 dim 0 : vector<64x128xf32>, i32 -> vector<64x128xf32>
    %c127_i32_121 = arith.constant 127 : i32
    %285 = tpu.dynamic_rotate %284 by %c127_i32_121 dim 1 : vector<64x128xf32>, i32 -> vector<64x128xf32>
    %cst_122 = arith.constant 0.000000e+00 : f32
    %286 = vector.broadcast %cst_122 : f32 to vector<64x128xf32>
    %287 = arith.select %115, %285, %286 : vector<64x128xi1>, vector<64x128xf32>
    %cst_123 = arith.constant 0.000000e+00 : f32
    %288 = vector.broadcast %cst_123 : f32 to vector<64x128xf32>
    %289 = arith.select %142, %287, %288 : vector<64x128xi1>, vector<64x128xf32>
    %c11 = arith.constant 11 : index
    %290 = memref.load %arg13[%c11] : memref<36xf32, #tpu.memory_space<smem>>
    %291 = vector.broadcast %290 : f32 to vector<64x128xf32>
    %292 = arith.mulf %291, %289 : vector<64x128xf32>
    %293 = arith.addf %279, %292 : vector<64x128xf32>
    %c29 = arith.constant 29 : index
    %294 = memref.load %arg13[%c29] : memref<36xf32, #tpu.memory_space<smem>>
    %295 = vector.broadcast %294 : f32 to vector<64x128xf32>
    %296 = arith.mulf %295, %289 : vector<64x128xf32>
    %297 = arith.addf %283, %296 : vector<64x128xf32>
    %c1_i32_124 = arith.constant 1 : i32
    %298 = tpu.dynamic_rotate %104 by %c1_i32_124 dim 1 : vector<64x128xf32>, i32 -> vector<64x128xf32>
    %cst_125 = arith.constant 0.000000e+00 : f32
    %299 = vector.broadcast %cst_125 : f32 to vector<64x128xf32>
    %300 = arith.select %133, %298, %299 : vector<64x128xi1>, vector<64x128xf32>
    %c12 = arith.constant 12 : index
    %301 = memref.load %arg13[%c12] : memref<36xf32, #tpu.memory_space<smem>>
    %302 = vector.broadcast %301 : f32 to vector<64x128xf32>
    %303 = arith.mulf %302, %300 : vector<64x128xf32>
    %304 = arith.addf %293, %303 : vector<64x128xf32>
    %c30 = arith.constant 30 : index
    %305 = memref.load %arg13[%c30] : memref<36xf32, #tpu.memory_space<smem>>
    %306 = vector.broadcast %305 : f32 to vector<64x128xf32>
    %307 = arith.mulf %306, %300 : vector<64x128xf32>
    %308 = arith.addf %297, %307 : vector<64x128xf32>
    %c13 = arith.constant 13 : index
    %309 = memref.load %arg13[%c13] : memref<36xf32, #tpu.memory_space<smem>>
    %310 = vector.broadcast %309 : f32 to vector<64x128xf32>
    %311 = arith.mulf %310, %104 : vector<64x128xf32>
    %312 = arith.addf %304, %311 : vector<64x128xf32>
    %c31 = arith.constant 31 : index
    %313 = memref.load %arg13[%c31] : memref<36xf32, #tpu.memory_space<smem>>
    %314 = vector.broadcast %313 : f32 to vector<64x128xf32>
    %315 = arith.mulf %314, %104 : vector<64x128xf32>
    %316 = arith.addf %308, %315 : vector<64x128xf32>
    %c127_i32_126 = arith.constant 127 : i32
    %317 = tpu.dynamic_rotate %104 by %c127_i32_126 dim 1 : vector<64x128xf32>, i32 -> vector<64x128xf32>
    %cst_127 = arith.constant 0.000000e+00 : f32
    %318 = vector.broadcast %cst_127 : f32 to vector<64x128xf32>
    %319 = arith.select %142, %317, %318 : vector<64x128xi1>, vector<64x128xf32>
    %c14 = arith.constant 14 : index
    %320 = memref.load %arg13[%c14] : memref<36xf32, #tpu.memory_space<smem>>
    %321 = vector.broadcast %320 : f32 to vector<64x128xf32>
    %322 = arith.mulf %321, %319 : vector<64x128xf32>
    %323 = arith.addf %312, %322 : vector<64x128xf32>
    %c32 = arith.constant 32 : index
    %324 = memref.load %arg13[%c32] : memref<36xf32, #tpu.memory_space<smem>>
    %325 = vector.broadcast %324 : f32 to vector<64x128xf32>
    %326 = arith.mulf %325, %319 : vector<64x128xf32>
    %327 = arith.addf %316, %326 : vector<64x128xf32>
    %c63_i32_128 = arith.constant 63 : i32
    %328 = tpu.dynamic_rotate %104 by %c63_i32_128 dim 0 : vector<64x128xf32>, i32 -> vector<64x128xf32>
    %c1_i32_129 = arith.constant 1 : i32
    %329 = tpu.dynamic_rotate %328 by %c1_i32_129 dim 1 : vector<64x128xf32>, i32 -> vector<64x128xf32>
    %cst_130 = arith.constant 0.000000e+00 : f32
    %330 = vector.broadcast %cst_130 : f32 to vector<64x128xf32>
    %331 = arith.select %124, %329, %330 : vector<64x128xi1>, vector<64x128xf32>
    %cst_131 = arith.constant 0.000000e+00 : f32
    %332 = vector.broadcast %cst_131 : f32 to vector<64x128xf32>
    %333 = arith.select %133, %331, %332 : vector<64x128xi1>, vector<64x128xf32>
    %c15 = arith.constant 15 : index
    %334 = memref.load %arg13[%c15] : memref<36xf32, #tpu.memory_space<smem>>
    %335 = vector.broadcast %334 : f32 to vector<64x128xf32>
    %336 = arith.mulf %335, %333 : vector<64x128xf32>
    %337 = arith.addf %323, %336 : vector<64x128xf32>
    %c33 = arith.constant 33 : index
    %338 = memref.load %arg13[%c33] : memref<36xf32, #tpu.memory_space<smem>>
    %339 = vector.broadcast %338 : f32 to vector<64x128xf32>
    %340 = arith.mulf %339, %333 : vector<64x128xf32>
    %341 = arith.addf %327, %340 : vector<64x128xf32>
    %c63_i32_132 = arith.constant 63 : i32
    %342 = tpu.dynamic_rotate %104 by %c63_i32_132 dim 0 : vector<64x128xf32>, i32 -> vector<64x128xf32>
    %cst_133 = arith.constant 0.000000e+00 : f32
    %343 = vector.broadcast %cst_133 : f32 to vector<64x128xf32>
    %344 = arith.select %124, %342, %343 : vector<64x128xi1>, vector<64x128xf32>
    %c16 = arith.constant 16 : index
    %345 = memref.load %arg13[%c16] : memref<36xf32, #tpu.memory_space<smem>>
    %346 = vector.broadcast %345 : f32 to vector<64x128xf32>
    %347 = arith.mulf %346, %344 : vector<64x128xf32>
    %348 = arith.addf %337, %347 : vector<64x128xf32>
    %c34 = arith.constant 34 : index
    %349 = memref.load %arg13[%c34] : memref<36xf32, #tpu.memory_space<smem>>
    %350 = vector.broadcast %349 : f32 to vector<64x128xf32>
    %351 = arith.mulf %350, %344 : vector<64x128xf32>
    %352 = arith.addf %341, %351 : vector<64x128xf32>
    %c63_i32_134 = arith.constant 63 : i32
    %353 = tpu.dynamic_rotate %104 by %c63_i32_134 dim 0 : vector<64x128xf32>, i32 -> vector<64x128xf32>
    %c127_i32_135 = arith.constant 127 : i32
    %354 = tpu.dynamic_rotate %353 by %c127_i32_135 dim 1 : vector<64x128xf32>, i32 -> vector<64x128xf32>
    %cst_136 = arith.constant 0.000000e+00 : f32
    %355 = vector.broadcast %cst_136 : f32 to vector<64x128xf32>
    %356 = arith.select %124, %354, %355 : vector<64x128xi1>, vector<64x128xf32>
    %cst_137 = arith.constant 0.000000e+00 : f32
    %357 = vector.broadcast %cst_137 : f32 to vector<64x128xf32>
    %358 = arith.select %142, %356, %357 : vector<64x128xi1>, vector<64x128xf32>
    %c17 = arith.constant 17 : index
    %359 = memref.load %arg13[%c17] : memref<36xf32, #tpu.memory_space<smem>>
    %360 = vector.broadcast %359 : f32 to vector<64x128xf32>
    %361 = arith.mulf %360, %358 : vector<64x128xf32>
    %362 = arith.addf %348, %361 : vector<64x128xf32>
    %c35 = arith.constant 35 : index
    %363 = memref.load %arg13[%c35] : memref<36xf32, #tpu.memory_space<smem>>
    %364 = vector.broadcast %363 : f32 to vector<64x128xf32>
    %365 = arith.mulf %364, %358 : vector<64x128xf32>
    %366 = arith.addf %352, %365 : vector<64x128xf32>
    %367 = arith.maximumf %362, %366 : vector<64x128xf32>
    %368 = arith.subf %362, %367 : vector<64x128xf32>
    %369 = math.exp %368 : vector<64x128xf32>
    %370 = arith.subf %366, %367 : vector<64x128xf32>
    %371 = math.exp %370 : vector<64x128xf32>
    %372 = arith.addf %369, %371 : vector<64x128xf32>
    %373 = tpu.reciprocal %372 {approx = true} : vector<64x128xf32> -> vector<64x128xf32>
    %374 = arith.mulf %369, %373 : vector<64x128xf32>
    %375 = arith.mulf %87, %374 : vector<64x128xf32>
    %376 = arith.mulf %371, %373 : vector<64x128xf32>
    %377 = arith.mulf %104, %376 : vector<64x128xf32>
    %378 = arith.addf %375, %377 : vector<64x128xf32>
    %c0_138 = arith.constant 0 : index
    %c0_139 = arith.constant 0 : index
    %c0_140 = arith.constant 0 : index
    %c0_141 = arith.constant 0 : index
    %379 = vector.load %arg15[%c0_138, %c0_139, %c0_140, %c0_141] : memref<1x1x64x128xf32, #tpu.memory_space<vmem>>, vector<1x1x64x128xf32>
    %380 = vector.shape_cast %379 : vector<1x1x64x128xf32> to vector<64x128xf32>
    %381 = vector.shape_cast %378 : vector<64x128xf32> to vector<1x1x64x128xf32>
    tpu.vector_store %arg15[%c0_138, %c0_139, %c0_140, %c0_141], %381 {strides = array<i32>} : memref<1x1x64x128xf32, #tpu.memory_space<vmem>>, vector<1x1x64x128xf32>,
    return
  }
  func.func @transform_0(%arg0: i32) -> (i32, i32, i32, i32) {
    %c0_i32 = arith.constant 0 : i32
    %c0_i32_0 = arith.constant 0 : i32
    %c0_i32_1 = arith.constant 0 : i32
    %c0_i32_2 = arith.constant 0 : i32
    return %arg0, %c0_i32, %c0_i32_0, %c0_i32_1 : i32, i32, i32, i32
  }
  func.func @transform_1(%arg0: i32) -> i32 {
    %c0_i32 = arith.constant 0 : i32
    %c0_i32_0 = arith.constant 0 : i32
    return %c0_i32 : i32
  }
  func.func @transform_2(%arg0: i32) -> i32 {
    %c0_i32 = arith.constant 0 : i32
    %c0_i32_0 = arith.constant 0 : i32
    return %c0_i32 : i32
  }
  func.func @transform_3(%arg0: i32) -> (i32, i32) {
    %c0_i32 = arith.constant 0 : i32
    %c0_i32_0 = arith.constant 0 : i32
    %c0_i32_1 = arith.constant 0 : i32
    return %c0_i32, %c0_i32_0 : i32, i32
  }
  func.func @transform_4(%arg0: i32) -> (i32, i32) {
    %c0_i32 = arith.constant 0 : i32
    %c0_i32_0 = arith.constant 0 : i32
    %c0_i32_1 = arith.constant 0 : i32
    return %c0_i32, %c0_i32_0 : i32, i32
  }
  func.func @transform_5(%arg0: i32) -> (i32, i32, i32) {
    %c0_i32 = arith.constant 0 : i32
    %c0_i32_0 = arith.constant 0 : i32
    %c0_i32_1 = arith.constant 0 : i32
    %c0_i32_2 = arith.constant 0 : i32
    return %c0_i32, %c0_i32_0, %c0_i32_1 : i32, i32, i32
  }
  func.func @transform_6(%arg0: i32) -> (i32, i32) {
    %c0_i32 = arith.constant 0 : i32
    %c0_i32_0 = arith.constant 0 : i32
    %c0_i32_1 = arith.constant 0 : i32
    return %c0_i32, %c0_i32_0 : i32, i32
  }
  func.func @transform_7(%arg0: i32) -> (i32, i32) {
    %c0_i32 = arith.constant 0 : i32
    %c0_i32_0 = arith.constant 0 : i32
    %c0_i32_1 = arith.constant 0 : i32
    return %c0_i32, %c0_i32_0 : i32, i32
  }
  func.func @transform_8(%arg0: i32) -> (i32, i32) {
    %c0_i32 = arith.constant 0 : i32
    %c0_i32_0 = arith.constant 0 : i32
    %c0_i32_1 = arith.constant 0 : i32
    return %c0_i32, %c0_i32_0 : i32, i32
  }
  func.func @transform_9(%arg0: i32) -> (i32, i32) {
    %c0_i32 = arith.constant 0 : i32
    %c0_i32_0 = arith.constant 0 : i32
    %c0_i32_1 = arith.constant 0 : i32
    return %c0_i32, %c0_i32_0 : i32, i32
  }
  func.func @transform_10(%arg0: i32) -> (i32, i32) {
    %c0_i32 = arith.constant 0 : i32
    %c0_i32_0 = arith.constant 0 : i32
    %c0_i32_1 = arith.constant 0 : i32
    return %c0_i32, %c0_i32_0 : i32, i32
  }
  func.func @transform_11(%arg0: i32) -> (i32, i32) {
    %c0_i32 = arith.constant 0 : i32
    %c0_i32_0 = arith.constant 0 : i32
    %c0_i32_1 = arith.constant 0 : i32
    return %c0_i32, %c0_i32_0 : i32, i32
  }
  func.func @transform_12(%arg0: i32) -> i32 {
    %c0_i32 = arith.constant 0 : i32
    %c0_i32_0 = arith.constant 0 : i32
    return %c0_i32 : i32
  }
  func.func @transform_13(%arg0: i32) -> i32 {
    %c0_i32 = arith.constant 0 : i32
    %c0_i32_0 = arith.constant 0 : i32
    return %c0_i32 : i32
  }
  func.func @transform_14(%arg0: i32) -> (i32, i32, i32, i32) {
    %c0_i32 = arith.constant 0 : i32
    %c0_i32_0 = arith.constant 0 : i32
    %c0_i32_1 = arith.constant 0 : i32
    %c0_i32_2 = arith.constant 0 : i32
    return %arg0, %c0_i32, %c0_i32_0, %c0_i32_1 : i32, i32, i32, i32
  }
}

</mosaic_0001>

<llo_original>
// kernel: tpu_custom_call.1
$region0: #{tpu_custom_call.1}
  #allocation0 [shape = 'u32[]', space=smem, size = 0x4, offset = 0x4, fixed_abs, tag = 'smem constant byte address 0x4 - core index']
  #allocation1 [shape = 'u32[144,128]{1,0:T(1,128)}', space=vmem, size = 0x12000, scoped, tag = 'internal scratch']
  %s0 = inlined_call_operand.vmem [shape: f32[2,4,32,64], index: 0, kind: input, shape index: {}]
  %s1 = inlined_call_operand.vmem [shape: f32[4], index: 1, kind: input, shape index: {}]
  %s2 = inlined_call_operand.vmem [shape: f32[4], index: 2, kind: input, shape index: {}]
  %s3 = inlined_call_operand.vmem [shape: f32[64,128], index: 3, kind: input, shape index: {}]
  %s4 = inlined_call_operand.vmem [shape: f32[8,128], index: 4, kind: input, shape index: {}]
  %s5 = inlined_call_operand.vmem [shape: f32[2,64,32], index: 5, kind: input, shape index: {}]
  %s6 = inlined_call_operand.vmem [shape: f32[128,8], index: 6, kind: input, shape index: {}]
  %s7 = inlined_call_operand.vmem [shape: f32[64,8], index: 7, kind: input, shape index: {}]
  %s8 = inlined_call_operand.vmem [shape: f32[8,8], index: 8, kind: input, shape index: {}]
  %s9 = inlined_call_operand.vmem [shape: f32[1,8], index: 9, kind: input, shape index: {}]
  %s10 = inlined_call_operand.vmem [shape: f32[64,8], index: 10, kind: input, shape index: {}]
  %s11 = inlined_call_operand.vmem [shape: f32[8,128], index: 11, kind: input, shape index: {}]
  %s12 = inlined_call_operand.vmem [shape: f32[36], index: 12, kind: input, shape index: {}]
  %s13 = inlined_call_operand.vmem [shape: f32[2], index: 13, kind: input, shape index: {}]
  %s14 = inlined_call_operand.hbm [shape: f32[2,1,64,128], index: 14, kind: output, shape index: {}]
  %s15 = sld [smem:[#allocation0]]
  $region105: #{tpu_custom_call.1} parent=0
    _
  %s17 = ssub.s32 1, %s15
  %s18 = scalar_select 0, %s17, %s15
  $region1: #{tpu_custom_call.1} parent=0
    #allocation2 [shape = 'u8[512]{0}', space=smem, size = 0x200, scoped, tag = 'input window, operand 1, single buffered']
    #allocation3 [shape = 's32[2]{0}', space=sflag, size = 0x8, scoped, tag = 'scoped memory for tpu_custom_call.1']
    #allocation4 [shape = 's32[2]{0}', space=sflag, size = 0x8, scoped, tag = 'scoped memory for tpu_custom_call.1']
    #allocation5 [shape = 'u8[512]{0}', space=smem, size = 0x200, scoped, tag = 'input window, operand 2, single buffered']
    #allocation6 [shape = 's32[1]{0}', space=sflag, size = 0x4, scoped, tag = 'scoped memory for tpu_custom_call.1']
    #allocation7 [shape = 'u8[512]{0}', space=smem, size = 0x200, scoped, tag = 'input window, operand 12, single buffered']
    #allocation8 [shape = 'u8[512]{0}', space=smem, size = 0x200, scoped, tag = 'input window, operand 13, single buffered']
    #allocation9 [shape = 's32[1]{0}', space=sflag, size = 0x4, scoped, tag = 'scoped memory for tpu_custom_call.1']
    #allocation10 [shape = 'u8[65536]{0}', space=vmem, size = 0x10000, scoped, tag = 'output window, operand 0']
    %19 = vsyncpa [#allocation4], 0
    %20 = vsyncpa [#allocation6], 0
    %21 = vsyncpa [#allocation9], 0
    %22 = vsyncpa [#allocation3], 0
    %s23 = scalar_lea.sflag [#allocation3], 1
    %24 = vsyncpa %s23, 0
    loop: start=0, step=1, limit=4
    $region2: #{tpu_custom_call.1} parent=1 // loop_pre_header
      _
    $region3: #{tpu_custom_call.1} parent=1 // loop_header
      %s26 = sphi 0, %s30
      %p27 = scmp.ge.s32.totalorder %s26, 4
      %s36 = sphi 0, %s38
      %s39 = sphi 0, %s36
      %s40 = sphi 0, %s39
      %s56 = sphi 0, %s40
      %s60 = sphi 0, %s60
      %s62 = sphi 0, %s60
      %s63 = sphi 0, %s62
      %s77 = sphi 0, %s63
      %s81 = sphi 0, %s81
      %s83 = sphi 0, %s81
      %s84 = sphi 0, %s83
      %s98 = sphi 0, %s84
      %s102 = sphi 0, %s102
      %s104 = sphi 0, %s102
      %s105 = sphi 0, %s104
      %s119 = sphi 0, %s105
      %s123 = sphi 0, %s123
      %s125 = sphi 0, %s123
      %s126 = sphi 0, %s125
      %s140 = sphi 0, %s126
      %s144 = sphi 0, %s144
      %s146 = sphi 0, %s144
      %s147 = sphi 0, %s146
      %s161 = sphi 0, %s147
      %s165 = sphi 0, %s165
      %s167 = sphi 0, %s165
      %s168 = sphi 0, %s167
      %s182 = sphi 0, %s168
      %s186 = sphi 0, %s186
      %s188 = sphi 0, %s186
      %s189 = sphi 0, %s188
      %s203 = sphi 0, %s189
      %s207 = sphi 0, %s207
      %s209 = sphi 0, %s207
      %s210 = sphi 0, %s209
      %s224 = sphi 0, %s210
      %s228 = sphi 0, %s228
      %s230 = sphi 0, %s228
      %s231 = sphi 0, %s230
      %s245 = sphi 0, %s231
      %s249 = sphi 0, %s249
      %s251 = sphi 0, %s249
      %s252 = sphi 0, %s251
      %s266 = sphi 0, %s252
      %s270 = sphi 0, %s270
      %s272 = sphi 0, %s270
      %s273 = sphi 0, %s272
      %s287 = sphi 0, %s273
      %s291 = sphi 0, %s291
      %s293 = sphi 0, %s291
      %s294 = sphi 0, %s293
      %s308 = sphi 0, %s294
      %s312 = sphi 0, %s312
      %s314 = sphi 0, %s312
      %s315 = sphi 0, %s314
      %s329 = sphi 0, %s315
      %s335 = sphi 0, %s337
      %s338 = sphi 0, %s335
      %s339 = sphi 0, %s338
      %s355 = sphi 0, %s339
    $region4: #{tpu_custom_call.1} parent=1 // loop_header_branch
      %29 = sbr.rel (%p27) target = $region8
    $region5: #{tpu_custom_call.1} parent=1 // loop_body
      %s31 = ssub.s32 %s26, 1
      %s32 = ssub.s32 %s26, 2
      %s33 = sadd.s32 %s26, 1
      %s34 = ssub.s32 %s26, %s33
      %p35 = scmp.eq.s32.totalorder %s34, 0
      %s37 = sadd.s32 %s36, 1
      %s38 = scalar_select %p35, %s36, %s37
      %p41 = pneg %p35
      %p42 = scmp.eq.s32.totalorder %s26, 1
      %p43 = por %p41, %p42
      %p44 = scmp.ne.s32.totalorder %s36, %s39
      %p45 = scmp.eq.s32.totalorder %s26, 0
      %p46 = por %p44, %p45
      %p47 = scmp.ne.s32.totalorder %s36, %s39
      %p48 = scmp.eq.s32.totalorder %s31, 1
      %p49 = por %p47, %p48
      %p50 = scmp.ne.s32.totalorder %s39, %s40
      %p51 = scmp.eq.s32.totalorder %s31, 0
      %p52 = por %p50, %p51
      %p53 = scmp.ne.s32.totalorder %s39, %s40
      %p54 = scmp.eq.s32.totalorder %s32, 1
      %p55 = por %p53, %p54
      %p57 = scmp.ne.s32.totalorder %s40, %s56
      %p58 = scmp.eq.s32.totalorder %s32, 0
      %p59 = por %p57, %p58
      %s61 = sadd.s32 %s60, 1
      %p64 = scmp.eq.s32.totalorder %s26, 1
      %p65 = scmp.ne.s32.totalorder %s60, %s62
      %p66 = scmp.eq.s32.totalorder %s26, 0
      %p67 = por %p65, %p66
      %p68 = scmp.ne.s32.totalorder %s60, %s62
      %p69 = scmp.eq.s32.totalorder %s31, 1
      %p70 = por %p68, %p69
      %p71 = scmp.ne.s32.totalorder %s62, %s63
      %p72 = scmp.eq.s32.totalorder %s31, 0
      %p73 = por %p71, %p72
      %p74 = scmp.ne.s32.totalorder %s62, %s63
      %p75 = scmp.eq.s32.totalorder %s32, 1
      %p76 = por %p74, %p75
      %p78 = scmp.ne.s32.totalorder %s63, %s77
      %p79 = scmp.eq.s32.totalorder %s32, 0
      %p80 = por %p78, %p79
      %s82 = sadd.s32 %s81, 1
      %p85 = scmp.eq.s32.totalorder %s26, 1
      %p86 = scmp.ne.s32.totalorder %s81, %s83
      %p87 = scmp.eq.s32.totalorder %s26, 0
      %p88 = por %p86, %p87
      %p89 = scmp.ne.s32.totalorder %s81, %s83
      %p90 = scmp.eq.s32.totalorder %s31, 1
      %p91 = por %p89, %p90
      %p92 = scmp.ne.s32.totalorder %s83, %s84
      %p93 = scmp.eq.s32.totalorder %s31, 0
      %p94 = por %p92, %p93
      %p95 = scmp.ne.s32.totalorder %s83, %s84
      %p96 = scmp.eq.s32.totalorder %s32, 1
      %p97 = por %p95, %p96
      %p99 = scmp.ne.s32.totalorder %s84, %s98
      %p100 = scmp.eq.s32.totalorder %s32, 0
      %p101 = por %p99, %p100
      %s103 = sadd.s32 %s102, 1
      %p106 = scmp.eq.s32.totalorder %s26, 1
      %p107 = scmp.ne.s32.totalorder %s102, %s104
      %p108 = scmp.eq.s32.totalorder %s26, 0
      %p109 = por %p107, %p108
      %p110 = scmp.ne.s32.totalorder %s102, %s104
      %p111 = scmp.eq.s32.totalorder %s31, 1
      %p112 = por %p110, %p111
      %p113 = scmp.ne.s32.totalorder %s104, %s105
      %p114 = scmp.eq.s32.totalorder %s31, 0
      %p115 = por %p113, %p114
      %p116 = scmp.ne.s32.totalorder %s104, %s105
      %p117 = scmp.eq.s32.totalorder %s32, 1
      %p118 = por %p116, %p117
      %p120 = scmp.ne.s32.totalorder %s105, %s119
      %p121 = scmp.eq.s32.totalorder %s32, 0
      %p122 = por %p120, %p121
      %s124 = sadd.s32 %s123, 1
      %p127 = scmp.eq.s32.totalorder %s26, 1
      %p128 = scmp.ne.s32.totalorder %s123, %s125
      %p129 = scmp.eq.s32.totalorder %s26, 0
      %p130 = por %p128, %p129
      %p131 = scmp.ne.s32.totalorder %s123, %s125
      %p132 = scmp.eq.s32.totalorder %s31, 1
      %p133 = por %p131, %p132
      %p134 = scmp.ne.s32.totalorder %s125, %s126
      %p135 = scmp.eq.s32.totalorder %s31, 0
      %p136 = por %p134, %p135
      %p137 = scmp.ne.s32.totalorder %s125, %s126
      %p138 = scmp.eq.s32.totalorder %s32, 1
      %p139 = por %p137, %p138
      %p141 = scmp.ne.s32.totalorder %s126, %s140
      %p142 = scmp.eq.s32.totalorder %s32, 0
      %p143 = por %p141, %p142
      %s145 = sadd.s32 %s144, 1
      %p148 = scmp.eq.s32.totalorder %s26, 1
      %p149 = scmp.ne.s32.totalorder %s144, %s146
      %p150 = scmp.eq.s32.totalorder %s26, 0
      %p151 = por %p149, %p150
      %p152 = scmp.ne.s32.totalorder %s144, %s146
      %p153 = scmp.eq.s32.totalorder %s31, 1
      %p154 = por %p152, %p153
      %p155 = scmp.ne.s32.totalorder %s146, %s147
      %p156 = scmp.eq.s32.totalorder %s31, 0
      %p157 = por %p155, %p156
      %p158 = scmp.ne.s32.totalorder %s146, %s147
      %p159 = scmp.eq.s32.totalorder %s32, 1
      %p160 = por %p158, %p159
      %p162 = scmp.ne.s32.totalorder %s147, %s161
      %p163 = scmp.eq.s32.totalorder %s32, 0
      %p164 = por %p162, %p163
      %s166 = sadd.s32 %s165, 1
      %p169 = scmp.eq.s32.totalorder %s26, 1
      %p170 = scmp.ne.s32.totalorder %s165, %s167
      %p171 = scmp.eq.s32.totalorder %s26, 0
      %p172 = por %p170, %p171
      %p173 = scmp.ne.s32.totalorder %s165, %s167
      %p174 = scmp.eq.s32.totalorder %s31, 1
      %p175 = por %p173, %p174
      %p176 = scmp.ne.s32.totalorder %s167, %s168
      %p177 = scmp.eq.s32.totalorder %s31, 0
      %p178 = por %p176, %p177
      %p179 = scmp.ne.s32.totalorder %s167, %s168
      %p180 = scmp.eq.s32.totalorder %s32, 1
      %p181 = por %p179, %p180
      %p183 = scmp.ne.s32.totalorder %s168, %s182
      %p184 = scmp.eq.s32.totalorder %s32, 0
      %p185 = por %p183, %p184
      %s187 = sadd.s32 %s186, 1
      %p190 = scmp.eq.s32.totalorder %s26, 1
      %p191 = scmp.ne.s32.totalorder %s186, %s188
      %p192 = scmp.eq.s32.totalorder %s26, 0
      %p193 = por %p191, %p192
      %p194 = scmp.ne.s32.totalorder %s186, %s188
      %p195 = scmp.eq.s32.totalorder %s31, 1
      %p196 = por %p194, %p195
      %p197 = scmp.ne.s32.totalorder %s188, %s189
      %p198 = scmp.eq.s32.totalorder %s31, 0
      %p199 = por %p197, %p198
      %p200 = scmp.ne.s32.totalorder %s188, %s189
      %p201 = scmp.eq.s32.totalorder %s32, 1
      %p202 = por %p200, %p201
      %p204 = scmp.ne.s32.totalorder %s189, %s203
      %p205 = scmp.eq.s32.totalorder %s32, 0
      %p206 = por %p204, %p205
      %s208 = sadd.s32 %s207, 1
      %p211 = scmp.eq.s32.totalorder %s26, 1
      %p212 = scmp.ne.s32.totalorder %s207, %s209
      %p213 = scmp.eq.s32.totalorder %s26, 0
      %p214 = por %p212, %p213
      %p215 = scmp.ne.s32.totalorder %s207, %s209
      %p216 = scmp.eq.s32.totalorder %s31, 1
      %p217 = por %p215, %p216
      %p218 = scmp.ne.s32.totalorder %s209, %s210
      %p219 = scmp.eq.s32.totalorder %s31, 0
      %p220 = por %p218, %p219
      %p221 = scmp.ne.s32.totalorder %s209, %s210
      %p222 = scmp.eq.s32.totalorder %s32, 1
      %p223 = por %p221, %p222
      %p225 = scmp.ne.s32.totalorder %s210, %s224
      %p226 = scmp.eq.s32.totalorder %s32, 0
      %p227 = por %p225, %p226
      %s229 = sadd.s32 %s228, 1
      %p232 = scmp.eq.s32.totalorder %s26, 1
      %p233 = scmp.ne.s32.totalorder %s228, %s230
      %p234 = scmp.eq.s32.totalorder %s26, 0
      %p235 = por %p233, %p234
      %p236 = scmp.ne.s32.totalorder %s228, %s230
      %p237 = scmp.eq.s32.totalorder %s31, 1
      %p238 = por %p236, %p237
      %p239 = scmp.ne.s32.totalorder %s230, %s231
      %p240 = scmp.eq.s32.totalorder %s31, 0
      %p241 = por %p239, %p240
      %p242 = scmp.ne.s32.totalorder %s230, %s231
      %p243 = scmp.eq.s32.totalorder %s32, 1
      %p244 = por %p242, %p243
      %p246 = scmp.ne.s32.totalorder %s231, %s245
      %p247 = scmp.eq.s32.totalorder %s32, 0
      %p248 = por %p246, %p247
      %s250 = sadd.s32 %s249, 1
      %p253 = scmp.eq.s32.totalorder %s26, 1
      %p254 = scmp.ne.s32.totalorder %s249, %s251
      %p255 = scmp.eq.s32.totalorder %s26, 0
      %p256 = por %p254, %p255
      %p257 = scmp.ne.s32.totalorder %s249, %s251
      %p258 = scmp.eq.s32.totalorder %s31, 1
      %p259 = por %p257, %p258
      %p260 = scmp.ne.s32.totalorder %s251, %s252
      %p261 = scmp.eq.s32.totalorder %s31, 0
      %p262 = por %p260, %p261
      %p263 = scmp.ne.s32.totalorder %s251, %s252
      %p264 = scmp.eq.s32.totalorder %s32, 1
      %p265 = por %p263, %p264
      %p267 = scmp.ne.s32.totalorder %s252, %s266
      %p268 = scmp.eq.s32.totalorder %s32, 0
      %p269 = por %p267, %p268
      %s271 = sadd.s32 %s270, 1
      %p274 = scmp.eq.s32.totalorder %s26, 1
      %p275 = scmp.ne.s32.totalorder %s270, %s272
      %p276 = scmp.eq.s32.totalorder %s26, 0
      %p277 = por %p275, %p276
      %p278 = scmp.ne.s32.totalorder %s270, %s272
      %p279 = scmp.eq.s32.totalorder %s31, 1
      %p280 = por %p278, %p279
      %p281 = scmp.ne.s32.totalorder %s272, %s273
      %p282 = scmp.eq.s32.totalorder %s31, 0
      %p283 = por %p281, %p282
      %p284 = scmp.ne.s32.totalorder %s272, %s273
      %p285 = scmp.eq.s32.totalorder %s32, 1
      %p286 = por %p284, %p285
      %p288 = scmp.ne.s32.totalorder %s273, %s287
      %p289 = scmp.eq.s32.totalorder %s32, 0
      %p290 = por %p288, %p289
      %s292 = sadd.s32 %s291, 1
      %p295 = scmp.eq.s32.totalorder %s26, 1
      %p296 = scmp.ne.s32.totalorder %s291, %s293
      %p297 = scmp.eq.s32.totalorder %s26, 0
      %p298 = por %p296, %p297
      %p299 = scmp.ne.s32.totalorder %s291, %s293
      %p300 = scmp.eq.s32.totalorder %s31, 1
      %p301 = por %p299, %p300
      %p302 = scmp.ne.s32.totalorder %s293, %s294
      %p303 = scmp.eq.s32.totalorder %s31, 0
      %p304 = por %p302, %p303
      %p305 = scmp.ne.s32.totalorder %s293, %s294
      %p306 = scmp.eq.s32.totalorder %s32, 1
      %p307 = por %p305, %p306
      %p309 = scmp.ne.s32.totalorder %s294, %s308
      %p310 = scmp.eq.s32.totalorder %s32, 0
      %p311 = por %p309, %p310
      %s313 = sadd.s32 %s312, 1
      %p316 = scmp.eq.s32.totalorder %s26, 1
      %p317 = scmp.ne.s32.totalorder %s312, %s314
      %p318 = scmp.eq.s32.totalorder %s26, 0
      %p319 = por %p317, %p318
      %p320 = scmp.ne.s32.totalorder %s312, %s314
      %p321 = scmp.eq.s32.totalorder %s31, 1
      %p322 = por %p320, %p321
      %p323 = scmp.ne.s32.totalorder %s314, %s315
      %p324 = scmp.eq.s32.totalorder %s31, 0
      %p325 = por %p323, %p324
      %p326 = scmp.ne.s32.totalorder %s314, %s315
      %p327 = scmp.eq.s32.totalorder %s32, 1
      %p328 = por %p326, %p327
      %p330 = scmp.ne.s32.totalorder %s315, %s329
      %p331 = scmp.eq.s32.totalorder %s32, 0
      %p332 = por %p330, %p331
      %s333 = ssub.s32 %s26, %s33
      %p334 = scmp.eq.s32.totalorder %s333, 0
      %s336 = sadd.s32 %s335, 1
      %s337 = scalar_select %p334, %s335, %s336
      %p340 = pneg %p334
      %p341 = scmp.eq.s32.totalorder %s26, 1
      %p342 = por %p340, %p341
      %p343 = scmp.ne.s32.totalorder %s335, %s338
      %p344 = scmp.eq.s32.totalorder %s26, 0
      %p345 = por %p343, %p344
      %p346 = scmp.ne.s32.totalorder %s335, %s338
      %p347 = scmp.eq.s32.totalorder %s31, 1
      %p348 = por %p346, %p347
      %p349 = scmp.ne.s32.totalorder %s338, %s339
      %p350 = scmp.eq.s32.totalorder %s31, 0
      %p351 = por %p349, %p350
      %p352 = scmp.ne.s32.totalorder %s338, %s339
      %p353 = scmp.eq.s32.totalorder %s32, 1
      %p354 = por %p352, %p353
      %p356 = scmp.ne.s32.totalorder %s339, %s355
      %p357 = scmp.eq.s32.totalorder %s32, 0
      %p358 = por %p356, %p357
      %p359 = scmp.le.s32.totalorder 1, %s26
      %p360 = scmp.lt.s32.totalorder %s26, 3
      %p361 = pnand %p359, %p360
      %p362 = pneg %p361
      // Predicated region
      $region9: #{tpu_custom_call.1} parent=5 // pred_check
        _
      $region10: #{tpu_custom_call.1} parent=5 // pred_check_branch
        %364 = sbr.rel (%p361) target = $region12
      $region11: #{tpu_custom_call.1} parent=5 // pred_region
        %s365 = ssub.s32 %s26, 1
        // Predicated region
        $region13: #{tpu_custom_call.1} parent=11 // pred_check
          %p366 = pneg %p73
        $region14: #{tpu_custom_call.1} parent=11 // pred_check_branch
          %368 = sbr.rel (%p366) target = $region16
        $region15: #{tpu_custom_call.1} parent=11 // pred_region
          %s370 = ssub.s32 16, 16
          %371 = vsyncadd [#allocation4], %s370
          %s373 = sshll.u32 %s1, 4
          %s374 = int_to_ptr.vmem [resolvable:$true] %s373
          %376 = dma.vmem_to_smem %s374, 16, [#allocation2], [#allocation4]
        $region16: #{tpu_custom_call.1} parent=11 // pred_fallthru
          _
        // Predicated region
        $region17: #{tpu_custom_call.1} parent=11 // pred_check
          %p377 = pneg %p94
        $region18: #{tpu_custom_call.1} parent=11 // pred_check_branch
          %379 = sbr.rel (%p377) target = $region20
        $region19: #{tpu_custom_call.1} parent=11 // pred_region
          %s381 = ssub.s32 16, 16
          %382 = vsyncadd [#allocation6], %s381
          %s384 = sshll.u32 %s2, 4
          %s385 = int_to_ptr.vmem [resolvable:$true] %s384
          %387 = dma.vmem_to_smem %s385, 16, [#allocation5], [#allocation6]
        $region20: #{tpu_custom_call.1} parent=11 // pred_fallthru
          _
        // Predicated region
        $region21: #{tpu_custom_call.1} parent=11 // pred_check
          %p388 = pneg %p115
        $region22: #{tpu_custom_call.1} parent=11 // pred_check_branch
          %390 = sbr.rel (%p388) target = $region24
        $region23: #{tpu_custom_call.1} parent=11 // pred_region
          _
        $region24: #{tpu_custom_call.1} parent=11 // pred_fallthru
          _
        // Predicated region
        $region25: #{tpu_custom_call.1} parent=11 // pred_check
          %p391 = pneg %p136
        $region26: #{tpu_custom_call.1} parent=11 // pred_check_branch
          %393 = sbr.rel (%p391) target = $region28
        $region27: #{tpu_custom_call.1} parent=11 // pred_region
          _
        $region28: #{tpu_custom_call.1} parent=11 // pred_fallthru
          _
        // Predicated region
        $region29: #{tpu_custom_call.1} parent=11 // pred_check
          %p394 = pneg %p157
        $region30: #{tpu_custom_call.1} parent=11 // pred_check_branch
          %396 = sbr.rel (%p394) target = $region32
        $region31: #{tpu_custom_call.1} parent=11 // pred_region
          _
        $region32: #{tpu_custom_call.1} parent=11 // pred_fallthru
          _
        // Predicated region
        $region33: #{tpu_custom_call.1} parent=11 // pred_check
          %p397 = pneg %p178
        $region34: #{tpu_custom_call.1} parent=11 // pred_check_branch
          %399 = sbr.rel (%p397) target = $region36
        $region35: #{tpu_custom_call.1} parent=11 // pred_region
          _
        $region36: #{tpu_custom_call.1} parent=11 // pred_fallthru
          _
        // Predicated region
        $region37: #{tpu_custom_call.1} parent=11 // pred_check
          %p400 = pneg %p199
        $region38: #{tpu_custom_call.1} parent=11 // pred_check_branch
          %402 = sbr.rel (%p400) target = $region40
        $region39: #{tpu_custom_call.1} parent=11 // pred_region
          _
        $region40: #{tpu_custom_call.1} parent=11 // pred_fallthru
          _
        // Predicated region
        $region41: #{tpu_custom_call.1} parent=11 // pred_check
          %p403 = pneg %p220
        $region42: #{tpu_custom_call.1} parent=11 // pred_check_branch
          %405 = sbr.rel (%p403) target = $region44
        $region43: #{tpu_custom_call.1} parent=11 // pred_region
          _
        $region44: #{tpu_custom_call.1} parent=11 // pred_fallthru
          _
        // Predicated region
        $region45: #{tpu_custom_call.1} parent=11 // pred_check
          %p406 = pneg %p241
        $region46: #{tpu_custom_call.1} parent=11 // pred_check_branch
          %408 = sbr.rel (%p406) target = $region48
        $region47: #{tpu_custom_call.1} parent=11 // pred_region
          _
        $region48: #{tpu_custom_call.1} parent=11 // pred_fallthru
          _
        // Predicated region
        $region49: #{tpu_custom_call.1} parent=11 // pred_check
          %p409 = pneg %p262
        $region50: #{tpu_custom_call.1} parent=11 // pred_check_branch
          %411 = sbr.rel (%p409) target = $region52
        $region51: #{tpu_custom_call.1} parent=11 // pred_region
          _
        $region52: #{tpu_custom_call.1} parent=11 // pred_fallthru
          _
        // Predicated region
        $region53: #{tpu_custom_call.1} parent=11 // pred_check
          %p412 = pneg %p283
        $region54: #{tpu_custom_call.1} parent=11 // pred_check_branch
          %414 = sbr.rel (%p412) target = $region56
        $region55: #{tpu_custom_call.1} parent=11 // pred_region
          _
        $region56: #{tpu_custom_call.1} parent=11 // pred_fallthru
          _
        // Predicated region
        $region57: #{tpu_custom_call.1} parent=11 // pred_check
          %p415 = pneg %p304
        $region58: #{tpu_custom_call.1} parent=11 // pred_check_branch
          %417 = sbr.rel (%p415) target = $region60
        $region59: #{tpu_custom_call.1} parent=11 // pred_region
          %s419 = ssub.s32 16, 16
          %420 = vsyncadd [#allocation6], %s419
          %s422 = sshll.u32 %s12, 4
          %s423 = int_to_ptr.vmem [resolvable:$true] %s422
          %425 = dma.vmem_to_smem %s423, 16, [#allocation7], [#allocation6]
        $region60: #{tpu_custom_call.1} parent=11 // pred_fallthru
          _
        // Predicated region
        $region61: #{tpu_custom_call.1} parent=11 // pred_check
          %p426 = pneg %p325
        $region62: #{tpu_custom_call.1} parent=11 // pred_check_branch
          %428 = sbr.rel (%p426) target = $region64
        $region63: #{tpu_custom_call.1} parent=11 // pred_region
          %s430 = ssub.s32 16, 16
          %431 = vsyncadd [#allocation9], %s430
          %s433 = sshll.u32 %s13, 4
          %s434 = int_to_ptr.vmem [resolvable:$true] %s433
          %436 = dma.vmem_to_smem %s434, 16, [#allocation8], [#allocation9]
        $region64: #{tpu_custom_call.1} parent=11 // pred_fallthru
          _
      $region12: #{tpu_custom_call.1} parent=5 // pred_fallthru
        _
      %p437 = scmp.lt.s32.totalorder %s26, 2
      // Predicated region
      $region65: #{tpu_custom_call.1} parent=5 // pred_check
        %p438 = pneg %p437
      $region66: #{tpu_custom_call.1} parent=5 // pred_check_branch
        %440 = sbr.rel (%p438) target = $region68
      $region67: #{tpu_custom_call.1} parent=5 // pred_region
        // Predicated region
        $region69: #{tpu_custom_call.1} parent=67 // pred_check
          %p441 = pneg %p46
        $region70: #{tpu_custom_call.1} parent=67 // pred_check_branch
          %443 = sbr.rel (%p441) target = $region72
        $region71: #{tpu_custom_call.1} parent=67 // pred_region
          %p444 = scmp.lt.s32.totalorder %s26, 1
          %s445 = scalar_select %p444, %s26, 1
          %s446 = smul.addr %s445, 16
          %s447 = smul.addr %s446, 8
          %s448 = scalar_lea.vmem %s0, %s447
        $region72: #{tpu_custom_call.1} parent=67 // pred_fallthru
          _
      $region68: #{tpu_custom_call.1} parent=5 // pred_fallthru
        _
      %p449 = scmp.le.s32.totalorder 1, %s26
      %p450 = scmp.lt.s32.totalorder %s26, 3
      %p451 = pnand %p449, %p450
      %p452 = pneg %p451
      // Predicated region
      $region73: #{tpu_custom_call.1} parent=5 // pred_check
        _
      $region74: #{tpu_custom_call.1} parent=5 // pred_check_branch
        %454 = sbr.rel (%p451) target = $region76
      $region75: #{tpu_custom_call.1} parent=5 // pred_region
        %s455 = ssub.s32 %s26, 1
        // Predicated region
        $region77: #{tpu_custom_call.1} parent=75 // pred_check
          %p456 = pneg %p73
        $region78: #{tpu_custom_call.1} parent=75 // pred_check_branch
          %458 = sbr.rel (%p456) target = $region80
        $region79: #{tpu_custom_call.1} parent=75 // pred_region
          %459 = dma.done [#allocation4], 16
        $region80: #{tpu_custom_call.1} parent=75 // pred_fallthru
          _
        // Predicated region
        $region81: #{tpu_custom_call.1} parent=75 // pred_check
          %p460 = pneg %p94
        $region82: #{tpu_custom_call.1} parent=75 // pred_check_branch
          %462 = sbr.rel (%p460) target = $region84
        $region83: #{tpu_custom_call.1} parent=75 // pred_region
          %463 = dma.done [#allocation6], 16
        $region84: #{tpu_custom_call.1} parent=75 // pred_fallthru
          _
        // Predicated region
        $region85: #{tpu_custom_call.1} parent=75 // pred_check
          %p464 = pneg %p304
        $region86: #{tpu_custom_call.1} parent=75 // pred_check_branch
          %466 = sbr.rel (%p464) target = $region88
        $region87: #{tpu_custom_call.1} parent=75 // pred_region
          %467 = dma.done [#allocation6], 16
        $region88: #{tpu_custom_call.1} parent=75 // pred_fallthru
          _
        // Predicated region
        $region89: #{tpu_custom_call.1} parent=75 // pred_check
          %p468 = pneg %p325
        $region90: #{tpu_custom_call.1} parent=75 // pred_check_branch
          %470 = sbr.rel (%p468) target = $region92
        $region91: #{tpu_custom_call.1} parent=75 // pred_region
          %471 = dma.done [#allocation9], 16
        $region92: #{tpu_custom_call.1} parent=75 // pred_fallthru
          _
        %472 = sfence
        %p473 = scmp.lt.s32.totalorder %s31, 1
        %s474 = scalar_select %p473, %s31, 1
        %s475 = smul.addr %s474, 16
        %s476 = smul.addr %s475, 8
        %s477 = scalar_lea.vmem %s0, %s476
        %p478 = pneg %p52
        %p479 = pneg %p49
        %p480 = pneg %p73
        %p481 = pneg %p70
        %p482 = pneg %p94
        %p483 = pneg %p91
        %p484 = pneg %p115
        %p485 = pneg %p112
        %p486 = pneg %p136
        %p487 = pneg %p133
        %p488 = pneg %p157
        %p489 = pneg %p154
        %p490 = pneg %p178
        %p491 = pneg %p175
        %p492 = pneg %p199
        %p493 = pneg %p196
        %p494 = pneg %p220
        %p495 = pneg %p217
        %p496 = pneg %p241
        %p497 = pneg %p238
        %p498 = pneg %p262
        %p499 = pneg %p259
        %p500 = pneg %p283
        %p501 = pneg %p280
        %p502 = pneg %p304
        %p503 = pneg %p301
        %p504 = pneg %p325
        %p505 = pneg %p322
        %p506 = pneg %p351
        %p507 = pneg %p348
        %s508 = sand.u32 %s338, 1
        %s509 = scalar_lea.sflag [#allocation3], %s508
        %s510 = sand.u32 %s338, 1
        %s511 = smul.addr %s510, 64
        %s512 = scalar_lea.vmem [#allocation10], %s511
        %p513 = scmp.lt.s32.totalorder %s31, 1
        %s514 = scalar_select %p513, %s31, 1
        %s515 = smul.addr %s514, 16
        %s516 = smul.addr %s515, 8
        %s517 = scalar_lea.vmem %s0, %s516
        %v518 = vld [vmem:[%s3] sm:$0xff]
        %v519 = vld [vmem:[%s3 + $0x8] sm:$0xff]
        %v520 = vld [vmem:[%s3 + $0x10] sm:$0xff]
        %v521 = vld [vmem:[%s3 + $0x18] sm:$0xff]
        %v522 = vld [vmem:[%s3 + $0x20] sm:$0xff]
        %v523 = vld [vmem:[%s3 + $0x28] sm:$0xff]
        %v524 = vld [vmem:[%s3 + $0x30] sm:$0xff]
        %v525 = vld [vmem:[%s3 + $0x38] sm:$0xff]
        %v526 = vld [vmem:[%s517] sm:$0xff]
        %v527 = vld [vmem:[%s517 + $0x8] sm:$0xff]
        %v528 = vld [vmem:[%s517 + $0x10] sm:$0xff]
        %v529 = vld [vmem:[%s517 + $0x18] sm:$0xff]
        %s530 = sld [smem:[#allocation2]]
        %v531 = vstv %s530
        %v532 = vmul.f32 %v526, %v531
        %v533 = vmul.f32 %v527, %v531
        %v534 = vmul.f32 %v528, %v531
        %v535 = vmul.f32 %v529, %v531
        %s536 = sld [smem:[#allocation5]]
        %v537 = vstv %s536
        %v538 = vadd.f32 %v532, %v537
        %v539 = vadd.f32 %v533, %v537
        %v540 = vadd.f32 %v534, %v537
        %v541 = vadd.f32 %v535, %v537
        %v542 = vmax.f32 %v538, 0.0
        %v543 = vmax.f32 %v539, 0.0
        %v544 = vmax.f32 %v540, 0.0
        %v545 = vmax.f32 %v541, 0.0
        %vm546 = vcmask 523264
        %v548 = vsel %vm546, %v542, 0
        %v551 = vsel %vm546, %v543, 0
        %v554 = vsel %vm546, %v544, 0
        %v557 = vsel %vm546, %v545, 0
        %559 = vmatprep.subr.mxu0 0.0
        %560 = vmatpush1.msra.mxu0 %v518
        %561 = vmatprep.subr.mxu0 0.0
        %562 = vmatpush1.msra.mxu0 %v519
        %563 = vmatprep.subr.mxu0 0.0
        %564 = vmatpush1.msra.mxu0 %v520
        %565 = vmatprep.subr.mxu0 0.0
        %566 = vmatpush1.msra.mxu0 %v521
        %567 = vmatprep.subr.mxu0 0.0
        %568 = vmatpush1.msra.mxu0 %v522
        %569 = vmatprep.subr.mxu0 0.0
        %570 = vmatpush1.msra.mxu0 %v523
        %571 = vmatprep.subr.mxu0 0.0
        %572 = vmatpush1.msra.mxu0 %v524
        %573 = vmatprep.subr.mxu0 0.0
        %574 = vmatpush1.msra.mxu0 %v525
        %575 = vmatprep.subr.mxu0 0.0
        %576 = vmatpush1.msra.mxu0 0.0
        %577 = vmatprep.subr.mxu0 0.0
        %578 = vmatpush1.msra.mxu0 0.0
        %579 = vmatprep.subr.mxu0 0.0
        %580 = vmatpush1.msra.mxu0 0.0
        %581 = vmatprep.subr.mxu0 0.0
        %582 = vmatpush1.msra.mxu0 0.0
        %583 = vmatprep.subr.mxu0 0.0
        %584 = vmatpush1.msra.mxu0 0.0
        %585 = vmatprep.subr.mxu0 0.0
        %586 = vmatpush1.msra.mxu0 0.0
        %587 = vmatprep.subr.mxu0 0.0
        %588 = vmatpush1.msra.mxu0 0.0
        %589 = vmatprep.subr.mxu0 0.0
        %590 = vmatpush1.msra.mxu0 0.0
        %591 = vmatprep.subr.mxu0 0.0
        %592 = vmatpush1.msra.mxu0 0.0
        %593 = vmatprep.subr.mxu0 0.0
        %594 = vmatpush1.msra.mxu0 0.0
        %595 = vmatprep.subr.mxu0 0.0
        %596 = vmatpush1.msra.mxu0 0.0
        %597 = vmatprep.subr.mxu0 0.0
        %598 = vmatpush1.msra.mxu0 0.0
        %599 = vmatprep.subr.mxu0 0.0
        %600 = vmatpush1.msra.mxu0 0.0
        %601 = vmatprep.subr.mxu0 0.0
        %602 = vmatpush1.msra.mxu0 0.0
        %603 = vmatprep.subr.mxu0 0.0
        %604 = vmatpush1.msra.mxu0 0.0
        %605 = vmatprep.subr.mxu0 0.0
        %606 = vmatpush1.msra.mxu0 0.0
        %607 = vmatprep.subr.mxu0 0.0
        %608 = vmatpush1.msra.mxu0 0.0
        %609 = vmatprep.subr.mxu0 0.0
        %610 = vmatpush1.msra.mxu0 0.0
        %611 = vmatprep.subr.mxu0 0.0
        %612 = vmatpush1.msra.mxu0 0.0
        %613 = vmatprep.subr.mxu0 0.0
        %614 = vmatpush1.msra.mxu0 0.0
        %615 = vmatprep.subr.mxu0 0.0
        %616 = vmatpush1.msra.mxu0 0.0
        %617 = vmatprep.subr.mxu0 0.0
        %618 = vmatpush1.msra.mxu0 0.0
        %619 = vmatprep.subr.mxu0 0.0
        %620 = vmatpush1.msra.mxu0 0.0
        %621 = vmatprep.subr.mxu0 0.0
        %622 = vmatpush1.msra.mxu0 0.0
        %623 = vmatprep.mubr.f32.mxu0 0.0
        %624 = vmatmul.mubr.f32.gmra.mrb[0].mxu0 %v548
        %v625 = vpop.f32.mrb[0].mxu0
        %v626 = vadd.f32 0.0, %v625
        %v627 = vpop.f32.mrb[0].mxu0
        %628 = vmatprep.mubr.f32.mxu0 0.0
        %629 = vmatmul.mubr.f32.gmra.mrb[0].mxu0 %v551
        %v630 = vpop.f32.mrb[0].mxu0
        %v631 = vadd.f32 0.0, %v630
        %v632 = vpop.f32.mrb[0].mxu0
        %633 = vmatprep.mubr.f32.mxu0 0.0
        %634 = vmatmul.mubr.f32.gmra.mrb[0].mxu0 %v554
        %v635 = vpop.f32.mrb[0].mxu0
        %v636 = vadd.f32 0.0, %v635
        %v637 = vpop.f32.mrb[0].mxu0
        %638 = vmatprep.mubr.f32.mxu0 0.0
        %639 = vmatmul.mubr.f32.gmra.mrb[0].mxu0 %v557
        %v640 = vpop.f32.mrb[0].mxu0
        %v641 = vadd.f32 0.0, %v640
        %v642 = vpop.f32.mrb[0].mxu0
        %643 = vdwg.mxu0
        %s644 = scalar_lea.vmem %s517, 32
        %v645 = vld [vmem:[%s644] sm:$0xff]
        %v646 = vld [vmem:[%s644 + $0x8] sm:$0xff]
        %v647 = vld [vmem:[%s644 + $0x10] sm:$0xff]
        %v648 = vld [vmem:[%s644 + $0x18] sm:$0xff]
        %s649 = sld [smem:[#allocation2 + $0x1]]
        %v650 = vstv %s649
        %v651 = vmul.f32 %v645, %v650
        %v652 = vmul.f32 %v646, %v650
        %v653 = vmul.f32 %v647, %v650
        %v654 = vmul.f32 %v648, %v650
        %s655 = sld [smem:[#allocation5 + $0x1]]
        %v656 = vstv %s655
        %v657 = vadd.f32 %v651, %v656
        %v658 = vadd.f32 %v652, %v656
        %v659 = vadd.f32 %v653, %v656
        %v660 = vadd.f32 %v654, %v656
        %v661 = vmax.f32 %v657, 0.0
        %v662 = vmax.f32 %v658, 0.0
        %v663 = vmax.f32 %v659, 0.0
        %v664 = vmax.f32 %v660, 0.0
        %v666 = vsel %vm546, %v661, 0
        %v669 = vsel %vm546, %v662, 0
        %v672 = vsel %vm546, %v663, 0
        %v675 = vsel %vm546, %v664, 0
        %677 = vmatprep.subr.mxu0 0.0
        %678 = vmatpush1.msra.mxu0 %v518
        %679 = vmatprep.subr.mxu0 0.0
        %680 = vmatpush1.msra.mxu0 %v519
        %681 = vmatprep.subr.mxu0 0.0
        %682 = vmatpush1.msra.mxu0 %v520
        %683 = vmatprep.subr.mxu0 0.0
        %684 = vmatpush1.msra.mxu0 %v521
        %685 = vmatprep.subr.mxu0 0.0
        %686 = vmatpush1.msra.mxu0 %v522
        %687 = vmatprep.subr.mxu0 0.0
        %688 = vmatpush1.msra.mxu0 %v523
        %689 = vmatprep.subr.mxu0 0.0
        %690 = vmatpush1.msra.mxu0 %v524
        %691 = vmatprep.subr.mxu0 0.0
        %692 = vmatpush1.msra.mxu0 %v525
        %693 = vmatprep.subr.mxu0 0.0
        %694 = vmatpush1.msra.mxu0 0.0
        %695 = vmatprep.subr.mxu0 0.0
        %696 = vmatpush1.msra.mxu0 0.0
        %697 = vmatprep.subr.mxu0 0.0
        %698 = vmatpush1.msra.mxu0 0.0
        %699 = vmatprep.subr.mxu0 0.0
        %700 = vmatpush1.msra.mxu0 0.0
        %701 = vmatprep.subr.mxu0 0.0
        %702 = vmatpush1.msra.mxu0 0.0
        %703 = vmatprep.subr.mxu0 0.0
        %704 = vmatpush1.msra.mxu0 0.0
        %705 = vmatprep.subr.mxu0 0.0
        %706 = vmatpush1.msra.mxu0 0.0
        %707 = vmatprep.subr.mxu0 0.0
        %708 = vmatpush1.msra.mxu0 0.0
        %709 = vmatprep.subr.mxu0 0.0
        %710 = vmatpush1.msra.mxu0 0.0
        %711 = vmatprep.subr.mxu0 0.0
        %712 = vmatpush1.msra.mxu0 0.0
        %713 = vmatprep.subr.mxu0 0.0
        %714 = vmatpush1.msra.mxu0 0.0
        %715 = vmatprep.subr.mxu0 0.0
        %716 = vmatpush1.msra.mxu0 0.0
        %717 = vmatprep.subr.mxu0 0.0
        %718 = vmatpush1.msra.mxu0 0.0
        %719 = vmatprep.subr.mxu0 0.0
        %720 = vmatpush1.msra.mxu0 0.0
        %721 = vmatprep.subr.mxu0 0.0
        %722 = vmatpush1.msra.mxu0 0.0
        %723 = vmatprep.subr.mxu0 0.0
        %724 = vmatpush1.msra.mxu0 0.0
        %725 = vmatprep.subr.mxu0 0.0
        %726 = vmatpush1.msra.mxu0 0.0
        %727 = vmatprep.subr.mxu0 0.0
        %728 = vmatpush1.msra.mxu0 0.0
        %729 = vmatprep.subr.mxu0 0.0
        %730 = vmatpush1.msra.mxu0 0.0
        %731 = vmatprep.subr.mxu0 0.0
        %732 = vmatpush1.msra.mxu0 0.0
        %733 = vmatprep.subr.mxu0 0.0
        %734 = vmatpush1.msra.mxu0 0.0
        %735 = vmatprep.subr.mxu0 0.0
        %736 = vmatpush1.msra.mxu0 0.0
        %737 = vmatprep.subr.mxu0 0.0
        %738 = vmatpush1.msra.mxu0 0.0
        %739 = vmatprep.subr.mxu0 0.0
        %740 = vmatpush1.msra.mxu0 0.0
        %741 = vmatprep.mubr.f32.mxu0 0.0
        %742 = vmatmul.mubr.f32.gmra.mrb[0].mxu0 %v666
        %v743 = vpop.f32.mrb[0].mxu0
        %v744 = vadd.f32 0.0, %v743
        %v745 = vpop.f32.mrb[0].mxu0
        %746 = vmatprep.mubr.f32.mxu0 0.0
        %747 = vmatmul.mubr.f32.gmra.mrb[0].mxu0 %v669
        %v748 = vpop.f32.mrb[0].mxu0
        %v749 = vadd.f32 0.0, %v748
        %v750 = vpop.f32.mrb[0].mxu0
        %751 = vmatprep.mubr.f32.mxu0 0.0
        %752 = vmatmul.mubr.f32.gmra.mrb[0].mxu0 %v672
        %v753 = vpop.f32.mrb[0].mxu0
        %v754 = vadd.f32 0.0, %v753
        %v755 = vpop.f32.mrb[0].mxu0
        %756 = vmatprep.mubr.f32.mxu0 0.0
        %757 = vmatmul.mubr.f32.gmra.mrb[0].mxu0 %v675
        %v758 = vpop.f32.mrb[0].mxu0
        %v759 = vadd.f32 0.0, %v758
        %v760 = vpop.f32.mrb[0].mxu0
        %761 = vdwg.mxu0
        %s762 = scalar_lea.vmem %s517, 64
        %v763 = vld [vmem:[%s762] sm:$0xff]
        %v764 = vld [vmem:[%s762 + $0x8] sm:$0xff]
        %v765 = vld [vmem:[%s762 + $0x10] sm:$0xff]
        %v766 = vld [vmem:[%s762 + $0x18] sm:$0xff]
        %s767 = sld [smem:[#allocation2 + $0x2]]
        %v768 = vstv %s767
        %v769 = vmul.f32 %v763, %v768
        %v770 = vmul.f32 %v764, %v768
        %v771 = vmul.f32 %v765, %v768
        %v772 = vmul.f32 %v766, %v768
        %s773 = sld [smem:[#allocation5 + $0x2]]
        %v774 = vstv %s773
        %v775 = vadd.f32 %v769, %v774
        %v776 = vadd.f32 %v770, %v774
        %v777 = vadd.f32 %v771, %v774
        %v778 = vadd.f32 %v772, %v774
        %v779 = vmax.f32 %v775, 0.0
        %v780 = vmax.f32 %v776, 0.0
        %v781 = vmax.f32 %v777, 0.0
        %v782 = vmax.f32 %v778, 0.0
        %v784 = vsel %vm546, %v779, 0
        %v787 = vsel %vm546, %v780, 0
        %v790 = vsel %vm546, %v781, 0
        %v793 = vsel %vm546, %v782, 0
        %795 = vmatprep.subr.mxu0 0.0
        %796 = vmatpush1.msra.mxu0 %v518
        %797 = vmatprep.subr.mxu0 0.0
        %798 = vmatpush1.msra.mxu0 %v519
        %799 = vmatprep.subr.mxu0 0.0
        %800 = vmatpush1.msra.mxu0 %v520
        %801 = vmatprep.subr.mxu0 0.0
        %802 = vmatpush1.msra.mxu0 %v521
        %803 = vmatprep.subr.mxu0 0.0
        %804 = vmatpush1.msra.mxu0 %v522
        %805 = vmatprep.subr.mxu0 0.0
        %806 = vmatpush1.msra.mxu0 %v523
        %807 = vmatprep.subr.mxu0 0.0
        %808 = vmatpush1.msra.mxu0 %v524
        %809 = vmatprep.subr.mxu0 0.0
        %810 = vmatpush1.msra.mxu0 %v525
        %811 = vmatprep.subr.mxu0 0.0
        %812 = vmatpush1.msra.mxu0 0.0
        %813 = vmatprep.subr.mxu0 0.0
        %814 = vmatpush1.msra.mxu0 0.0
        %815 = vmatprep.subr.mxu0 0.0
        %816 = vmatpush1.msra.mxu0 0.0
        %817 = vmatprep.subr.mxu0 0.0
        %818 = vmatpush1.msra.mxu0 0.0
        %819 = vmatprep.subr.mxu0 0.0
        %820 = vmatpush1.msra.mxu0 0.0
        %821 = vmatprep.subr.mxu0 0.0
        %822 = vmatpush1.msra.mxu0 0.0
        %823 = vmatprep.subr.mxu0 0.0
        %824 = vmatpush1.msra.mxu0 0.0
        %825 = vmatprep.subr.mxu0 0.0
        %826 = vmatpush1.msra.mxu0 0.0
        %827 = vmatprep.subr.mxu0 0.0
        %828 = vmatpush1.msra.mxu0 0.0
        %829 = vmatprep.subr.mxu0 0.0
        %830 = vmatpush1.msra.mxu0 0.0
        %831 = vmatprep.subr.mxu0 0.0
        %832 = vmatpush1.msra.mxu0 0.0
        %833 = vmatprep.subr.mxu0 0.0
        %834 = vmatpush1.msra.mxu0 0.0
        %835 = vmatprep.subr.mxu0 0.0
        %836 = vmatpush1.msra.mxu0 0.0
        %837 = vmatprep.subr.mxu0 0.0
        %838 = vmatpush1.msra.mxu0 0.0
        %839 = vmatprep.subr.mxu0 0.0
        %840 = vmatpush1.msra.mxu0 0.0
        %841 = vmatprep.subr.mxu0 0.0
        %842 = vmatpush1.msra.mxu0 0.0
        %843 = vmatprep.subr.mxu0 0.0
        %844 = vmatpush1.msra.mxu0 0.0
        %845 = vmatprep.subr.mxu0 0.0
        %846 = vmatpush1.msra.mxu0 0.0
        %847 = vmatprep.subr.mxu0 0.0
        %848 = vmatpush1.msra.mxu0 0.0
        %849 = vmatprep.subr.mxu0 0.0
        %850 = vmatpush1.msra.mxu0 0.0
        %851 = vmatprep.subr.mxu0 0.0
        %852 = vmatpush1.msra.mxu0 0.0
        %853 = vmatprep.subr.mxu0 0.0
        %854 = vmatpush1.msra.mxu0 0.0
        %855 = vmatprep.subr.mxu0 0.0
        %856 = vmatpush1.msra.mxu0 0.0
        %857 = vmatprep.subr.mxu0 0.0
        %858 = vmatpush1.msra.mxu0 0.0
        %859 = vmatprep.mubr.f32.mxu0 0.0
        %860 = vmatmul.mubr.f32.gmra.mrb[0].mxu0 %v784
        %v861 = vpop.f32.mrb[0].mxu0
        %v862 = vadd.f32 0.0, %v861
        %v863 = vpop.f32.mrb[0].mxu0
        %864 = vmatprep.mubr.f32.mxu0 0.0
        %865 = vmatmul.mubr.f32.gmra.mrb[0].mxu0 %v787
        %v866 = vpop.f32.mrb[0].mxu0
        %v867 = vadd.f32 0.0, %v866
        %v868 = vpop.f32.mrb[0].mxu0
        %869 = vmatprep.mubr.f32.mxu0 0.0
        %870 = vmatmul.mubr.f32.gmra.mrb[0].mxu0 %v790
        %v871 = vpop.f32.mrb[0].mxu0
        %v872 = vadd.f32 0.0, %v871
        %v873 = vpop.f32.mrb[0].mxu0
        %874 = vmatprep.mubr.f32.mxu0 0.0
        %875 = vmatmul.mubr.f32.gmra.mrb[0].mxu0 %v793
        %v876 = vpop.f32.mrb[0].mxu0
        %v877 = vadd.f32 0.0, %v876
        %v878 = vpop.f32.mrb[0].mxu0
        %879 = vdwg.mxu0
        %s880 = scalar_lea.vmem %s517, 96
        %v881 = vld [vmem:[%s880] sm:$0xff]
        %v882 = vld [vmem:[%s880 + $0x8] sm:$0xff]
        %v883 = vld [vmem:[%s880 + $0x10] sm:$0xff]
        %v884 = vld [vmem:[%s880 + $0x18] sm:$0xff]
        %s885 = sld [smem:[#allocation2 + $0x3]]
        %v886 = vstv %s885
        %v887 = vmul.f32 %v881, %v886
        %v888 = vmul.f32 %v882, %v886
        %v889 = vmul.f32 %v883, %v886
        %v890 = vmul.f32 %v884, %v886
        %s891 = sld [smem:[#allocation5 + $0x3]]
        %v892 = vstv %s891
        %v893 = vadd.f32 %v887, %v892
        %v894 = vadd.f32 %v888, %v892
        %v895 = vadd.f32 %v889, %v892
        %v896 = vadd.f32 %v890, %v892
        %v897 = vmax.f32 %v893, 0.0
        %v898 = vmax.f32 %v894, 0.0
        %v899 = vmax.f32 %v895, 0.0
        %v900 = vmax.f32 %v896, 0.0
        %v902 = vsel %vm546, %v897, 0
        %v905 = vsel %vm546, %v898, 0
        %v908 = vsel %vm546, %v899, 0
        %v911 = vsel %vm546, %v900, 0
        %913 = vmatprep.subr.mxu0 0.0
        %914 = vmatpush1.msra.mxu0 %v518
        %915 = vmatprep.subr.mxu0 0.0
        %916 = vmatpush1.msra.mxu0 %v519
        %917 = vmatprep.subr.mxu0 0.0
        %918 = vmatpush1.msra.mxu0 %v520
        %919 = vmatprep.subr.mxu0 0.0
        %920 = vmatpush1.msra.mxu0 %v521
        %921 = vmatprep.subr.mxu0 0.0
        %922 = vmatpush1.msra.mxu0 %v522
        %923 = vmatprep.subr.mxu0 0.0
        %924 = vmatpush1.msra.mxu0 %v523
        %925 = vmatprep.subr.mxu0 0.0
        %926 = vmatpush1.msra.mxu0 %v524
        %927 = vmatprep.subr.mxu0 0.0
        %928 = vmatpush1.msra.mxu0 %v525
        %929 = vmatprep.subr.mxu0 0.0
        %930 = vmatpush1.msra.mxu0 0.0
        %931 = vmatprep.subr.mxu0 0.0
        %932 = vmatpush1.msra.mxu0 0.0
        %933 = vmatprep.subr.mxu0 0.0
        %934 = vmatpush1.msra.mxu0 0.0
        %935 = vmatprep.subr.mxu0 0.0
        %936 = vmatpush1.msra.mxu0 0.0
        %937 = vmatprep.subr.mxu0 0.0
        %938 = vmatpush1.msra.mxu0 0.0
        %939 = vmatprep.subr.mxu0 0.0
        %940 = vmatpush1.msra.mxu0 0.0
        %941 = vmatprep.subr.mxu0 0.0
        %942 = vmatpush1.msra.mxu0 0.0
        %943 = vmatprep.subr.mxu0 0.0
        %944 = vmatpush1.msra.mxu0 0.0
        %945 = vmatprep.subr.mxu0 0.0
        %946 = vmatpush1.msra.mxu0 0.0
        %947 = vmatprep.subr.mxu0 0.0
        %948 = vmatpush1.msra.mxu0 0.0
        %949 = vmatprep.subr.mxu0 0.0
        %950 = vmatpush1.msra.mxu0 0.0
        %951 = vmatprep.subr.mxu0 0.0
        %952 = vmatpush1.msra.mxu0 0.0
        %953 = vmatprep.subr.mxu0 0.0
        %954 = vmatpush1.msra.mxu0 0.0
        %955 = vmatprep.subr.mxu0 0.0
        %956 = vmatpush1.msra.mxu0 0.0
        %957 = vmatprep.subr.mxu0 0.0
        %958 = vmatpush1.msra.mxu0 0.0
        %959 = vmatprep.subr.mxu0 0.0
        %960 = vmatpush1.msra.mxu0 0.0
        %961 = vmatprep.subr.mxu0 0.0
        %962 = vmatpush1.msra.mxu0 0.0
        %963 = vmatprep.subr.mxu0 0.0
        %964 = vmatpush1.msra.mxu0 0.0
        %965 = vmatprep.subr.mxu0 0.0
        %966 = vmatpush1.msra.mxu0 0.0
        %967 = vmatprep.subr.mxu0 0.0
        %968 = vmatpush1.msra.mxu0 0.0
        %969 = vmatprep.subr.mxu0 0.0
        %970 = vmatpush1.msra.mxu0 0.0
        %971 = vmatprep.subr.mxu0 0.0
        %972 = vmatpush1.msra.mxu0 0.0
        %973 = vmatprep.subr.mxu0 0.0
        %974 = vmatpush1.msra.mxu0 0.0
        %975 = vmatprep.subr.mxu0 0.0
        %976 = vmatpush1.msra.mxu0 0.0
        %977 = vmatprep.mubr.f32.mxu0 0.0
        %978 = vmatmul.mubr.f32.gmra.mrb[0].mxu0 %v902
        %v979 = vpop.f32.mrb[0].mxu0
        %v980 = vadd.f32 0.0, %v979
        %v981 = vpop.f32.mrb[0].mxu0
        %982 = vmatprep.mubr.f32.mxu0 0.0
        %983 = vmatmul.mubr.f32.gmra.mrb[0].mxu0 %v905
        %v984 = vpop.f32.mrb[0].mxu0
        %v985 = vadd.f32 0.0, %v984
        %v986 = vpop.f32.mrb[0].mxu0
        %987 = vmatprep.mubr.f32.mxu0 0.0
        %988 = vmatmul.mubr.f32.gmra.mrb[0].mxu0 %v908
        %v989 = vpop.f32.mrb[0].mxu0
        %v990 = vadd.f32 0.0, %v989
        %v991 = vpop.f32.mrb[0].mxu0
        %992 = vmatprep.mubr.f32.mxu0 0.0
        %993 = vmatmul.mubr.f32.gmra.mrb[0].mxu0 %v911
        %v994 = vpop.f32.mrb[0].mxu0
        %v995 = vadd.f32 0.0, %v994
        %v996 = vpop.f32.mrb[0].mxu0
        %997 = vdwg.mxu0
        %v998 = vld [vmem:[%s4] sm:$0x1]
        %v999 = vlaneseq
        %v1000 = vshrl.u32 %v999, 7
        %v1001 = vsub.s32 0, %v1000
        %v1002 = vrot.slane %v998, %v1001
        %v1003 = vmul.f32 %v1002, %v626
        %v1004 = vmul.f32 %v1002, %v631
        %v1005 = vmul.f32 %v1002, %v636
        %v1006 = vmul.f32 %v1002, %v641
        %v1007 = vadd.f32 %v1003, 0.0
        %v1008 = vadd.f32 %v1004, 0.0
        %v1009 = vadd.f32 %v1005, 0.0
        %v1010 = vadd.f32 %v1006, 0.0
        %v1011 = vld [vmem:[%s4 + $0x1] sm:$0x1]
        %v1012 = vlaneseq
        %v1013 = vshrl.u32 %v1012, 7
        %v1014 = vsub.s32 0, %v1013
        %v1015 = vrot.slane %v1011, %v1014
        %v1016 = vmul.f32 %v1015, %v744
        %v1017 = vmul.f32 %v1015, %v749
        %v1018 = vmul.f32 %v1015, %v754
        %v1019 = vmul.f32 %v1015, %v759
        %v1020 = vadd.f32 %v1007, %v1016
        %v1021 = vadd.f32 %v1008, %v1017
        %v1022 = vadd.f32 %v1009, %v1018
        %v1023 = vadd.f32 %v1010, %v1019
        %v1024 = vld [vmem:[%s4 + $0x2] sm:$0x1]
        %v1025 = vlaneseq
        %v1026 = vshrl.u32 %v1025, 7
        %v1027 = vsub.s32 0, %v1026
        %v1028 = vrot.slane %v1024, %v1027
        %v1029 = vmul.f32 %v1028, %v862
        %v1030 = vmul.f32 %v1028, %v867
        %v1031 = vmul.f32 %v1028, %v872
        %v1032 = vmul.f32 %v1028, %v877
        %v1033 = vadd.f32 %v1020, %v1029
        %v1034 = vadd.f32 %v1021, %v1030
        %v1035 = vadd.f32 %v1022, %v1031
        %v1036 = vadd.f32 %v1023, %v1032
        %v1037 = vld [vmem:[%s4 + $0x3] sm:$0x1]
        %v1038 = vlaneseq
        %v1039 = vshrl.u32 %v1038, 7
        %v1040 = vsub.s32 0, %v1039
        %v1041 = vrot.slane %v1037, %v1040
        %v1042 = vmul.f32 %v1041, %v980
        %v1043 = vmul.f32 %v1041, %v985
        %v1044 = vmul.f32 %v1041, %v990
        %v1045 = vmul.f32 %v1041, %v995
        %v1046 = vadd.f32 %v1033, %v1042
        %v1047 = vadd.f32 %v1034, %v1043
        %v1048 = vadd.f32 %v1035, %v1044
        %v1049 = vadd.f32 %v1036, %v1045
        %v1050 = vld [vmem:[%s5] sm:$0xff]
        %v1051 = vld [vmem:[%s5 + $0x8] sm:$0xff]
        %v1052 = vld [vmem:[%s5 + $0x10] sm:$0xff]
        %v1053 = vld [vmem:[%s5 + $0x18] sm:$0xff]
        %v1054 = vld [vmem:[%s5 + $0x20] sm:$0xff]
        %v1055 = vld [vmem:[%s5 + $0x28] sm:$0xff]
        %v1056 = vld [vmem:[%s5 + $0x30] sm:$0xff]
        %v1057 = vld [vmem:[%s5 + $0x38] sm:$0xff]
        %v1058 = vld [vmem:[%s4 + $0x4] sm:$0x1]
        %v1059 = vlaneseq
        %v1060 = vshrl.u32 %v1059, 7
        %v1061 = vsub.s32 0, %v1060
        %v1062 = vrot.slane %v1058, %v1061
        %v1063 = vmul.f32 %v1062, %v626
        %v1064 = vmul.f32 %v1062, %v631
        %v1065 = vmul.f32 %v1062, %v636
        %v1066 = vmul.f32 %v1062, %v641
        %v1067 = vadd.f32 %v1063, 0.0
        %v1068 = vadd.f32 %v1064, 0.0
        %v1069 = vadd.f32 %v1065, 0.0
        %v1070 = vadd.f32 %v1066, 0.0
        %v1071 = vld [vmem:[%s4 + $0x5] sm:$0x1]
        %v1072 = vlaneseq
        %v1073 = vshrl.u32 %v1072, 7
        %v1074 = vsub.s32 0, %v1073
        %v1075 = vrot.slane %v1071, %v1074
        %v1076 = vmul.f32 %v1075, %v744
        %v1077 = vmul.f32 %v1075, %v749
        %v1078 = vmul.f32 %v1075, %v754
        %v1079 = vmul.f32 %v1075, %v759
        %v1080 = vadd.f32 %v1067, %v1076
        %v1081 = vadd.f32 %v1068, %v1077
        %v1082 = vadd.f32 %v1069, %v1078
        %v1083 = vadd.f32 %v1070, %v1079
        %v1084 = vld [vmem:[%s4 + $0x6] sm:$0x1]
        %v1085 = vlaneseq
        %v1086 = vshrl.u32 %v1085, 7
        %v1087 = vsub.s32 0, %v1086
        %v1088 = vrot.slane %v1084, %v1087
        %v1089 = vmul.f32 %v1088, %v862
        %v1090 = vmul.f32 %v1088, %v867
        %v1091 = vmul.f32 %v1088, %v872
        %v1092 = vmul.f32 %v1088, %v877
        %v1093 = vadd.f32 %v1080, %v1089
        %v1094 = vadd.f32 %v1081, %v1090
        %v1095 = vadd.f32 %v1082, %v1091
        %v1096 = vadd.f32 %v1083, %v1092
        %v1097 = vld [vmem:[%s4 + $0x7] sm:$0x1]
        %v1098 = vlaneseq
        %v1099 = vshrl.u32 %v1098, 7
        %v1100 = vsub.s32 0, %v1099
        %v1101 = vrot.slane %v1097, %v1100
        %v1102 = vmul.f32 %v1101, %v980
        %v1103 = vmul.f32 %v1101, %v985
        %v1104 = vmul.f32 %v1101, %v990
        %v1105 = vmul.f32 %v1101, %v995
        %v1106 = vadd.f32 %v1093, %v1102
        %v1107 = vadd.f32 %v1094, %v1103
        %v1108 = vadd.f32 %v1095, %v1104
        %v1109 = vadd.f32 %v1096, %v1105
        %s1110 = scalar_lea.vmem %s5, 64
        %v1111 = vld [vmem:[%s1110] sm:$0xff]
        %v1112 = vld [vmem:[%s1110 + $0x8] sm:$0xff]
        %v1113 = vld [vmem:[%s1110 + $0x10] sm:$0xff]
        %v1114 = vld [vmem:[%s1110 + $0x18] sm:$0xff]
        %v1115 = vld [vmem:[%s1110 + $0x20] sm:$0xff]
        %v1116 = vld [vmem:[%s1110 + $0x28] sm:$0xff]
        %v1117 = vld [vmem:[%s1110 + $0x30] sm:$0xff]
        %v1118 = vld [vmem:[%s1110 + $0x38] sm:$0xff]
        %vm1119 = vcmask 261120
        %v1121 = vsel %vm1119, %v1111, 0
        %v1124 = vsel %vm1119, %v1112, 0
        %v1127 = vsel %vm1119, %v1113, 0
        %v1130 = vsel %vm1119, %v1114, 0
        %v1133 = vsel %vm1119, %v1115, 0
        %v1136 = vsel %vm1119, %v1116, 0
        %v1139 = vsel %vm1119, %v1117, 0
        %v1142 = vsel %vm1119, %v1118, 0
        %1144 = vmatprep.subr.mxu0 0.0
        %1145 = vmatpush1.msra.mxu0 %v1106
        %1146 = vmatprep.subr.mxu0 0.0
        %1147 = vmatpush1.msra.mxu0 %v1107
        %1148 = vmatprep.subr.mxu0 0.0
        %1149 = vmatpush1.msra.mxu0 %v1108
        %1150 = vmatprep.subr.mxu0 0.0
        %1151 = vmatpush1.msra.mxu0 %v1109
        %1152 = vmatprep.subr.mxu0 0.0
        %1153 = vmatpush1.msra.mxu0 0.0
        %1154 = vmatprep.subr.mxu0 0.0
        %1155 = vmatpush1.msra.mxu0 0.0
        %1156 = vmatprep.subr.mxu0 0.0
        %1157 = vmatpush1.msra.mxu0 0.0
        %1158 = vmatprep.subr.mxu0 0.0
        %1159 = vmatpush1.msra.mxu0 0.0
        %1160 = vmatprep.subr.mxu0 0.0
        %1161 = vmatpush1.msra.mxu0 0.0
        %1162 = vmatprep.subr.mxu0 0.0
        %1163 = vmatpush1.msra.mxu0 0.0
        %1164 = vmatprep.subr.mxu0 0.0
        %1165 = vmatpush1.msra.mxu0 0.0
        %1166 = vmatprep.subr.mxu0 0.0
        %1167 = vmatpush1.msra.mxu0 0.0
        %1168 = vmatprep.subr.mxu0 0.0
        %1169 = vmatpush1.msra.mxu0 0.0
        %1170 = vmatprep.subr.mxu0 0.0
        %1171 = vmatpush1.msra.mxu0 0.0
        %1172 = vmatprep.subr.mxu0 0.0
        %1173 = vmatpush1.msra.mxu0 0.0
        %1174 = vmatprep.subr.mxu0 0.0
        %1175 = vmatpush1.msra.mxu0 0.0
        %1176 = vmatprep.subr.mxu0 0.0
        %1177 = vmatpush1.msra.mxu0 0.0
        %1178 = vmatprep.subr.mxu0 0.0
        %1179 = vmatpush1.msra.mxu0 0.0
        %1180 = vmatprep.subr.mxu0 0.0
        %1181 = vmatpush1.msra.mxu0 0.0
        %1182 = vmatprep.subr.mxu0 0.0
        %1183 = vmatpush1.msra.mxu0 0.0
        %1184 = vmatprep.subr.mxu0 0.0
        %1185 = vmatpush1.msra.mxu0 0.0
        %1186 = vmatprep.subr.mxu0 0.0
        %1187 = vmatpush1.msra.mxu0 0.0
        %1188 = vmatprep.subr.mxu0 0.0
        %1189 = vmatpush1.msra.mxu0 0.0
        %1190 = vmatprep.subr.mxu0 0.0
        %1191 = vmatpush1.msra.mxu0 0.0
        %1192 = vmatprep.subr.mxu0 0.0
        %1193 = vmatpush1.msra.mxu0 0.0
        %1194 = vmatprep.subr.mxu0 0.0
        %1195 = vmatpush1.msra.mxu0 0.0
        %1196 = vmatprep.subr.mxu0 0.0
        %1197 = vmatpush1.msra.mxu0 0.0
        %1198 = vmatprep.subr.mxu0 0.0
        %1199 = vmatpush1.msra.mxu0 0.0
        %1200 = vmatprep.subr.mxu0 0.0
        %1201 = vmatpush1.msra.mxu0 0.0
        %1202 = vmatprep.subr.mxu0 0.0
        %1203 = vmatpush1.msra.mxu0 0.0
        %1204 = vmatprep.subr.mxu0 0.0
        %1205 = vmatpush1.msra.mxu0 0.0
        %1206 = vmatprep.subr.mxu0 0.0
        %1207 = vmatpush1.msra.mxu0 0.0
        %1208 = vmatprep.mubr.f32.mxu0 0.0
        %1209 = vmatmul.mubr.f32.gmra.mrb[0].mxu0 %v1121
        %v1210 = vpop.f32.mrb[0].mxu0
        %v1211 = vadd.f32 0.0, %v1210
        %v1212 = vpop.f32.mrb[0].mxu0
        %1213 = vmatprep.mubr.f32.mxu0 0.0
        %1214 = vmatmul.mubr.f32.gmra.mrb[0].mxu0 %v1124
        %v1215 = vpop.f32.mrb[0].mxu0
        %v1216 = vadd.f32 0.0, %v1215
        %v1217 = vpop.f32.mrb[0].mxu0
        %1218 = vmatprep.mubr.f32.mxu0 0.0
        %1219 = vmatmul.mubr.f32.gmra.mrb[0].mxu0 %v1127
        %v1220 = vpop.f32.mrb[0].mxu0
        %v1221 = vadd.f32 0.0, %v1220
        %v1222 = vpop.f32.mrb[0].mxu0
        %1223 = vmatprep.mubr.f32.mxu0 0.0
        %1224 = vmatmul.mubr.f32.gmra.mrb[0].mxu0 %v1130
        %v1225 = vpop.f32.mrb[0].mxu0
        %v1226 = vadd.f32 0.0, %v1225
        %v1227 = vpop.f32.mrb[0].mxu0
        %1228 = vmatprep.mubr.f32.mxu0 0.0
        %1229 = vmatmul.mubr.f32.gmra.mrb[0].mxu0 %v1133
        %v1230 = vpop.f32.mrb[0].mxu0
        %v1231 = vadd.f32 0.0, %v1230
        %v1232 = vpop.f32.mrb[0].mxu0
        %1233 = vmatprep.mubr.f32.mxu0 0.0
        %1234 = vmatmul.mubr.f32.gmra.mrb[0].mxu0 %v1136
        %v1235 = vpop.f32.mrb[0].mxu0
        %v1236 = vadd.f32 0.0, %v1235
        %v1237 = vpop.f32.mrb[0].mxu0
        %1238 = vmatprep.mubr.f32.mxu0 0.0
        %1239 = vmatmul.mubr.f32.gmra.mrb[0].mxu0 %v1139
        %v1240 = vpop.f32.mrb[0].mxu0
        %v1241 = vadd.f32 0.0, %v1240
        %v1242 = vpop.f32.mrb[0].mxu0
        %1243 = vmatprep.mubr.f32.mxu0 0.0
        %1244 = vmatmul.mubr.f32.gmra.mrb[0].mxu0 %v1142
        %v1245 = vpop.f32.mrb[0].mxu0
        %v1246 = vadd.f32 0.0, %v1245
        %v1247 = vpop.f32.mrb[0].mxu0
        %1248 = vdwg.mxu0
        %v1250 = vsel %vm1119, %v1050, 0
        %v1253 = vsel %vm1119, %v1051, 0
        %v1256 = vsel %vm1119, %v1052, 0
        %v1259 = vsel %vm1119, %v1053, 0
        %v1262 = vsel %vm1119, %v1054, 0
        %v1265 = vsel %vm1119, %v1055, 0
        %v1268 = vsel %vm1119, %v1056, 0
        %v1271 = vsel %vm1119, %v1057, 0
        %1273 = vmatprep.subr.mxu0 0.0
        %1274 = vmatpush1.msra.mxu0 %v1046
        %1275 = vmatprep.subr.mxu0 0.0
        %1276 = vmatpush1.msra.mxu0 %v1047
        %1277 = vmatprep.subr.mxu0 0.0
        %1278 = vmatpush1.msra.mxu0 %v1048
        %1279 = vmatprep.subr.mxu0 0.0
        %1280 = vmatpush1.msra.mxu0 %v1049
        %1281 = vmatprep.subr.mxu0 0.0
        %1282 = vmatpush1.msra.mxu0 0.0
        %1283 = vmatprep.subr.mxu0 0.0
        %1284 = vmatpush1.msra.mxu0 0.0
        %1285 = vmatprep.subr.mxu0 0.0
        %1286 = vmatpush1.msra.mxu0 0.0
        %1287 = vmatprep.subr.mxu0 0.0
        %1288 = vmatpush1.msra.mxu0 0.0
        %1289 = vmatprep.subr.mxu0 0.0
        %1290 = vmatpush1.msra.mxu0 0.0
        %1291 = vmatprep.subr.mxu0 0.0
        %1292 = vmatpush1.msra.mxu0 0.0
        %1293 = vmatprep.subr.mxu0 0.0
        %1294 = vmatpush1.msra.mxu0 0.0
        %1295 = vmatprep.subr.mxu0 0.0
        %1296 = vmatpush1.msra.mxu0 0.0
        %1297 = vmatprep.subr.mxu0 0.0
        %1298 = vmatpush1.msra.mxu0 0.0
        %1299 = vmatprep.subr.mxu0 0.0
        %1300 = vmatpush1.msra.mxu0 0.0
        %1301 = vmatprep.subr.mxu0 0.0
        %1302 = vmatpush1.msra.mxu0 0.0
        %1303 = vmatprep.subr.mxu0 0.0
        %1304 = vmatpush1.msra.mxu0 0.0
        %1305 = vmatprep.subr.mxu0 0.0
        %1306 = vmatpush1.msra.mxu0 0.0
        %1307 = vmatprep.subr.mxu0 0.0
        %1308 = vmatpush1.msra.mxu0 0.0
        %1309 = vmatprep.subr.mxu0 0.0
        %1310 = vmatpush1.msra.mxu0 0.0
        %1311 = vmatprep.subr.mxu0 0.0
        %1312 = vmatpush1.msra.mxu0 0.0
        %1313 = vmatprep.subr.mxu0 0.0
        %1314 = vmatpush1.msra.mxu0 0.0
        %1315 = vmatprep.subr.mxu0 0.0
        %1316 = vmatpush1.msra.mxu0 0.0
        %1317 = vmatprep.subr.mxu0 0.0
        %1318 = vmatpush1.msra.mxu0 0.0
        %1319 = vmatprep.subr.mxu0 0.0
        %1320 = vmatpush1.msra.mxu0 0.0
        %1321 = vmatprep.subr.mxu0 0.0
        %1322 = vmatpush1.msra.mxu0 0.0
        %1323 = vmatprep.subr.mxu0 0.0
        %1324 = vmatpush1.msra.mxu0 0.0
        %1325 = vmatprep.subr.mxu0 0.0
        %1326 = vmatpush1.msra.mxu0 0.0
        %1327 = vmatprep.subr.mxu0 0.0
        %1328 = vmatpush1.msra.mxu0 0.0
        %1329 = vmatprep.subr.mxu0 0.0
        %1330 = vmatpush1.msra.mxu0 0.0
        %1331 = vmatprep.subr.mxu0 0.0
        %1332 = vmatpush1.msra.mxu0 0.0
        %1333 = vmatprep.subr.mxu0 0.0
        %1334 = vmatpush1.msra.mxu0 0.0
        %1335 = vmatprep.subr.mxu0 0.0
        %1336 = vmatpush1.msra.mxu0 0.0
        %1337 = vmatprep.mubr.f32.mxu0 0.0
        %1338 = vmatmul.mubr.f32.gmra.mrb[0].mxu0 %v1250
        %v1339 = vpop.f32.mrb[0].mxu0
        %v1340 = vadd.f32 %v1211, %v1339
        %v1341 = vpop.f32.mrb[0].mxu0
        %1342 = vmatprep.mubr.f32.mxu0 0.0
        %1343 = vmatmul.mubr.f32.gmra.mrb[0].mxu0 %v1253
        %v1344 = vpop.f32.mrb[0].mxu0
        %v1345 = vadd.f32 %v1216, %v1344
        %v1346 = vpop.f32.mrb[0].mxu0
        %1347 = vmatprep.mubr.f32.mxu0 0.0
        %1348 = vmatmul.mubr.f32.gmra.mrb[0].mxu0 %v1256
        %v1349 = vpop.f32.mrb[0].mxu0
        %v1350 = vadd.f32 %v1221, %v1349
        %v1351 = vpop.f32.mrb[0].mxu0
        %1352 = vmatprep.mubr.f32.mxu0 0.0
        %1353 = vmatmul.mubr.f32.gmra.mrb[0].mxu0 %v1259
        %v1354 = vpop.f32.mrb[0].mxu0
        %v1355 = vadd.f32 %v1226, %v1354
        %v1356 = vpop.f32.mrb[0].mxu0
        %1357 = vmatprep.mubr.f32.mxu0 0.0
        %1358 = vmatmul.mubr.f32.gmra.mrb[0].mxu0 %v1262
        %v1359 = vpop.f32.mrb[0].mxu0
        %v1360 = vadd.f32 %v1231, %v1359
        %v1361 = vpop.f32.mrb[0].mxu0
        %1362 = vmatprep.mubr.f32.mxu0 0.0
        %1363 = vmatmul.mubr.f32.gmra.mrb[0].mxu0 %v1265
        %v1364 = vpop.f32.mrb[0].mxu0
        %v1365 = vadd.f32 %v1236, %v1364
        %v1366 = vpop.f32.mrb[0].mxu0
        %1367 = vmatprep.mubr.f32.mxu0 0.0
        %1368 = vmatmul.mubr.f32.gmra.mrb[0].mxu0 %v1268
        %v1369 = vpop.f32.mrb[0].mxu0
        %v1370 = vadd.f32 %v1241, %v1369
        %v1371 = vpop.f32.mrb[0].mxu0
        %1372 = vmatprep.mubr.f32.mxu0 0.0
        %1373 = vmatmul.mubr.f32.gmra.mrb[0].mxu0 %v1271
        %v1374 = vpop.f32.mrb[0].mxu0
        %v1375 = vadd.f32 %v1246, %v1374
        %v1376 = vpop.f32.mrb[0].mxu0
        %1377 = vdwg.mxu0
        %v1378 = vld [vmem:[%s6] sm:$0xff]
        %v1379 = vld [vmem:[%s6 + $0x8] sm:$0xff]
        %v1380 = vld [vmem:[%s6 + $0x10] sm:$0xff]
        %v1381 = vld [vmem:[%s6 + $0x18] sm:$0xff]
        %v1382 = vld [vmem:[%s6 + $0x20] sm:$0xff]
        %v1383 = vld [vmem:[%s6 + $0x28] sm:$0xff]
        %v1384 = vld [vmem:[%s6 + $0x30] sm:$0xff]
        %v1385 = vld [vmem:[%s6 + $0x38] sm:$0xff]
        %v1386 = vld [vmem:[%s6 + $0x40] sm:$0xff]
        %v1387 = vld [vmem:[%s6 + $0x48] sm:$0xff]
        %v1388 = vld [vmem:[%s6 + $0x50] sm:$0xff]
        %v1389 = vld [vmem:[%s6 + $0x58] sm:$0xff]
        %v1390 = vld [vmem:[%s6 + $0x60] sm:$0xff]
        %v1391 = vld [vmem:[%s6 + $0x68] sm:$0xff]
        %v1392 = vld [vmem:[%s6 + $0x70] sm:$0xff]
        %v1393 = vld [vmem:[%s6 + $0x78] sm:$0xff]
        %1394 = vmatprep.subr.mxu0 0.0
        %1395 = vmatpush1.msra.mxu0 %v1378
        %1396 = vmatprep.subr.mxu0 0.0
        %1397 = vmatpush1.msra.mxu0 %v1379
        %1398 = vmatprep.subr.mxu0 0.0
        %1399 = vmatpush1.msra.mxu0 %v1380
        %1400 = vmatprep.subr.mxu0 0.0
        %1401 = vmatpush1.msra.mxu0 %v1381
        %1402 = vmatprep.subr.mxu0 0.0
        %1403 = vmatpush1.msra.mxu0 %v1382
        %1404 = vmatprep.subr.mxu0 0.0
        %1405 = vmatpush1.msra.mxu0 %v1383
        %1406 = vmatprep.subr.mxu0 0.0
        %1407 = vmatpush1.msra.mxu0 %v1384
        %1408 = vmatprep.subr.mxu0 0.0
        %1409 = vmatpush1.msra.mxu0 %v1385
        %1410 = vmatprep.subr.mxu0 0.0
        %1411 = vmatpush1.msra.mxu0 %v1386
        %1412 = vmatprep.subr.mxu0 0.0
        %1413 = vmatpush1.msra.mxu0 %v1387
        %1414 = vmatprep.subr.mxu0 0.0
        %1415 = vmatpush1.msra.mxu0 %v1388
        %1416 = vmatprep.subr.mxu0 0.0
        %1417 = vmatpush1.msra.mxu0 %v1389
        %1418 = vmatprep.subr.mxu0 0.0
        %1419 = vmatpush1.msra.mxu0 %v1390
        %1420 = vmatprep.subr.mxu0 0.0
        %1421 = vmatpush1.msra.mxu0 %v1391
        %1422 = vmatprep.subr.mxu0 0.0
        %1423 = vmatpush1.msra.mxu0 %v1392
        %1424 = vmatprep.subr.mxu0 0.0
        %1425 = vmatpush1.msra.mxu0 %v1393
        %1426 = vmatprep.subr.mxu0 0.0
        %1427 = vmatpush1.msra.mxu0 0.0
        %1428 = vmatprep.subr.mxu0 0.0
        %1429 = vmatpush1.msra.mxu0 0.0
        %1430 = vmatprep.subr.mxu0 0.0
        %1431 = vmatpush1.msra.mxu0 0.0
        %1432 = vmatprep.subr.mxu0 0.0
        %1433 = vmatpush1.msra.mxu0 0.0
        %1434 = vmatprep.subr.mxu0 0.0
        %1435 = vmatpush1.msra.mxu0 0.0
        %1436 = vmatprep.subr.mxu0 0.0
        %1437 = vmatpush1.msra.mxu0 0.0
        %1438 = vmatprep.subr.mxu0 0.0
        %1439 = vmatpush1.msra.mxu0 0.0
        %1440 = vmatprep.subr.mxu0 0.0
        %1441 = vmatpush1.msra.mxu0 0.0
        %1442 = vmatprep.subr.mxu0 0.0
        %1443 = vmatpush1.msra.mxu0 0.0
        %1444 = vmatprep.subr.mxu0 0.0
        %1445 = vmatpush1.msra.mxu0 0.0
        %1446 = vmatprep.subr.mxu0 0.0
        %1447 = vmatpush1.msra.mxu0 0.0
        %1448 = vmatprep.subr.mxu0 0.0
        %1449 = vmatpush1.msra.mxu0 0.0
        %1450 = vmatprep.subr.mxu0 0.0
        %1451 = vmatpush1.msra.mxu0 0.0
        %1452 = vmatprep.subr.mxu0 0.0
        %1453 = vmatpush1.msra.mxu0 0.0
        %1454 = vmatprep.subr.mxu0 0.0
        %1455 = vmatpush1.msra.mxu0 0.0
        %1456 = vmatprep.subr.mxu0 0.0
        %1457 = vmatpush1.msra.mxu0 0.0
        %1458 = vmatprep.mubr.f32.mxu0 0.0
        %1459 = vmatmul.mubr.f32.gmra.mrb[0].mxu0 %v1340
        %v1460 = vpop.f32.mrb[0].mxu0
        %v1461 = vadd.f32 0.0, %v1460
        %v1462 = vpop.f32.mrb[0].mxu0
        %1463 = vmatprep.mubr.f32.mxu0 0.0
        %1464 = vmatmul.mubr.f32.gmra.mrb[0].mxu0 %v1345
        %v1465 = vpop.f32.mrb[0].mxu0
        %v1466 = vadd.f32 0.0, %v1465
        %v1467 = vpop.f32.mrb[0].mxu0
        %1468 = vmatprep.mubr.f32.mxu0 0.0
        %1469 = vmatmul.mubr.f32.gmra.mrb[0].mxu0 %v1350
        %v1470 = vpop.f32.mrb[0].mxu0
        %v1471 = vadd.f32 0.0, %v1470
        %v1472 = vpop.f32.mrb[0].mxu0
        %1473 = vmatprep.mubr.f32.mxu0 0.0
        %1474 = vmatmul.mubr.f32.gmra.mrb[0].mxu0 %v1355
        %v1475 = vpop.f32.mrb[0].mxu0
        %v1476 = vadd.f32 0.0, %v1475
        %v1477 = vpop.f32.mrb[0].mxu0
        %1478 = vmatprep.mubr.f32.mxu0 0.0
        %1479 = vmatmul.mubr.f32.gmra.mrb[0].mxu0 %v1360
        %v1480 = vpop.f32.mrb[0].mxu0
        %v1481 = vadd.f32 0.0, %v1480
        %v1482 = vpop.f32.mrb[0].mxu0
        %1483 = vmatprep.mubr.f32.mxu0 0.0
        %1484 = vmatmul.mubr.f32.gmra.mrb[0].mxu0 %v1365
        %v1485 = vpop.f32.mrb[0].mxu0
        %v1486 = vadd.f32 0.0, %v1485
        %v1487 = vpop.f32.mrb[0].mxu0
        %1488 = vmatprep.mubr.f32.mxu0 0.0
        %1489 = vmatmul.mubr.f32.gmra.mrb[0].mxu0 %v1370
        %v1490 = vpop.f32.mrb[0].mxu0
        %v1491 = vadd.f32 0.0, %v1490
        %v1492 = vpop.f32.mrb[0].mxu0
        %1493 = vmatprep.mubr.f32.mxu0 0.0
        %1494 = vmatmul.mubr.f32.gmra.mrb[0].mxu0 %v1375
        %v1495 = vpop.f32.mrb[0].mxu0
        %v1496 = vadd.f32 0.0, %v1495
        %v1497 = vpop.f32.mrb[0].mxu0
        %1498 = vdwg.mxu0
        %v1499 = vld [vmem:[%s7] sm:$0xff]
        %v1500 = vld [vmem:[%s7 + $0x8] sm:$0xff]
        %v1501 = vld [vmem:[%s7 + $0x10] sm:$0xff]
        %v1502 = vld [vmem:[%s7 + $0x18] sm:$0xff]
        %v1503 = vld [vmem:[%s7 + $0x20] sm:$0xff]
        %v1504 = vld [vmem:[%s7 + $0x28] sm:$0xff]
        %v1505 = vld [vmem:[%s7 + $0x30] sm:$0xff]
        %v1506 = vld [vmem:[%s7 + $0x38] sm:$0xff]
        %v1507 = vmul.f32 %v1461, %v1499
        %v1508 = vmul.f32 %v1466, %v1500
        %v1509 = vmul.f32 %v1471, %v1501
        %v1510 = vmul.f32 %v1476, %v1502
        %v1511 = vmul.f32 %v1481, %v1503
        %v1512 = vmul.f32 %v1486, %v1504
        %v1513 = vmul.f32 %v1491, %v1505
        %v1514 = vmul.f32 %v1496, %v1506
        %v1515 = vld [vmem:[%s8] sm:$0xff]
        %vm1516 = vcmask 64512
        %v1518 = vsel %vm1516, %v1507, 0
        %v1521 = vsel %vm1516, %v1508, 0
        %v1524 = vsel %vm1516, %v1509, 0
        %v1527 = vsel %vm1516, %v1510, 0
        %v1530 = vsel %vm1516, %v1511, 0
        %v1533 = vsel %vm1516, %v1512, 0
        %v1536 = vsel %vm1516, %v1513, 0
        %v1539 = vsel %vm1516, %v1514, 0
        %1541 = vmatprep.subr.mxu0 0.0
        %1542 = vmatpush1.msra.mxu0 %v1515
        %1543 = vmatprep.subr.mxu0 0.0
        %1544 = vmatpush1.msra.mxu0 0.0
        %1545 = vmatprep.subr.mxu0 0.0
        %1546 = vmatpush1.msra.mxu0 0.0
        %1547 = vmatprep.subr.mxu0 0.0
        %1548 = vmatpush1.msra.mxu0 0.0
        %1549 = vmatprep.subr.mxu0 0.0
        %1550 = vmatpush1.msra.mxu0 0.0
        %1551 = vmatprep.subr.mxu0 0.0
        %1552 = vmatpush1.msra.mxu0 0.0
        %1553 = vmatprep.subr.mxu0 0.0
        %1554 = vmatpush1.msra.mxu0 0.0
        %1555 = vmatprep.subr.mxu0 0.0
        %1556 = vmatpush1.msra.mxu0 0.0
        %1557 = vmatprep.subr.mxu0 0.0
        %1558 = vmatpush1.msra.mxu0 0.0
        %1559 = vmatprep.subr.mxu0 0.0
        %1560 = vmatpush1.msra.mxu0 0.0
        %1561 = vmatprep.subr.mxu0 0.0
        %1562 = vmatpush1.msra.mxu0 0.0
        %1563 = vmatprep.subr.mxu0 0.0
        %1564 = vmatpush1.msra.mxu0 0.0
        %1565 = vmatprep.subr.mxu0 0.0
        %1566 = vmatpush1.msra.mxu0 0.0
        %1567 = vmatprep.subr.mxu0 0.0
        %1568 = vmatpush1.msra.mxu0 0.0
        %1569 = vmatprep.subr.mxu0 0.0
        %1570 = vmatpush1.msra.mxu0 0.0
        %1571 = vmatprep.subr.mxu0 0.0
        %1572 = vmatpush1.msra.mxu0 0.0
        %1573 = vmatprep.subr.mxu0 0.0
        %1574 = vmatpush1.msra.mxu0 0.0
        %1575 = vmatprep.subr.mxu0 0.0
        %1576 = vmatpush1.msra.mxu0 0.0
        %1577 = vmatprep.subr.mxu0 0.0
        %1578 = vmatpush1.msra.mxu0 0.0
        %1579 = vmatprep.subr.mxu0 0.0
        %1580 = vmatpush1.msra.mxu0 0.0
        %1581 = vmatprep.subr.mxu0 0.0
        %1582 = vmatpush1.msra.mxu0 0.0
        %1583 = vmatprep.subr.mxu0 0.0
        %1584 = vmatpush1.msra.mxu0 0.0
        %1585 = vmatprep.subr.mxu0 0.0
        %1586 = vmatpush1.msra.mxu0 0.0
        %1587 = vmatprep.subr.mxu0 0.0
        %1588 = vmatpush1.msra.mxu0 0.0
        %1589 = vmatprep.subr.mxu0 0.0
        %1590 = vmatpush1.msra.mxu0 0.0
        %1591 = vmatprep.subr.mxu0 0.0
        %1592 = vmatpush1.msra.mxu0 0.0
        %1593 = vmatprep.subr.mxu0 0.0
        %1594 = vmatpush1.msra.mxu0 0.0
        %1595 = vmatprep.subr.mxu0 0.0
        %1596 = vmatpush1.msra.mxu0 0.0
        %1597 = vmatprep.subr.mxu0 0.0
        %1598 = vmatpush1.msra.mxu0 0.0
        %1599 = vmatprep.subr.mxu0 0.0
        %1600 = vmatpush1.msra.mxu0 0.0
        %1601 = vmatprep.subr.mxu0 0.0
        %1602 = vmatpush1.msra.mxu0 0.0
        %1603 = vmatprep.subr.mxu0 0.0
        %1604 = vmatpush1.msra.mxu0 0.0
        %1605 = vmatprep.mubr.f32.mxu0 0.0
        %1606 = vmatmul.mubr.f32.gmra.mrb[0].mxu0 %v1518
        %v1607 = vpop.f32.mrb[0].mxu0
        %v1608 = vadd.f32 0.0, %v1607
        %v1609 = vpop.f32.mrb[0].mxu0
        %1610 = vmatprep.mubr.f32.mxu0 0.0
        %1611 = vmatmul.mubr.f32.gmra.mrb[0].mxu0 %v1521
        %v1612 = vpop.f32.mrb[0].mxu0
        %v1613 = vadd.f32 0.0, %v1612
        %v1614 = vpop.f32.mrb[0].mxu0
        %1615 = vmatprep.mubr.f32.mxu0 0.0
        %1616 = vmatmul.mubr.f32.gmra.mrb[0].mxu0 %v1524
        %v1617 = vpop.f32.mrb[0].mxu0
        %v1618 = vadd.f32 0.0, %v1617
        %v1619 = vpop.f32.mrb[0].mxu0
        %1620 = vmatprep.mubr.f32.mxu0 0.0
        %1621 = vmatmul.mubr.f32.gmra.mrb[0].mxu0 %v1527
        %v1622 = vpop.f32.mrb[0].mxu0
        %v1623 = vadd.f32 0.0, %v1622
        %v1624 = vpop.f32.mrb[0].mxu0
        %1625 = vmatprep.mubr.f32.mxu0 0.0
        %1626 = vmatmul.mubr.f32.gmra.mrb[0].mxu0 %v1530
        %v1627 = vpop.f32.mrb[0].mxu0
        %v1628 = vadd.f32 0.0, %v1627
        %v1629 = vpop.f32.mrb[0].mxu0
        %1630 = vmatprep.mubr.f32.mxu0 0.0
        %1631 = vmatmul.mubr.f32.gmra.mrb[0].mxu0 %v1533
        %v1632 = vpop.f32.mrb[0].mxu0
        %v1633 = vadd.f32 0.0, %v1632
        %v1634 = vpop.f32.mrb[0].mxu0
        %1635 = vmatprep.mubr.f32.mxu0 0.0
        %1636 = vmatmul.mubr.f32.gmra.mrb[0].mxu0 %v1536
        %v1637 = vpop.f32.mrb[0].mxu0
        %v1638 = vadd.f32 0.0, %v1637
        %v1639 = vpop.f32.mrb[0].mxu0
        %1640 = vmatprep.mubr.f32.mxu0 0.0
        %1641 = vmatmul.mubr.f32.gmra.mrb[0].mxu0 %v1539
        %v1642 = vpop.f32.mrb[0].mxu0
        %v1643 = vadd.f32 0.0, %v1642
        %v1644 = vpop.f32.mrb[0].mxu0
        %1645 = vdwg.mxu0
        %v1646 = vsel %vm1516, %v1608, 0.0
        %v1647 = vsel %vm1516, %v1613, 0.0
        %v1648 = vadd.f32 %v1646, %v1647
        %v1649 = vsel %vm1516, %v1618, 0.0
        %v1650 = vadd.f32 %v1648, %v1649
        %v1651 = vsel %vm1516, %v1623, 0.0
        %v1652 = vadd.f32 %v1650, %v1651
        %v1653 = vsel %vm1516, %v1628, 0.0
        %v1654 = vadd.f32 %v1652, %v1653
        %v1655 = vsel %vm1516, %v1633, 0.0
        %v1656 = vadd.f32 %v1654, %v1655
        %v1657 = vsel %vm1516, %v1638, 0.0
        %v1658 = vadd.f32 %v1656, %v1657
        %v1659 = vsel %vm1516, %v1643, 0.0
        %v1660 = vadd.f32 %v1658, %v1659
        %v1661 = vrot.slane %v1660, 4
        %v1662 = vadd.f32 %v1660, %v1661
        %v1663 = vrot.slane %v1662, 2
        %v1664 = vadd.f32 %v1662, %v1663
        %v1665 = vrot.slane %v1664, 1
        %v1666 = vadd.f32 %v1664, %v1665
        %v1667 = vld [vmem:[%s9] sm:$0x1]
        %v1668 = vadd.f32 %v1666, %v1667
        %v1669 = vmax.f32 %v1668, 0.0
        %v1670 = vld [vmem:[%s10] sm:$0xff]
        %v1671 = vld [vmem:[%s10 + $0x8] sm:$0xff]
        %v1672 = vld [vmem:[%s10 + $0x10] sm:$0xff]
        %v1673 = vld [vmem:[%s10 + $0x18] sm:$0xff]
        %v1674 = vld [vmem:[%s10 + $0x20] sm:$0xff]
        %v1675 = vld [vmem:[%s10 + $0x28] sm:$0xff]
        %v1676 = vld [vmem:[%s10 + $0x30] sm:$0xff]
        %v1677 = vld [vmem:[%s10 + $0x38] sm:$0xff]
        %v1678 = vlaneseq
        %v1679 = vshrl.u32 %v1678, 7
        %v1680 = vsub.s32 0, %v1679
        %v1681 = vrot.slane %v1669, %v1680
        %v1682 = vmul.f32 %v1670, %v1681
        %v1683 = vmul.f32 %v1671, %v1681
        %v1684 = vmul.f32 %v1672, %v1681
        %v1685 = vmul.f32 %v1673, %v1681
        %v1686 = vmul.f32 %v1674, %v1681
        %v1687 = vmul.f32 %v1675, %v1681
        %v1688 = vmul.f32 %v1676, %v1681
        %v1689 = vmul.f32 %v1677, %v1681
        %v1690 = vld [vmem:[%s11] sm:$0xff]
        %v1692 = vsel %vm1516, %v1682, 0
        %v1695 = vsel %vm1516, %v1683, 0
        %v1698 = vsel %vm1516, %v1684, 0
        %v1701 = vsel %vm1516, %v1685, 0
        %v1704 = vsel %vm1516, %v1686, 0
        %v1707 = vsel %vm1516, %v1687, 0
        %v1710 = vsel %vm1516, %v1688, 0
        %v1713 = vsel %vm1516, %v1689, 0
        %1715 = vmatprep.subr.mxu0 0.0
        %1716 = vmatpush1.msra.mxu0 %v1690
        %1717 = vmatprep.subr.mxu0 0.0
        %1718 = vmatpush1.msra.mxu0 0.0
        %1719 = vmatprep.subr.mxu0 0.0
        %1720 = vmatpush1.msra.mxu0 0.0
        %1721 = vmatprep.subr.mxu0 0.0
        %1722 = vmatpush1.msra.mxu0 0.0
        %1723 = vmatprep.subr.mxu0 0.0
        %1724 = vmatpush1.msra.mxu0 0.0
        %1725 = vmatprep.subr.mxu0 0.0
        %1726 = vmatpush1.msra.mxu0 0.0
        %1727 = vmatprep.subr.mxu0 0.0
        %1728 = vmatpush1.msra.mxu0 0.0
        %1729 = vmatprep.subr.mxu0 0.0
        %1730 = vmatpush1.msra.mxu0 0.0
        %1731 = vmatprep.subr.mxu0 0.0
        %1732 = vmatpush1.msra.mxu0 0.0
        %1733 = vmatprep.subr.mxu0 0.0
        %1734 = vmatpush1.msra.mxu0 0.0
        %1735 = vmatprep.subr.mxu0 0.0
        %1736 = vmatpush1.msra.mxu0 0.0
        %1737 = vmatprep.subr.mxu0 0.0
        %1738 = vmatpush1.msra.mxu0 0.0
        %1739 = vmatprep.subr.mxu0 0.0
        %1740 = vmatpush1.msra.mxu0 0.0
        %1741 = vmatprep.subr.mxu0 0.0
        %1742 = vmatpush1.msra.mxu0 0.0
        %1743 = vmatprep.subr.mxu0 0.0
        %1744 = vmatpush1.msra.mxu0 0.0
        %1745 = vmatprep.subr.mxu0 0.0
        %1746 = vmatpush1.msra.mxu0 0.0
        %1747 = vmatprep.subr.mxu0 0.0
        %1748 = vmatpush1.msra.mxu0 0.0
        %1749 = vmatprep.subr.mxu0 0.0
        %1750 = vmatpush1.msra.mxu0 0.0
        %1751 = vmatprep.subr.mxu0 0.0
        %1752 = vmatpush1.msra.mxu0 0.0
        %1753 = vmatprep.subr.mxu0 0.0
        %1754 = vmatpush1.msra.mxu0 0.0
        %1755 = vmatprep.subr.mxu0 0.0
        %1756 = vmatpush1.msra.mxu0 0.0
        %1757 = vmatprep.subr.mxu0 0.0
        %1758 = vmatpush1.msra.mxu0 0.0
        %1759 = vmatprep.subr.mxu0 0.0
        %1760 = vmatpush1.msra.mxu0 0.0
        %1761 = vmatprep.subr.mxu0 0.0
        %1762 = vmatpush1.msra.mxu0 0.0
        %1763 = vmatprep.subr.mxu0 0.0
        %1764 = vmatpush1.msra.mxu0 0.0
        %1765 = vmatprep.subr.mxu0 0.0
        %1766 = vmatpush1.msra.mxu0 0.0
        %1767 = vmatprep.subr.mxu0 0.0
        %1768 = vmatpush1.msra.mxu0 0.0
        %1769 = vmatprep.subr.mxu0 0.0
        %1770 = vmatpush1.msra.mxu0 0.0
        %1771 = vmatprep.subr.mxu0 0.0
        %1772 = vmatpush1.msra.mxu0 0.0
        %1773 = vmatprep.subr.mxu0 0.0
        %1774 = vmatpush1.msra.mxu0 0.0
        %1775 = vmatprep.subr.mxu0 0.0
        %1776 = vmatpush1.msra.mxu0 0.0
        %1777 = vmatprep.subr.mxu0 0.0
        %1778 = vmatpush1.msra.mxu0 0.0
        %1779 = vmatprep.mubr.f32.mxu0 0.0
        %1780 = vmatmul.mubr.f32.gmra.mrb[0].mxu0 %v1692
        %v1781 = vpop.f32.mrb[0].mxu0
        %v1782 = vadd.f32 0.0, %v1781
        %v1783 = vpop.f32.mrb[0].mxu0
        %1784 = vmatprep.mubr.f32.mxu0 0.0
        %1785 = vmatmul.mubr.f32.gmra.mrb[0].mxu0 %v1695
        %v1786 = vpop.f32.mrb[0].mxu0
        %v1787 = vadd.f32 0.0, %v1786
        %v1788 = vpop.f32.mrb[0].mxu0
        %1789 = vmatprep.mubr.f32.mxu0 0.0
        %1790 = vmatmul.mubr.f32.gmra.mrb[0].mxu0 %v1698
        %v1791 = vpop.f32.mrb[0].mxu0
        %v1792 = vadd.f32 0.0, %v1791
        %v1793 = vpop.f32.mrb[0].mxu0
        %1794 = vmatprep.mubr.f32.mxu0 0.0
        %1795 = vmatmul.mubr.f32.gmra.mrb[0].mxu0 %v1701
        %v1796 = vpop.f32.mrb[0].mxu0
        %v1797 = vadd.f32 0.0, %v1796
        %v1798 = vpop.f32.mrb[0].mxu0
        %1799 = vmatprep.mubr.f32.mxu0 0.0
        %1800 = vmatmul.mubr.f32.gmra.mrb[0].mxu0 %v1704
        %v1801 = vpop.f32.mrb[0].mxu0
        %v1802 = vadd.f32 0.0, %v1801
        %v1803 = vpop.f32.mrb[0].mxu0
        %1804 = vmatprep.mubr.f32.mxu0 0.0
        %1805 = vmatmul.mubr.f32.gmra.mrb[0].mxu0 %v1707
        %v1806 = vpop.f32.mrb[0].mxu0
        %v1807 = vadd.f32 0.0, %v1806
        %v1808 = vpop.f32.mrb[0].mxu0
        %1809 = vmatprep.mubr.f32.mxu0 0.0
        %1810 = vmatmul.mubr.f32.gmra.mrb[0].mxu0 %v1710
        %v1811 = vpop.f32.mrb[0].mxu0
        %v1812 = vadd.f32 0.0, %v1811
        %v1813 = vpop.f32.mrb[0].mxu0
        %1814 = vmatprep.mubr.f32.mxu0 0.0
        %1815 = vmatmul.mubr.f32.gmra.mrb[0].mxu0 %v1713
        %v1816 = vpop.f32.mrb[0].mxu0
        %v1817 = vadd.f32 0.0, %v1816
        %v1818 = vpop.f32.mrb[0].mxu0
        %1819 = vdwg.mxu0
        %v1820 = vlaneseq
        %v1821 = vshrl.u32 %v1820, 7
        %v1822 = vadd.s32 %v1821, 8
        %v1823 = vadd.s32 %v1821, 16
        %v1824 = vadd.s32 %v1821, 24
        %v1825 = vadd.s32 %v1821, 32
        %v1826 = vadd.s32 %v1821, 40
        %v1827 = vadd.s32 %v1821, 48
        %v1828 = vadd.s32 %v1821, 56
        %v1829 = vlaneseq
        %v1830 = vand.u32 %v1829, 127
        %v1831 = vadd.s32 %v1821, 4294967295
        %v1832 = vadd.s32 %v1822, 4294967295
        %v1833 = vadd.s32 %v1823, 4294967295
        %v1834 = vadd.s32 %v1824, 4294967295
        %v1835 = vadd.s32 %v1825, 4294967295
        %v1836 = vadd.s32 %v1826, 4294967295
        %v1837 = vadd.s32 %v1827, 4294967295
        %v1838 = vadd.s32 %v1828, 4294967295
        %vm1839 = vcmp.ge.s32.totalorder %v1831, 0
        %vm1840 = vcmp.ge.s32.totalorder %v1832, 0
        %vm1841 = vcmp.ge.s32.totalorder %v1833, 0
        %vm1842 = vcmp.ge.s32.totalorder %v1834, 0
        %vm1843 = vcmp.ge.s32.totalorder %v1835, 0
        %vm1844 = vcmp.ge.s32.totalorder %v1836, 0
        %vm1845 = vcmp.ge.s32.totalorder %v1837, 0
        %vm1846 = vcmp.ge.s32.totalorder %v1838, 0
        %vm1847 = vcmp.lt.s32.totalorder %v1831, 64
        %vm1848 = vcmp.lt.s32.totalorder %v1832, 64
        %vm1849 = vcmp.lt.s32.totalorder %v1833, 64
        %vm1850 = vcmp.lt.s32.totalorder %v1834, 64
        %vm1851 = vcmp.lt.s32.totalorder %v1835, 64
        %vm1852 = vcmp.lt.s32.totalorder %v1836, 64
        %vm1853 = vcmp.lt.s32.totalorder %v1837, 64
        %vm1854 = vcmp.lt.s32.totalorder %v1838, 64
        %vm1855 = vmand %vm1839, %vm1847
        %vm1856 = vmand %vm1840, %vm1848
        %vm1857 = vmand %vm1841, %vm1849
        %vm1858 = vmand %vm1842, %vm1850
        %vm1859 = vmand %vm1843, %vm1851
        %vm1860 = vmand %vm1844, %vm1852
        %vm1861 = vmand %vm1845, %vm1853
        %vm1862 = vmand %vm1846, %vm1854
        %v1863 = vadd.s32 %v1821, 1
        %v1864 = vadd.s32 %v1822, 1
        %v1865 = vadd.s32 %v1823, 1
        %v1866 = vadd.s32 %v1824, 1
        %v1867 = vadd.s32 %v1825, 1
        %v1868 = vadd.s32 %v1826, 1
        %v1869 = vadd.s32 %v1827, 1
        %v1870 = vadd.s32 %v1828, 1
        %vm1871 = vcmp.ge.s32.totalorder %v1863, 0
        %vm1872 = vcmp.ge.s32.totalorder %v1864, 0
        %vm1873 = vcmp.ge.s32.totalorder %v1865, 0
        %vm1874 = vcmp.ge.s32.totalorder %v1866, 0
        %vm1875 = vcmp.ge.s32.totalorder %v1867, 0
        %vm1876 = vcmp.ge.s32.totalorder %v1868, 0
        %vm1877 = vcmp.ge.s32.totalorder %v1869, 0
        %vm1878 = vcmp.ge.s32.totalorder %v1870, 0
        %vm1879 = vcmp.lt.s32.totalorder %v1863, 64
        %vm1880 = vcmp.lt.s32.totalorder %v1864, 64
        %vm1881 = vcmp.lt.s32.totalorder %v1865, 64
        %vm1882 = vcmp.lt.s32.totalorder %v1866, 64
        %vm1883 = vcmp.lt.s32.totalorder %v1867, 64
        %vm1884 = vcmp.lt.s32.totalorder %v1868, 64
        %vm1885 = vcmp.lt.s32.totalorder %v1869, 64
        %vm1886 = vcmp.lt.s32.totalorder %v1870, 64
        %vm1887 = vmand %vm1871, %vm1879
        %vm1888 = vmand %vm1872, %vm1880
        %vm1889 = vmand %vm1873, %vm1881
        %vm1890 = vmand %vm1874, %vm1882
        %vm1891 = vmand %vm1875, %vm1883
        %vm1892 = vmand %vm1876, %vm1884
        %vm1893 = vmand %vm1877, %vm1885
        %vm1894 = vmand %vm1878, %vm1886
        %v1895 = vadd.s32 %v1830, 4294967295
        %vm1896 = vcmp.ge.s32.totalorder %v1895, 0
        %vm1897 = vcmp.lt.s32.totalorder %v1895, 128
        %vm1898 = vmand %vm1896, %vm1897
        %v1899 = vadd.s32 %v1830, 1
        %vm1900 = vcmp.ge.s32.totalorder %v1899, 0
        %vm1901 = vcmp.lt.s32.totalorder %v1899, 128
        %vm1902 = vmand %vm1900, %vm1901
        %s1903 = sld [smem:[#allocation8]]
        %v1904 = vstv %s1903
        %v1905 = vadd.f32 %v1904, 0.0
        %s1906 = sld [smem:[#allocation8 + $0x1]]
        %v1907 = vstv %s1906
        %v1908 = vadd.f32 %v1907, 0.0
        %v1909 = vrot.slane %v1340, 7
        %v1910 = vrot.slane %v1345, 7
        %v1911 = vrot.slane %v1350, 7
        %v1912 = vrot.slane %v1355, 7
        %v1913 = vrot.slane %v1360, 7
        %v1914 = vrot.slane %v1365, 7
        %v1915 = vrot.slane %v1370, 7
        %v1916 = vrot.slane %v1375, 7
        %vm1917 = vcmp.lt.s32.totalorder %v1821, 1
        %v1918 = vsel %vm1917, %v1915, %v1916
        %v1919 = vsel %vm1917, %v1914, %v1915
        %v1920 = vsel %vm1917, %v1913, %v1914
        %v1921 = vsel %vm1917, %v1912, %v1913
        %v1922 = vsel %vm1917, %v1911, %v1912
        %v1923 = vsel %vm1917, %v1910, %v1911
        %v1924 = vsel %vm1917, %v1909, %v1910
        %v1925 = vsel %vm1917, %v1916, %v1909
        %1926 = vrot.lane.b32.xlu0 %v1925, 1
        %v1927 = vpop.permute.xlu0 %1926
        %1928 = vrot.lane.b32.xlu0 %v1924, 1
        %v1929 = vpop.permute.xlu0 %1928
        %1930 = vrot.lane.b32.xlu0 %v1923, 1
        %v1931 = vpop.permute.xlu0 %1930
        %1932 = vrot.lane.b32.xlu0 %v1922, 1
        %v1933 = vpop.permute.xlu0 %1932
        %1934 = vrot.lane.b32.xlu0 %v1921, 1
        %v1935 = vpop.permute.xlu0 %1934
        %1936 = vrot.lane.b32.xlu0 %v1920, 1
        %v1937 = vpop.permute.xlu0 %1936
        %1938 = vrot.lane.b32.xlu0 %v1919, 1
        %v1939 = vpop.permute.xlu0 %1938
        %1940 = vrot.lane.b32.xlu0 %v1918, 1
        %v1941 = vpop.permute.xlu0 %1940
        %v1942 = vsel %vm1855, %v1927, 0.0
        %v1943 = vsel %vm1856, %v1929, 0.0
        %v1944 = vsel %vm1857, %v1931, 0.0
        %v1945 = vsel %vm1858, %v1933, 0.0
        %v1946 = vsel %vm1859, %v1935, 0.0
        %v1947 = vsel %vm1860, %v1937, 0.0
        %v1948 = vsel %vm1861, %v1939, 0.0
        %v1949 = vsel %vm1862, %v1941, 0.0
        %v1950 = vsel %vm1898, %v1942, 0.0
        %v1951 = vsel %vm1898, %v1943, 0.0
        %v1952 = vsel %vm1898, %v1944, 0.0
        %v1953 = vsel %vm1898, %v1945, 0.0
        %v1954 = vsel %vm1898, %v1946, 0.0
        %v1955 = vsel %vm1898, %v1947, 0.0
        %v1956 = vsel %vm1898, %v1948, 0.0
        %v1957 = vsel %vm1898, %v1949, 0.0
        %s1958 = sld [smem:[#allocation7]]
        %v1959 = vstv %s1958
        %v1960 = vmul.f32 %v1959, %v1950
        %v1961 = vmul.f32 %v1959, %v1951
        %v1962 = vmul.f32 %v1959, %v1952
        %v1963 = vmul.f32 %v1959, %v1953
        %v1964 = vmul.f32 %v1959, %v1954
        %v1965 = vmul.f32 %v1959, %v1955
        %v1966 = vmul.f32 %v1959, %v1956
        %v1967 = vmul.f32 %v1959, %v1957
        %v1968 = vadd.f32 %v1905, %v1960
        %v1969 = vadd.f32 %v1905, %v1961
        %v1970 = vadd.f32 %v1905, %v1962
        %v1971 = vadd.f32 %v1905, %v1963
        %v1972 = vadd.f32 %v1905, %v1964
        %v1973 = vadd.f32 %v1905, %v1965
        %v1974 = vadd.f32 %v1905, %v1966
        %v1975 = vadd.f32 %v1905, %v1967
        %s1976 = sld [smem:[#allocation7 + $0x12]]
        %v1977 = vstv %s1976
        %v1978 = vmul.f32 %v1977, %v1950
        %v1979 = vmul.f32 %v1977, %v1951
        %v1980 = vmul.f32 %v1977, %v1952
        %v1981 = vmul.f32 %v1977, %v1953
        %v1982 = vmul.f32 %v1977, %v1954
        %v1983 = vmul.f32 %v1977, %v1955
        %v1984 = vmul.f32 %v1977, %v1956
        %v1985 = vmul.f32 %v1977, %v1957
        %v1986 = vadd.f32 %v1908, %v1978
        %v1987 = vadd.f32 %v1908, %v1979
        %v1988 = vadd.f32 %v1908, %v1980
        %v1989 = vadd.f32 %v1908, %v1981
        %v1990 = vadd.f32 %v1908, %v1982
        %v1991 = vadd.f32 %v1908, %v1983
        %v1992 = vadd.f32 %v1908, %v1984
        %v1993 = vadd.f32 %v1908, %v1985
        %v1994 = vsel %vm1855, %v1925, 0.0
        %v1995 = vsel %vm1856, %v1924, 0.0
        %v1996 = vsel %vm1857, %v1923, 0.0
        %v1997 = vsel %vm1858, %v1922, 0.0
        %v1998 = vsel %vm1859, %v1921, 0.0
        %v1999 = vsel %vm1860, %v1920, 0.0
        %v2000 = vsel %vm1861, %v1919, 0.0
        %v2001 = vsel %vm1862, %v1918, 0.0
        %s2002 = sld [smem:[#allocation7 + $0x1]]
        %v2003 = vstv %s2002
        %v2004 = vmul.f32 %v2003, %v1994
        %v2005 = vmul.f32 %v2003, %v1995
        %v2006 = vmul.f32 %v2003, %v1996
        %v2007 = vmul.f32 %v2003, %v1997
        %v2008 = vmul.f32 %v2003, %v1998
        %v2009 = vmul.f32 %v2003, %v1999
        %v2010 = vmul.f32 %v2003, %v2000
        %v2011 = vmul.f32 %v2003, %v2001
        %v2012 = vadd.f32 %v1968, %v2004
        %v2013 = vadd.f32 %v1969, %v2005
        %v2014 = vadd.f32 %v1970, %v2006
        %v2015 = vadd.f32 %v1971, %v2007
        %v2016 = vadd.f32 %v1972, %v2008
        %v2017 = vadd.f32 %v1973, %v2009
        %v2018 = vadd.f32 %v1974, %v2010
        %v2019 = vadd.f32 %v1975, %v2011
        %s2020 = sld [smem:[#allocation7 + $0x13]]
        %v2021 = vstv %s2020
        %v2022 = vmul.f32 %v2021, %v1994
        %v2023 = vmul.f32 %v2021, %v1995
        %v2024 = vmul.f32 %v2021, %v1996
        %v2025 = vmul.f32 %v2021, %v1997
        %v2026 = vmul.f32 %v2021, %v1998
        %v2027 = vmul.f32 %v2021, %v1999
        %v2028 = vmul.f32 %v2021, %v2000
        %v2029 = vmul.f32 %v2021, %v2001
        %v2030 = vadd.f32 %v1986, %v2022
        %v2031 = vadd.f32 %v1987, %v2023
        %v2032 = vadd.f32 %v1988, %v2024
        %v2033 = vadd.f32 %v1989, %v2025
        %v2034 = vadd.f32 %v1990, %v2026
        %v2035 = vadd.f32 %v1991, %v2027
        %v2036 = vadd.f32 %v1992, %v2028
        %v2037 = vadd.f32 %v1993, %v2029
        %2038 = vrot.lane.b32.xlu0 %v1925, 127
        %v2039 = vpop.permute.xlu0 %2038
        %2040 = vrot.lane.b32.xlu0 %v1924, 127
        %v2041 = vpop.permute.xlu0 %2040
        %2042 = vrot.lane.b32.xlu0 %v1923, 127
        %v2043 = vpop.permute.xlu0 %2042
        %2044 = vrot.lane.b32.xlu0 %v1922, 127
        %v2045 = vpop.permute.xlu0 %2044
        %2046 = vrot.lane.b32.xlu0 %v1921, 127
        %v2047 = vpop.permute.xlu0 %2046
        %2048 = vrot.lane.b32.xlu0 %v1920, 127
        %v2049 = vpop.permute.xlu0 %2048
        %2050 = vrot.lane.b32.xlu0 %v1919, 127
        %v2051 = vpop.permute.xlu0 %2050
        %2052 = vrot.lane.b32.xlu0 %v1918, 127
        %v2053 = vpop.permute.xlu0 %2052
        %v2054 = vsel %vm1855, %v2039, 0.0
        %v2055 = vsel %vm1856, %v2041, 0.0
        %v2056 = vsel %vm1857, %v2043, 0.0
        %v2057 = vsel %vm1858, %v2045, 0.0
        %v2058 = vsel %vm1859, %v2047, 0.0
        %v2059 = vsel %vm1860, %v2049, 0.0
        %v2060 = vsel %vm1861, %v2051, 0.0
        %v2061 = vsel %vm1862, %v2053, 0.0
        %v2062 = vsel %vm1902, %v2054, 0.0
        %v2063 = vsel %vm1902, %v2055, 0.0
        %v2064 = vsel %vm1902, %v2056, 0.0
        %v2065 = vsel %vm1902, %v2057, 0.0
        %v2066 = vsel %vm1902, %v2058, 0.0
        %v2067 = vsel %vm1902, %v2059, 0.0
        %v2068 = vsel %vm1902, %v2060, 0.0
        %v2069 = vsel %vm1902, %v2061, 0.0
        %s2070 = sld [smem:[#allocation7 + $0x2]]
        %v2071 = vstv %s2070
        %v2072 = vmul.f32 %v2071, %v2062
        %v2073 = vmul.f32 %v2071, %v2063
        %v2074 = vmul.f32 %v2071, %v2064
        %v2075 = vmul.f32 %v2071, %v2065
        %v2076 = vmul.f32 %v2071, %v2066
        %v2077 = vmul.f32 %v2071, %v2067
        %v2078 = vmul.f32 %v2071, %v2068
        %v2079 = vmul.f32 %v2071, %v2069
        %v2080 = vadd.f32 %v2012, %v2072
        %v2081 = vadd.f32 %v2013, %v2073
        %v2082 = vadd.f32 %v2014, %v2074
        %v2083 = vadd.f32 %v2015, %v2075
        %v2084 = vadd.f32 %v2016, %v2076
        %v2085 = vadd.f32 %v2017, %v2077
        %v2086 = vadd.f32 %v2018, %v2078
        %v2087 = vadd.f32 %v2019, %v2079
        %s2088 = sld [smem:[#allocation7 + $0x14]]
        %v2089 = vstv %s2088
        %v2090 = vmul.f32 %v2089, %v2062
        %v2091 = vmul.f32 %v2089, %v2063
        %v2092 = vmul.f32 %v2089, %v2064
        %v2093 = vmul.f32 %v2089, %v2065
        %v2094 = vmul.f32 %v2089, %v2066
        %v2095 = vmul.f32 %v2089, %v2067
        %v2096 = vmul.f32 %v2089, %v2068
        %v2097 = vmul.f32 %v2089, %v2069
        %v2098 = vadd.f32 %v2030, %v2090
        %v2099 = vadd.f32 %v2031, %v2091
        %v2100 = vadd.f32 %v2032, %v2092
        %v2101 = vadd.f32 %v2033, %v2093
        %v2102 = vadd.f32 %v2034, %v2094
        %v2103 = vadd.f32 %v2035, %v2095
        %v2104 = vadd.f32 %v2036, %v2096
        %v2105 = vadd.f32 %v2037, %v2097
        %2106 = vrot.lane.b32.xlu0 %v1340, 1
        %v2107 = vpop.permute.xlu0 %2106
        %2108 = vrot.lane.b32.xlu0 %v1345, 1
        %v2109 = vpop.permute.xlu0 %2108
        %2110 = vrot.lane.b32.xlu0 %v1350, 1
        %v2111 = vpop.permute.xlu0 %2110
        %2112 = vrot.lane.b32.xlu0 %v1355, 1
        %v2113 = vpop.permute.xlu0 %2112
        %2114 = vrot.lane.b32.xlu0 %v1360, 1
        %v2115 = vpop.permute.xlu0 %2114
        %2116 = vrot.lane.b32.xlu0 %v1365, 1
        %v2117 = vpop.permute.xlu0 %2116
        %2118 = vrot.lane.b32.xlu0 %v1370, 1
        %v2119 = vpop.permute.xlu0 %2118
        %2120 = vrot.lane.b32.xlu0 %v1375, 1
        %v2121 = vpop.permute.xlu0 %2120
        %v2122 = vsel %vm1898, %v2107, 0.0
        %v2123 = vsel %vm1898, %v2109, 0.0
        %v2124 = vsel %vm1898, %v2111, 0.0
        %v2125 = vsel %vm1898, %v2113, 0.0
        %v2126 = vsel %vm1898, %v2115, 0.0
        %v2127 = vsel %vm1898, %v2117, 0.0
        %v2128 = vsel %vm1898, %v2119, 0.0
        %v2129 = vsel %vm1898, %v2121, 0.0
        %s2130 = sld [smem:[#allocation7 + $0x3]]
        %v2131 = vstv %s2130
        %v2132 = vmul.f32 %v2131, %v2122
        %v2133 = vmul.f32 %v2131, %v2123
        %v2134 = vmul.f32 %v2131, %v2124
        %v2135 = vmul.f32 %v2131, %v2125
        %v2136 = vmul.f32 %v2131, %v2126
        %v2137 = vmul.f32 %v2131, %v2127
        %v2138 = vmul.f32 %v2131, %v2128
        %v2139 = vmul.f32 %v2131, %v2129
        %v2140 = vadd.f32 %v2080, %v2132
        %v2141 = vadd.f32 %v2081, %v2133
        %v2142 = vadd.f32 %v2082, %v2134
        %v2143 = vadd.f32 %v2083, %v2135
        %v2144 = vadd.f32 %v2084, %v2136
        %v2145 = vadd.f32 %v2085, %v2137
        %v2146 = vadd.f32 %v2086, %v2138
        %v2147 = vadd.f32 %v2087, %v2139
        %s2148 = sld [smem:[#allocation7 + $0x15]]
        %v2149 = vstv %s2148
        %v2150 = vmul.f32 %v2149, %v2122
        %v2151 = vmul.f32 %v2149, %v2123
        %v2152 = vmul.f32 %v2149, %v2124
        %v2153 = vmul.f32 %v2149, %v2125
        %v2154 = vmul.f32 %v2149, %v2126
        %v2155 = vmul.f32 %v2149, %v2127
        %v2156 = vmul.f32 %v2149, %v2128
        %v2157 = vmul.f32 %v2149, %v2129
        %v2158 = vadd.f32 %v2098, %v2150
        %v2159 = vadd.f32 %v2099, %v2151
        %v2160 = vadd.f32 %v2100, %v2152
        %v2161 = vadd.f32 %v2101, %v2153
        %v2162 = vadd.f32 %v2102, %v2154
        %v2163 = vadd.f32 %v2103, %v2155
        %v2164 = vadd.f32 %v2104, %v2156
        %v2165 = vadd.f32 %v2105, %v2157
        %s2166 = sld [smem:[#allocation7 + $0x4]]
        %v2167 = vstv %s2166
        %v2168 = vmul.f32 %v2167, %v1340
        %v2169 = vmul.f32 %v2167, %v1345
        %v2170 = vmul.f32 %v2167, %v1350
        %v2171 = vmul.f32 %v2167, %v1355
        %v2172 = vmul.f32 %v2167, %v1360
        %v2173 = vmul.f32 %v2167, %v1365
        %v2174 = vmul.f32 %v2167, %v1370
        %v2175 = vmul.f32 %v2167, %v1375
        %v2176 = vadd.f32 %v2140, %v2168
        %v2177 = vadd.f32 %v2141, %v2169
        %v2178 = vadd.f32 %v2142, %v2170
        %v2179 = vadd.f32 %v2143, %v2171
        %v2180 = vadd.f32 %v2144, %v2172
        %v2181 = vadd.f32 %v2145, %v2173
        %v2182 = vadd.f32 %v2146, %v2174
        %v2183 = vadd.f32 %v2147, %v2175
        %s2184 = sld [smem:[#allocation7 + $0x16]]
        %v2185 = vstv %s2184
        %v2186 = vmul.f32 %v2185, %v1340
        %v2187 = vmul.f32 %v2185, %v1345
        %v2188 = vmul.f32 %v2185, %v1350
        %v2189 = vmul.f32 %v2185, %v1355
        %v2190 = vmul.f32 %v2185, %v1360
        %v2191 = vmul.f32 %v2185, %v1365
        %v2192 = vmul.f32 %v2185, %v1370
        %v2193 = vmul.f32 %v2185, %v1375
        %v2194 = vadd.f32 %v2158, %v2186
        %v2195 = vadd.f32 %v2159, %v2187
        %v2196 = vadd.f32 %v2160, %v2188
        %v2197 = vadd.f32 %v2161, %v2189
        %v2198 = vadd.f32 %v2162, %v2190
        %v2199 = vadd.f32 %v2163, %v2191
        %v2200 = vadd.f32 %v2164, %v2192
        %v2201 = vadd.f32 %v2165, %v2193
        %2202 = vrot.lane.b32.xlu0 %v1340, 127
        %v2203 = vpop.permute.xlu0 %2202
        %2204 = vrot.lane.b32.xlu0 %v1345, 127
        %v2205 = vpop.permute.xlu0 %2204
        %2206 = vrot.lane.b32.xlu0 %v1350, 127
        %v2207 = vpop.permute.xlu0 %2206
        %2208 = vrot.lane.b32.xlu0 %v1355, 127
        %v2209 = vpop.permute.xlu0 %2208
        %2210 = vrot.lane.b32.xlu0 %v1360, 127
        %v2211 = vpop.permute.xlu0 %2210
        %2212 = vrot.lane.b32.xlu0 %v1365, 127
        %v2213 = vpop.permute.xlu0 %2212
        %2214 = vrot.lane.b32.xlu0 %v1370, 127
        %v2215 = vpop.permute.xlu0 %2214
        %2216 = vrot.lane.b32.xlu0 %v1375, 127
        %v2217 = vpop.permute.xlu0 %2216
        %v2218 = vsel %vm1902, %v2203, 0.0
        %v2219 = vsel %vm1902, %v2205, 0.0
        %v2220 = vsel %vm1902, %v2207, 0.0
        %v2221 = vsel %vm1902, %v2209, 0.0
        %v2222 = vsel %vm1902, %v2211, 0.0
        %v2223 = vsel %vm1902, %v2213, 0.0
        %v2224 = vsel %vm1902, %v2215, 0.0
        %v2225 = vsel %vm1902, %v2217, 0.0
        %s2226 = sld [smem:[#allocation7 + $0x5]]
        %v2227 = vstv %s2226
        %v2228 = vmul.f32 %v2227, %v2218
        %v2229 = vmul.f32 %v2227, %v2219
        %v2230 = vmul.f32 %v2227, %v2220
        %v2231 = vmul.f32 %v2227, %v2221
        %v2232 = vmul.f32 %v2227, %v2222
        %v2233 = vmul.f32 %v2227, %v2223
        %v2234 = vmul.f32 %v2227, %v2224
        %v2235 = vmul.f32 %v2227, %v2225
        %v2236 = vadd.f32 %v2176, %v2228
        %v2237 = vadd.f32 %v2177, %v2229
        %v2238 = vadd.f32 %v2178, %v2230
        %v2239 = vadd.f32 %v2179, %v2231
        %v2240 = vadd.f32 %v2180, %v2232
        %v2241 = vadd.f32 %v2181, %v2233
        %v2242 = vadd.f32 %v2182, %v2234
        %v2243 = vadd.f32 %v2183, %v2235
        %s2244 = sld [smem:[#allocation7 + $0x17]]
        %v2245 = vstv %s2244
        %v2246 = vmul.f32 %v2245, %v2218
        %v2247 = vmul.f32 %v2245, %v2219
        %v2248 = vmul.f32 %v2245, %v2220
        %v2249 = vmul.f32 %v2245, %v2221
        %v2250 = vmul.f32 %v2245, %v2222
        %v2251 = vmul.f32 %v2245, %v2223
        %v2252 = vmul.f32 %v2245, %v2224
        %v2253 = vmul.f32 %v2245, %v2225
        %v2254 = vadd.f32 %v2194, %v2246
        %v2255 = vadd.f32 %v2195, %v2247
        %v2256 = vadd.f32 %v2196, %v2248
        %v2257 = vadd.f32 %v2197, %v2249
        %v2258 = vadd.f32 %v2198, %v2250
        %v2259 = vadd.f32 %v2199, %v2251
        %v2260 = vadd.f32 %v2200, %v2252
        %v2261 = vadd.f32 %v2201, %v2253
        %v2262 = vrot.slane %v1340, 1
        %v2263 = vrot.slane %v1345, 1
        %v2264 = vrot.slane %v1350, 1
        %v2265 = vrot.slane %v1355, 1
        %v2266 = vrot.slane %v1360, 1
        %v2267 = vrot.slane %v1365, 1
        %v2268 = vrot.slane %v1370, 1
        %v2269 = vrot.slane %v1375, 1
        %vm2270 = vcmp.lt.s32.totalorder %v1821, 7
        %v2271 = vsel %vm2270, %v2268, %v2269
        %v2272 = vsel %vm2270, %v2267, %v2268
        %v2273 = vsel %vm2270, %v2266, %v2267
        %v2274 = vsel %vm2270, %v2265, %v2266
        %v2275 = vsel %vm2270, %v2264, %v2265
        %v2276 = vsel %vm2270, %v2263, %v2264
        %v2277 = vsel %vm2270, %v2262, %v2263
        %v2278 = vsel %vm2270, %v2269, %v2262
        %2279 = vrot.lane.b32.xlu0 %v2277, 1
        %v2280 = vpop.permute.xlu0 %2279
        %2281 = vrot.lane.b32.xlu0 %v2276, 1
        %v2282 = vpop.permute.xlu0 %2281
        %2283 = vrot.lane.b32.xlu0 %v2275, 1
        %v2284 = vpop.permute.xlu0 %2283
        %2285 = vrot.lane.b32.xlu0 %v2274, 1
        %v2286 = vpop.permute.xlu0 %2285
        %2287 = vrot.lane.b32.xlu0 %v2273, 1
        %v2288 = vpop.permute.xlu0 %2287
        %2289 = vrot.lane.b32.xlu0 %v2272, 1
        %v2290 = vpop.permute.xlu0 %2289
        %2291 = vrot.lane.b32.xlu0 %v2271, 1
        %v2292 = vpop.permute.xlu0 %2291
        %2293 = vrot.lane.b32.xlu0 %v2278, 1
        %v2294 = vpop.permute.xlu0 %2293
        %v2295 = vsel %vm1887, %v2280, 0.0
        %v2296 = vsel %vm1888, %v2282, 0.0
        %v2297 = vsel %vm1889, %v2284, 0.0
        %v2298 = vsel %vm1890, %v2286, 0.0
        %v2299 = vsel %vm1891, %v2288, 0.0
        %v2300 = vsel %vm1892, %v2290, 0.0
        %v2301 = vsel %vm1893, %v2292, 0.0
        %v2302 = vsel %vm1894, %v2294, 0.0
        %v2303 = vsel %vm1898, %v2295, 0.0
        %v2304 = vsel %vm1898, %v2296, 0.0
        %v2305 = vsel %vm1898, %v2297, 0.0
        %v2306 = vsel %vm1898, %v2298, 0.0
        %v2307 = vsel %vm1898, %v2299, 0.0
        %v2308 = vsel %vm1898, %v2300, 0.0
        %v2309 = vsel %vm1898, %v2301, 0.0
        %v2310 = vsel %vm1898, %v2302, 0.0
        %s2311 = sld [smem:[#allocation7 + $0x6]]
        %v2312 = vstv %s2311
        %v2313 = vmul.f32 %v2312, %v2303
        %v2314 = vmul.f32 %v2312, %v2304
        %v2315 = vmul.f32 %v2312, %v2305
        %v2316 = vmul.f32 %v2312, %v2306
        %v2317 = vmul.f32 %v2312, %v2307
        %v2318 = vmul.f32 %v2312, %v2308
        %v2319 = vmul.f32 %v2312, %v2309
        %v2320 = vmul.f32 %v2312, %v2310
        %v2321 = vadd.f32 %v2236, %v2313
        %v2322 = vadd.f32 %v2237, %v2314
        %v2323 = vadd.f32 %v2238, %v2315
        %v2324 = vadd.f32 %v2239, %v2316
        %v2325 = vadd.f32 %v2240, %v2317
        %v2326 = vadd.f32 %v2241, %v2318
        %v2327 = vadd.f32 %v2242, %v2319
        %v2328 = vadd.f32 %v2243, %v2320
        %s2329 = sld [smem:[#allocation7 + $0x18]]
        %v2330 = vstv %s2329
        %v2331 = vmul.f32 %v2330, %v2303
        %v2332 = vmul.f32 %v2330, %v2304
        %v2333 = vmul.f32 %v2330, %v2305
        %v2334 = vmul.f32 %v2330, %v2306
        %v2335 = vmul.f32 %v2330, %v2307
        %v2336 = vmul.f32 %v2330, %v2308
        %v2337 = vmul.f32 %v2330, %v2309
        %v2338 = vmul.f32 %v2330, %v2310
        %v2339 = vadd.f32 %v2254, %v2331
        %v2340 = vadd.f32 %v2255, %v2332
        %v2341 = vadd.f32 %v2256, %v2333
        %v2342 = vadd.f32 %v2257, %v2334
        %v2343 = vadd.f32 %v2258, %v2335
        %v2344 = vadd.f32 %v2259, %v2336
        %v2345 = vadd.f32 %v2260, %v2337
        %v2346 = vadd.f32 %v2261, %v2338
        %v2347 = vsel %vm1887, %v2277, 0.0
        %v2348 = vsel %vm1888, %v2276, 0.0
        %v2349 = vsel %vm1889, %v2275, 0.0
        %v2350 = vsel %vm1890, %v2274, 0.0
        %v2351 = vsel %vm1891, %v2273, 0.0
        %v2352 = vsel %vm1892, %v2272, 0.0
        %v2353 = vsel %vm1893, %v2271, 0.0
        %v2354 = vsel %vm1894, %v2278, 0.0
        %s2355 = sld [smem:[#allocation7 + $0x7]]
        %v2356 = vstv %s2355
        %v2357 = vmul.f32 %v2356, %v2347
        %v2358 = vmul.f32 %v2356, %v2348
        %v2359 = vmul.f32 %v2356, %v2349
        %v2360 = vmul.f32 %v2356, %v2350
        %v2361 = vmul.f32 %v2356, %v2351
        %v2362 = vmul.f32 %v2356, %v2352
        %v2363 = vmul.f32 %v2356, %v2353
        %v2364 = vmul.f32 %v2356, %v2354
        %v2365 = vadd.f32 %v2321, %v2357
        %v2366 = vadd.f32 %v2322, %v2358
        %v2367 = vadd.f32 %v2323, %v2359
        %v2368 = vadd.f32 %v2324, %v2360
        %v2369 = vadd.f32 %v2325, %v2361
        %v2370 = vadd.f32 %v2326, %v2362
        %v2371 = vadd.f32 %v2327, %v2363
        %v2372 = vadd.f32 %v2328, %v2364
        %s2373 = sld [smem:[#allocation7 + $0x19]]
        %v2374 = vstv %s2373
        %v2375 = vmul.f32 %v2374, %v2347
        %v2376 = vmul.f32 %v2374, %v2348
        %v2377 = vmul.f32 %v2374, %v2349
        %v2378 = vmul.f32 %v2374, %v2350
        %v2379 = vmul.f32 %v2374, %v2351
        %v2380 = vmul.f32 %v2374, %v2352
        %v2381 = vmul.f32 %v2374, %v2353
        %v2382 = vmul.f32 %v2374, %v2354
        %v2383 = vadd.f32 %v2339, %v2375
        %v2384 = vadd.f32 %v2340, %v2376
        %v2385 = vadd.f32 %v2341, %v2377
        %v2386 = vadd.f32 %v2342, %v2378
        %v2387 = vadd.f32 %v2343, %v2379
        %v2388 = vadd.f32 %v2344, %v2380
        %v2389 = vadd.f32 %v2345, %v2381
        %v2390 = vadd.f32 %v2346, %v2382
        %2391 = vrot.lane.b32.xlu0 %v2277, 127
        %v2392 = vpop.permute.xlu0 %2391
        %2393 = vrot.lane.b32.xlu0 %v2276, 127
        %v2394 = vpop.permute.xlu0 %2393
        %2395 = vrot.lane.b32.xlu0 %v2275, 127
        %v2396 = vpop.permute.xlu0 %2395
        %2397 = vrot.lane.b32.xlu0 %v2274, 127
        %v2398 = vpop.permute.xlu0 %2397
        %2399 = vrot.lane.b32.xlu0 %v2273, 127
        %v2400 = vpop.permute.xlu0 %2399
        %2401 = vrot.lane.b32.xlu0 %v2272, 127
        %v2402 = vpop.permute.xlu0 %2401
        %2403 = vrot.lane.b32.xlu0 %v2271, 127
        %v2404 = vpop.permute.xlu0 %2403
        %2405 = vrot.lane.b32.xlu0 %v2278, 127
        %v2406 = vpop.permute.xlu0 %2405
        %v2407 = vsel %vm1887, %v2392, 0.0
        %v2408 = vsel %vm1888, %v2394, 0.0
        %v2409 = vsel %vm1889, %v2396, 0.0
        %v2410 = vsel %vm1890, %v2398, 0.0
        %v2411 = vsel %vm1891, %v2400, 0.0
        %v2412 = vsel %vm1892, %v2402, 0.0
        %v2413 = vsel %vm1893, %v2404, 0.0
        %v2414 = vsel %vm1894, %v2406, 0.0
        %v2415 = vsel %vm1902, %v2407, 0.0
        %v2416 = vsel %vm1902, %v2408, 0.0
        %v2417 = vsel %vm1902, %v2409, 0.0
        %v2418 = vsel %vm1902, %v2410, 0.0
        %v2419 = vsel %vm1902, %v2411, 0.0
        %v2420 = vsel %vm1902, %v2412, 0.0
        %v2421 = vsel %vm1902, %v2413, 0.0
        %v2422 = vsel %vm1902, %v2414, 0.0
        %s2423 = sld [smem:[#allocation7 + $0x8]]
        %v2424 = vstv %s2423
        %v2425 = vmul.f32 %v2424, %v2415
        %v2426 = vmul.f32 %v2424, %v2416
        %v2427 = vmul.f32 %v2424, %v2417
        %v2428 = vmul.f32 %v2424, %v2418
        %v2429 = vmul.f32 %v2424, %v2419
        %v2430 = vmul.f32 %v2424, %v2420
        %v2431 = vmul.f32 %v2424, %v2421
        %v2432 = vmul.f32 %v2424, %v2422
        %v2433 = vadd.f32 %v2365, %v2425
        %v2434 = vadd.f32 %v2366, %v2426
        %v2435 = vadd.f32 %v2367, %v2427
        %v2436 = vadd.f32 %v2368, %v2428
        %v2437 = vadd.f32 %v2369, %v2429
        %v2438 = vadd.f32 %v2370, %v2430
        %v2439 = vadd.f32 %v2371, %v2431
        %v2440 = vadd.f32 %v2372, %v2432
        %s2441 = sld [smem:[#allocation7 + $0x1a]]
        %v2442 = vstv %s2441
        %v2443 = vmul.f32 %v2442, %v2415
        %v2444 = vmul.f32 %v2442, %v2416
        %v2445 = vmul.f32 %v2442, %v2417
        %v2446 = vmul.f32 %v2442, %v2418
        %v2447 = vmul.f32 %v2442, %v2419
        %v2448 = vmul.f32 %v2442, %v2420
        %v2449 = vmul.f32 %v2442, %v2421
        %v2450 = vmul.f32 %v2442, %v2422
        %v2451 = vadd.f32 %v2383, %v2443
        %v2452 = vadd.f32 %v2384, %v2444
        %v2453 = vadd.f32 %v2385, %v2445
        %v2454 = vadd.f32 %v2386, %v2446
        %v2455 = vadd.f32 %v2387, %v2447
        %v2456 = vadd.f32 %v2388, %v2448
        %v2457 = vadd.f32 %v2389, %v2449
        %v2458 = vadd.f32 %v2390, %v2450
        %v2459 = vrot.slane %v1782, 7
        %v2460 = vrot.slane %v1787, 7
        %v2461 = vrot.slane %v1792, 7
        %v2462 = vrot.slane %v1797, 7
        %v2463 = vrot.slane %v1802, 7
        %v2464 = vrot.slane %v1807, 7
        %v2465 = vrot.slane %v1812, 7
        %v2466 = vrot.slane %v1817, 7
        %v2467 = vsel %vm1917, %v2465, %v2466
        %v2468 = vsel %vm1917, %v2464, %v2465
        %v2469 = vsel %vm1917, %v2463, %v2464
        %v2470 = vsel %vm1917, %v2462, %v2463
        %v2471 = vsel %vm1917, %v2461, %v2462
        %v2472 = vsel %vm1917, %v2460, %v2461
        %v2473 = vsel %vm1917, %v2459, %v2460
        %v2474 = vsel %vm1917, %v2466, %v2459
        %2475 = vrot.lane.b32.xlu0 %v2474, 1
        %v2476 = vpop.permute.xlu0 %2475
        %2477 = vrot.lane.b32.xlu0 %v2473, 1
        %v2478 = vpop.permute.xlu0 %2477
        %2479 = vrot.lane.b32.xlu0 %v2472, 1
        %v2480 = vpop.permute.xlu0 %2479
        %2481 = vrot.lane.b32.xlu0 %v2471, 1
        %v2482 = vpop.permute.xlu0 %2481
        %2483 = vrot.lane.b32.xlu0 %v2470, 1
        %v2484 = vpop.permute.xlu0 %2483
        %2485 = vrot.lane.b32.xlu0 %v2469, 1
        %v2486 = vpop.permute.xlu0 %2485
        %2487 = vrot.lane.b32.xlu0 %v2468, 1
        %v2488 = vpop.permute.xlu0 %2487
        %2489 = vrot.lane.b32.xlu0 %v2467, 1
        %v2490 = vpop.permute.xlu0 %2489
        %v2491 = vsel %vm1855, %v2476, 0.0
        %v2492 = vsel %vm1856, %v2478, 0.0
        %v2493 = vsel %vm1857, %v2480, 0.0
        %v2494 = vsel %vm1858, %v2482, 0.0
        %v2495 = vsel %vm1859, %v2484, 0.0
        %v2496 = vsel %vm1860, %v2486, 0.0
        %v2497 = vsel %vm1861, %v2488, 0.0
        %v2498 = vsel %vm1862, %v2490, 0.0
        %v2499 = vsel %vm1898, %v2491, 0.0
        %v2500 = vsel %vm1898, %v2492, 0.0
        %v2501 = vsel %vm1898, %v2493, 0.0
        %v2502 = vsel %vm1898, %v2494, 0.0
        %v2503 = vsel %vm1898, %v2495, 0.0
        %v2504 = vsel %vm1898, %v2496, 0.0
        %v2505 = vsel %vm1898, %v2497, 0.0
        %v2506 = vsel %vm1898, %v2498, 0.0
        %s2507 = sld [smem:[#allocation7 + $0x9]]
        %v2508 = vstv %s2507
        %v2509 = vmul.f32 %v2508, %v2499
        %v2510 = vmul.f32 %v2508, %v2500
        %v2511 = vmul.f32 %v2508, %v2501
        %v2512 = vmul.f32 %v2508, %v2502
        %v2513 = vmul.f32 %v2508, %v2503
        %v2514 = vmul.f32 %v2508, %v2504
        %v2515 = vmul.f32 %v2508, %v2505
        %v2516 = vmul.f32 %v2508, %v2506
        %v2517 = vadd.f32 %v2433, %v2509
        %v2518 = vadd.f32 %v2434, %v2510
        %v2519 = vadd.f32 %v2435, %v2511
        %v2520 = vadd.f32 %v2436, %v2512
        %v2521 = vadd.f32 %v2437, %v2513
        %v2522 = vadd.f32 %v2438, %v2514
        %v2523 = vadd.f32 %v2439, %v2515
        %v2524 = vadd.f32 %v2440, %v2516
        %s2525 = sld [smem:[#allocation7 + $0x1b]]
        %v2526 = vstv %s2525
        %v2527 = vmul.f32 %v2526, %v2499
        %v2528 = vmul.f32 %v2526, %v2500
        %v2529 = vmul.f32 %v2526, %v2501
        %v2530 = vmul.f32 %v2526, %v2502
        %v2531 = vmul.f32 %v2526, %v2503
        %v2532 = vmul.f32 %v2526, %v2504
        %v2533 = vmul.f32 %v2526, %v2505
        %v2534 = vmul.f32 %v2526, %v2506
        %v2535 = vadd.f32 %v2451, %v2527
        %v2536 = vadd.f32 %v2452, %v2528
        %v2537 = vadd.f32 %v2453, %v2529
        %v2538 = vadd.f32 %v2454, %v2530
        %v2539 = vadd.f32 %v2455, %v2531
        %v2540 = vadd.f32 %v2456, %v2532
        %v2541 = vadd.f32 %v2457, %v2533
        %v2542 = vadd.f32 %v2458, %v2534
        %v2543 = vsel %vm1855, %v2474, 0.0
        %v2544 = vsel %vm1856, %v2473, 0.0
        %v2545 = vsel %vm1857, %v2472, 0.0
        %v2546 = vsel %vm1858, %v2471, 0.0
        %v2547 = vsel %vm1859, %v2470, 0.0
        %v2548 = vsel %vm1860, %v2469, 0.0
        %v2549 = vsel %vm1861, %v2468, 0.0
        %v2550 = vsel %vm1862, %v2467, 0.0
        %s2551 = sld [smem:[#allocation7 + $0xa]]
        %v2552 = vstv %s2551
        %v2553 = vmul.f32 %v2552, %v2543
        %v2554 = vmul.f32 %v2552, %v2544
        %v2555 = vmul.f32 %v2552, %v2545
        %v2556 = vmul.f32 %v2552, %v2546
        %v2557 = vmul.f32 %v2552, %v2547
        %v2558 = vmul.f32 %v2552, %v2548
        %v2559 = vmul.f32 %v2552, %v2549
        %v2560 = vmul.f32 %v2552, %v2550
        %v2561 = vadd.f32 %v2517, %v2553
        %v2562 = vadd.f32 %v2518, %v2554
        %v2563 = vadd.f32 %v2519, %v2555
        %v2564 = vadd.f32 %v2520, %v2556
        %v2565 = vadd.f32 %v2521, %v2557
        %v2566 = vadd.f32 %v2522, %v2558
        %v2567 = vadd.f32 %v2523, %v2559
        %v2568 = vadd.f32 %v2524, %v2560
        %s2569 = sld [smem:[#allocation7 + $0x1c]]
        %v2570 = vstv %s2569
        %v2571 = vmul.f32 %v2570, %v2543
        %v2572 = vmul.f32 %v2570, %v2544
        %v2573 = vmul.f32 %v2570, %v2545
        %v2574 = vmul.f32 %v2570, %v2546
        %v2575 = vmul.f32 %v2570, %v2547
        %v2576 = vmul.f32 %v2570, %v2548
        %v2577 = vmul.f32 %v2570, %v2549
        %v2578 = vmul.f32 %v2570, %v2550
        %v2579 = vadd.f32 %v2535, %v2571
        %v2580 = vadd.f32 %v2536, %v2572
        %v2581 = vadd.f32 %v2537, %v2573
        %v2582 = vadd.f32 %v2538, %v2574
        %v2583 = vadd.f32 %v2539, %v2575
        %v2584 = vadd.f32 %v2540, %v2576
        %v2585 = vadd.f32 %v2541, %v2577
        %v2586 = vadd.f32 %v2542, %v2578
        %2587 = vrot.lane.b32.xlu0 %v2474, 127
        %v2588 = vpop.permute.xlu0 %2587
        %2589 = vrot.lane.b32.xlu0 %v2473, 127
        %v2590 = vpop.permute.xlu0 %2589
        %2591 = vrot.lane.b32.xlu0 %v2472, 127
        %v2592 = vpop.permute.xlu0 %2591
        %2593 = vrot.lane.b32.xlu0 %v2471, 127
        %v2594 = vpop.permute.xlu0 %2593
        %2595 = vrot.lane.b32.xlu0 %v2470, 127
        %v2596 = vpop.permute.xlu0 %2595
        %2597 = vrot.lane.b32.xlu0 %v2469, 127
        %v2598 = vpop.permute.xlu0 %2597
        %2599 = vrot.lane.b32.xlu0 %v2468, 127
        %v2600 = vpop.permute.xlu0 %2599
        %2601 = vrot.lane.b32.xlu0 %v2467, 127
        %v2602 = vpop.permute.xlu0 %2601
        %v2603 = vsel %vm1855, %v2588, 0.0
        %v2604 = vsel %vm1856, %v2590, 0.0
        %v2605 = vsel %vm1857, %v2592, 0.0
        %v2606 = vsel %vm1858, %v2594, 0.0
        %v2607 = vsel %vm1859, %v2596, 0.0
        %v2608 = vsel %vm1860, %v2598, 0.0
        %v2609 = vsel %vm1861, %v2600, 0.0
        %v2610 = vsel %vm1862, %v2602, 0.0
        %v2611 = vsel %vm1902, %v2603, 0.0
        %v2612 = vsel %vm1902, %v2604, 0.0
        %v2613 = vsel %vm1902, %v2605, 0.0
        %v2614 = vsel %vm1902, %v2606, 0.0
        %v2615 = vsel %vm1902, %v2607, 0.0
        %v2616 = vsel %vm1902, %v2608, 0.0
        %v2617 = vsel %vm1902, %v2609, 0.0
        %v2618 = vsel %vm1902, %v2610, 0.0
        %s2619 = sld [smem:[#allocation7 + $0xb]]
        %v2620 = vstv %s2619
        %v2621 = vmul.f32 %v2620, %v2611
        %v2622 = vmul.f32 %v2620, %v2612
        %v2623 = vmul.f32 %v2620, %v2613
        %v2624 = vmul.f32 %v2620, %v2614
        %v2625 = vmul.f32 %v2620, %v2615
        %v2626 = vmul.f32 %v2620, %v2616
        %v2627 = vmul.f32 %v2620, %v2617
        %v2628 = vmul.f32 %v2620, %v2618
        %v2629 = vadd.f32 %v2561, %v2621
        %v2630 = vadd.f32 %v2562, %v2622
        %v2631 = vadd.f32 %v2563, %v2623
        %v2632 = vadd.f32 %v2564, %v2624
        %v2633 = vadd.f32 %v2565, %v2625
        %v2634 = vadd.f32 %v2566, %v2626
        %v2635 = vadd.f32 %v2567, %v2627
        %v2636 = vadd.f32 %v2568, %v2628
        %s2637 = sld [smem:[#allocation7 + $0x1d]]
        %v2638 = vstv %s2637
        %v2639 = vmul.f32 %v2638, %v2611
        %v2640 = vmul.f32 %v2638, %v2612
        %v2641 = vmul.f32 %v2638, %v2613
        %v2642 = vmul.f32 %v2638, %v2614
        %v2643 = vmul.f32 %v2638, %v2615
        %v2644 = vmul.f32 %v2638, %v2616
        %v2645 = vmul.f32 %v2638, %v2617
        %v2646 = vmul.f32 %v2638, %v2618
        %v2647 = vadd.f32 %v2579, %v2639
        %v2648 = vadd.f32 %v2580, %v2640
        %v2649 = vadd.f32 %v2581, %v2641
        %v2650 = vadd.f32 %v2582, %v2642
        %v2651 = vadd.f32 %v2583, %v2643
        %v2652 = vadd.f32 %v2584, %v2644
        %v2653 = vadd.f32 %v2585, %v2645
        %v2654 = vadd.f32 %v2586, %v2646
        %2655 = vrot.lane.b32.xlu0 %v1782, 1
        %v2656 = vpop.permute.xlu0 %2655
        %2657 = vrot.lane.b32.xlu0 %v1787, 1
        %v2658 = vpop.permute.xlu0 %2657
        %2659 = vrot.lane.b32.xlu0 %v1792, 1
        %v2660 = vpop.permute.xlu0 %2659
        %2661 = vrot.lane.b32.xlu0 %v1797, 1
        %v2662 = vpop.permute.xlu0 %2661
        %2663 = vrot.lane.b32.xlu0 %v1802, 1
        %v2664 = vpop.permute.xlu0 %2663
        %2665 = vrot.lane.b32.xlu0 %v1807, 1
        %v2666 = vpop.permute.xlu0 %2665
        %2667 = vrot.lane.b32.xlu0 %v1812, 1
        %v2668 = vpop.permute.xlu0 %2667
        %2669 = vrot.lane.b32.xlu0 %v1817, 1
        %v2670 = vpop.permute.xlu0 %2669
        %v2671 = vsel %vm1898, %v2656, 0.0
        %v2672 = vsel %vm1898, %v2658, 0.0
        %v2673 = vsel %vm1898, %v2660, 0.0
        %v2674 = vsel %vm1898, %v2662, 0.0
        %v2675 = vsel %vm1898, %v2664, 0.0
        %v2676 = vsel %vm1898, %v2666, 0.0
        %v2677 = vsel %vm1898, %v2668, 0.0
        %v2678 = vsel %vm1898, %v2670, 0.0
        %s2679 = sld [smem:[#allocation7 + $0xc]]
        %v2680 = vstv %s2679
        %v2681 = vmul.f32 %v2680, %v2671
        %v2682 = vmul.f32 %v2680, %v2672
        %v2683 = vmul.f32 %v2680, %v2673
        %v2684 = vmul.f32 %v2680, %v2674
        %v2685 = vmul.f32 %v2680, %v2675
        %v2686 = vmul.f32 %v2680, %v2676
        %v2687 = vmul.f32 %v2680, %v2677
        %v2688 = vmul.f32 %v2680, %v2678
        %v2689 = vadd.f32 %v2629, %v2681
        %v2690 = vadd.f32 %v2630, %v2682
        %v2691 = vadd.f32 %v2631, %v2683
        %v2692 = vadd.f32 %v2632, %v2684
        %v2693 = vadd.f32 %v2633, %v2685
        %v2694 = vadd.f32 %v2634, %v2686
        %v2695 = vadd.f32 %v2635, %v2687
        %v2696 = vadd.f32 %v2636, %v2688
        %s2697 = sld [smem:[#allocation7 + $0x1e]]
        %v2698 = vstv %s2697
        %v2699 = vmul.f32 %v2698, %v2671
        %v2700 = vmul.f32 %v2698, %v2672
        %v2701 = vmul.f32 %v2698, %v2673
        %v2702 = vmul.f32 %v2698, %v2674
        %v2703 = vmul.f32 %v2698, %v2675
        %v2704 = vmul.f32 %v2698, %v2676
        %v2705 = vmul.f32 %v2698, %v2677
        %v2706 = vmul.f32 %v2698, %v2678
        %v2707 = vadd.f32 %v2647, %v2699
        %v2708 = vadd.f32 %v2648, %v2700
        %v2709 = vadd.f32 %v2649, %v2701
        %v2710 = vadd.f32 %v2650, %v2702
        %v2711 = vadd.f32 %v2651, %v2703
        %v2712 = vadd.f32 %v2652, %v2704
        %v2713 = vadd.f32 %v2653, %v2705
        %v2714 = vadd.f32 %v2654, %v2706
        %s2715 = sld [smem:[#allocation7 + $0xd]]
        %v2716 = vstv %s2715
        %v2717 = vmul.f32 %v2716, %v1782
        %v2718 = vmul.f32 %v2716, %v1787
        %v2719 = vmul.f32 %v2716, %v1792
        %v2720 = vmul.f32 %v2716, %v1797
        %v2721 = vmul.f32 %v2716, %v1802
        %v2722 = vmul.f32 %v2716, %v1807
        %v2723 = vmul.f32 %v2716, %v1812
        %v2724 = vmul.f32 %v2716, %v1817
        %v2725 = vadd.f32 %v2689, %v2717
        %v2726 = vadd.f32 %v2690, %v2718
        %v2727 = vadd.f32 %v2691, %v2719
        %v2728 = vadd.f32 %v2692, %v2720
        %v2729 = vadd.f32 %v2693, %v2721
        %v2730 = vadd.f32 %v2694, %v2722
        %v2731 = vadd.f32 %v2695, %v2723
        %v2732 = vadd.f32 %v2696, %v2724
        %s2733 = sld [smem:[#allocation7 + $0x1f]]
        %v2734 = vstv %s2733
        %v2735 = vmul.f32 %v2734, %v1782
        %v2736 = vmul.f32 %v2734, %v1787
        %v2737 = vmul.f32 %v2734, %v1792
        %v2738 = vmul.f32 %v2734, %v1797
        %v2739 = vmul.f32 %v2734, %v1802
        %v2740 = vmul.f32 %v2734, %v1807
        %v2741 = vmul.f32 %v2734, %v1812
        %v2742 = vmul.f32 %v2734, %v1817
        %v2743 = vadd.f32 %v2707, %v2735
        %v2744 = vadd.f32 %v2708, %v2736
        %v2745 = vadd.f32 %v2709, %v2737
        %v2746 = vadd.f32 %v2710, %v2738
        %v2747 = vadd.f32 %v2711, %v2739
        %v2748 = vadd.f32 %v2712, %v2740
        %v2749 = vadd.f32 %v2713, %v2741
        %v2750 = vadd.f32 %v2714, %v2742
        %2751 = vrot.lane.b32.xlu0 %v1782, 127
        %v2752 = vpop.permute.xlu0 %2751
        %2753 = vrot.lane.b32.xlu0 %v1787, 127
        %v2754 = vpop.permute.xlu0 %2753
        %2755 = vrot.lane.b32.xlu0 %v1792, 127
        %v2756 = vpop.permute.xlu0 %2755
        %2757 = vrot.lane.b32.xlu0 %v1797, 127
        %v2758 = vpop.permute.xlu0 %2757
        %2759 = vrot.lane.b32.xlu0 %v1802, 127
        %v2760 = vpop.permute.xlu0 %2759
        %2761 = vrot.lane.b32.xlu0 %v1807, 127
        %v2762 = vpop.permute.xlu0 %2761
        %2763 = vrot.lane.b32.xlu0 %v1812, 127
        %v2764 = vpop.permute.xlu0 %2763
        %2765 = vrot.lane.b32.xlu0 %v1817, 127
        %v2766 = vpop.permute.xlu0 %2765
        %v2767 = vsel %vm1902, %v2752, 0.0
        %v2768 = vsel %vm1902, %v2754, 0.0
        %v2769 = vsel %vm1902, %v2756, 0.0
        %v2770 = vsel %vm1902, %v2758, 0.0
        %v2771 = vsel %vm1902, %v2760, 0.0
        %v2772 = vsel %vm1902, %v2762, 0.0
        %v2773 = vsel %vm1902, %v2764, 0.0
        %v2774 = vsel %vm1902, %v2766, 0.0
        %s2775 = sld [smem:[#allocation7 + $0xe]]
        %v2776 = vstv %s2775
        %v2777 = vmul.f32 %v2776, %v2767
        %v2778 = vmul.f32 %v2776, %v2768
        %v2779 = vmul.f32 %v2776, %v2769
        %v2780 = vmul.f32 %v2776, %v2770
        %v2781 = vmul.f32 %v2776, %v2771
        %v2782 = vmul.f32 %v2776, %v2772
        %v2783 = vmul.f32 %v2776, %v2773
        %v2784 = vmul.f32 %v2776, %v2774
        %v2785 = vadd.f32 %v2725, %v2777
        %v2786 = vadd.f32 %v2726, %v2778
        %v2787 = vadd.f32 %v2727, %v2779
        %v2788 = vadd.f32 %v2728, %v2780
        %v2789 = vadd.f32 %v2729, %v2781
        %v2790 = vadd.f32 %v2730, %v2782
        %v2791 = vadd.f32 %v2731, %v2783
        %v2792 = vadd.f32 %v2732, %v2784
        %s2793 = sld [smem:[#allocation7 + $0x20]]
        %v2794 = vstv %s2793
        %v2795 = vmul.f32 %v2794, %v2767
        %v2796 = vmul.f32 %v2794, %v2768
        %v2797 = vmul.f32 %v2794, %v2769
        %v2798 = vmul.f32 %v2794, %v2770
        %v2799 = vmul.f32 %v2794, %v2771
        %v2800 = vmul.f32 %v2794, %v2772
        %v2801 = vmul.f32 %v2794, %v2773
        %v2802 = vmul.f32 %v2794, %v2774
        %v2803 = vadd.f32 %v2743, %v2795
        %v2804 = vadd.f32 %v2744, %v2796
        %v2805 = vadd.f32 %v2745, %v2797
        %v2806 = vadd.f32 %v2746, %v2798
        %v2807 = vadd.f32 %v2747, %v2799
        %v2808 = vadd.f32 %v2748, %v2800
        %v2809 = vadd.f32 %v2749, %v2801
        %v2810 = vadd.f32 %v2750, %v2802
        %v2811 = vrot.slane %v1782, 1
        %v2812 = vrot.slane %v1787, 1
        %v2813 = vrot.slane %v1792, 1
        %v2814 = vrot.slane %v1797, 1
        %v2815 = vrot.slane %v1802, 1
        %v2816 = vrot.slane %v1807, 1
        %v2817 = vrot.slane %v1812, 1
        %v2818 = vrot.slane %v1817, 1
        %v2819 = vsel %vm2270, %v2817, %v2818
        %v2820 = vsel %vm2270, %v2816, %v2817
        %v2821 = vsel %vm2270, %v2815, %v2816
        %v2822 = vsel %vm2270, %v2814, %v2815
        %v2823 = vsel %vm2270, %v2813, %v2814
        %v2824 = vsel %vm2270, %v2812, %v2813
        %v2825 = vsel %vm2270, %v2811, %v2812
        %v2826 = vsel %vm2270, %v2818, %v2811
        %2827 = vrot.lane.b32.xlu0 %v2825, 1
        %v2828 = vpop.permute.xlu0 %2827
        %2829 = vrot.lane.b32.xlu0 %v2824, 1
        %v2830 = vpop.permute.xlu0 %2829
        %2831 = vrot.lane.b32.xlu0 %v2823, 1
        %v2832 = vpop.permute.xlu0 %2831
        %2833 = vrot.lane.b32.xlu0 %v2822, 1
        %v2834 = vpop.permute.xlu0 %2833
        %2835 = vrot.lane.b32.xlu0 %v2821, 1
        %v2836 = vpop.permute.xlu0 %2835
        %2837 = vrot.lane.b32.xlu0 %v2820, 1
        %v2838 = vpop.permute.xlu0 %2837
        %2839 = vrot.lane.b32.xlu0 %v2819, 1
        %v2840 = vpop.permute.xlu0 %2839
        %2841 = vrot.lane.b32.xlu0 %v2826, 1
        %v2842 = vpop.permute.xlu0 %2841
        %v2843 = vsel %vm1887, %v2828, 0.0
        %v2844 = vsel %vm1888, %v2830, 0.0
        %v2845 = vsel %vm1889, %v2832, 0.0
        %v2846 = vsel %vm1890, %v2834, 0.0
        %v2847 = vsel %vm1891, %v2836, 0.0
        %v2848 = vsel %vm1892, %v2838, 0.0
        %v2849 = vsel %vm1893, %v2840, 0.0
        %v2850 = vsel %vm1894, %v2842, 0.0
        %v2851 = vsel %vm1898, %v2843, 0.0
        %v2852 = vsel %vm1898, %v2844, 0.0
        %v2853 = vsel %vm1898, %v2845, 0.0
        %v2854 = vsel %vm1898, %v2846, 0.0
        %v2855 = vsel %vm1898, %v2847, 0.0
        %v2856 = vsel %vm1898, %v2848, 0.0
        %v2857 = vsel %vm1898, %v2849, 0.0
        %v2858 = vsel %vm1898, %v2850, 0.0
        %s2859 = sld [smem:[#allocation7 + $0xf]]
        %v2860 = vstv %s2859
        %v2861 = vmul.f32 %v2860, %v2851
        %v2862 = vmul.f32 %v2860, %v2852
        %v2863 = vmul.f32 %v2860, %v2853
        %v2864 = vmul.f32 %v2860, %v2854
        %v2865 = vmul.f32 %v2860, %v2855
        %v2866 = vmul.f32 %v2860, %v2856
        %v2867 = vmul.f32 %v2860, %v2857
        %v2868 = vmul.f32 %v2860, %v2858
        %v2869 = vadd.f32 %v2785, %v2861
        %v2870 = vadd.f32 %v2786, %v2862
        %v2871 = vadd.f32 %v2787, %v2863
        %v2872 = vadd.f32 %v2788, %v2864
        %v2873 = vadd.f32 %v2789, %v2865
        %v2874 = vadd.f32 %v2790, %v2866
        %v2875 = vadd.f32 %v2791, %v2867
        %v2876 = vadd.f32 %v2792, %v2868
        %s2877 = sld [smem:[#allocation7 + $0x21]]
        %v2878 = vstv %s2877
        %v2879 = vmul.f32 %v2878, %v2851
        %v2880 = vmul.f32 %v2878, %v2852
        %v2881 = vmul.f32 %v2878, %v2853
        %v2882 = vmul.f32 %v2878, %v2854
        %v2883 = vmul.f32 %v2878, %v2855
        %v2884 = vmul.f32 %v2878, %v2856
        %v2885 = vmul.f32 %v2878, %v2857
        %v2886 = vmul.f32 %v2878, %v2858
        %v2887 = vadd.f32 %v2803, %v2879
        %v2888 = vadd.f32 %v2804, %v2880
        %v2889 = vadd.f32 %v2805, %v2881
        %v2890 = vadd.f32 %v2806, %v2882
        %v2891 = vadd.f32 %v2807, %v2883
        %v2892 = vadd.f32 %v2808, %v2884
        %v2893 = vadd.f32 %v2809, %v2885
        %v2894 = vadd.f32 %v2810, %v2886
        %v2895 = vsel %vm1887, %v2825, 0.0
        %v2896 = vsel %vm1888, %v2824, 0.0
        %v2897 = vsel %vm1889, %v2823, 0.0
        %v2898 = vsel %vm1890, %v2822, 0.0
        %v2899 = vsel %vm1891, %v2821, 0.0
        %v2900 = vsel %vm1892, %v2820, 0.0
        %v2901 = vsel %vm1893, %v2819, 0.0
        %v2902 = vsel %vm1894, %v2826, 0.0
        %s2903 = sld [smem:[#allocation7 + $0x10]]
        %v2904 = vstv %s2903
        %v2905 = vmul.f32 %v2904, %v2895
        %v2906 = vmul.f32 %v2904, %v2896
        %v2907 = vmul.f32 %v2904, %v2897
        %v2908 = vmul.f32 %v2904, %v2898
        %v2909 = vmul.f32 %v2904, %v2899
        %v2910 = vmul.f32 %v2904, %v2900
        %v2911 = vmul.f32 %v2904, %v2901
        %v2912 = vmul.f32 %v2904, %v2902
        %v2913 = vadd.f32 %v2869, %v2905
        %v2914 = vadd.f32 %v2870, %v2906
        %v2915 = vadd.f32 %v2871, %v2907
        %v2916 = vadd.f32 %v2872, %v2908
        %v2917 = vadd.f32 %v2873, %v2909
        %v2918 = vadd.f32 %v2874, %v2910
        %v2919 = vadd.f32 %v2875, %v2911
        %v2920 = vadd.f32 %v2876, %v2912
        %s2921 = sld [smem:[#allocation7 + $0x22]]
        %v2922 = vstv %s2921
        %v2923 = vmul.f32 %v2922, %v2895
        %v2924 = vmul.f32 %v2922, %v2896
        %v2925 = vmul.f32 %v2922, %v2897
        %v2926 = vmul.f32 %v2922, %v2898
        %v2927 = vmul.f32 %v2922, %v2899
        %v2928 = vmul.f32 %v2922, %v2900
        %v2929 = vmul.f32 %v2922, %v2901
        %v2930 = vmul.f32 %v2922, %v2902
        %v2931 = vadd.f32 %v2887, %v2923
        %v2932 = vadd.f32 %v2888, %v2924
        %v2933 = vadd.f32 %v2889, %v2925
        %v2934 = vadd.f32 %v2890, %v2926
        %v2935 = vadd.f32 %v2891, %v2927
        %v2936 = vadd.f32 %v2892, %v2928
        %v2937 = vadd.f32 %v2893, %v2929
        %v2938 = vadd.f32 %v2894, %v2930
        %2939 = vrot.lane.b32.xlu0 %v2825, 127
        %v2940 = vpop.permute.xlu0 %2939
        %2941 = vrot.lane.b32.xlu0 %v2824, 127
        %v2942 = vpop.permute.xlu0 %2941
        %2943 = vrot.lane.b32.xlu0 %v2823, 127
        %v2944 = vpop.permute.xlu0 %2943
        %2945 = vrot.lane.b32.xlu0 %v2822, 127
        %v2946 = vpop.permute.xlu0 %2945
        %2947 = vrot.lane.b32.xlu0 %v2821, 127
        %v2948 = vpop.permute.xlu0 %2947
        %2949 = vrot.lane.b32.xlu0 %v2820, 127
        %v2950 = vpop.permute.xlu0 %2949
        %2951 = vrot.lane.b32.xlu0 %v2819, 127
        %v2952 = vpop.permute.xlu0 %2951
        %2953 = vrot.lane.b32.xlu0 %v2826, 127
        %v2954 = vpop.permute.xlu0 %2953
        %v2955 = vsel %vm1887, %v2940, 0.0
        %v2956 = vsel %vm1888, %v2942, 0.0
        %v2957 = vsel %vm1889, %v2944, 0.0
        %v2958 = vsel %vm1890, %v2946, 0.0
        %v2959 = vsel %vm1891, %v2948, 0.0
        %v2960 = vsel %vm1892, %v2950, 0.0
        %v2961 = vsel %vm1893, %v2952, 0.0
        %v2962 = vsel %vm1894, %v2954, 0.0
        %v2963 = vsel %vm1902, %v2955, 0.0
        %v2964 = vsel %vm1902, %v2956, 0.0
        %v2965 = vsel %vm1902, %v2957, 0.0
        %v2966 = vsel %vm1902, %v2958, 0.0
        %v2967 = vsel %vm1902, %v2959, 0.0
        %v2968 = vsel %vm1902, %v2960, 0.0
        %v2969 = vsel %vm1902, %v2961, 0.0
        %v2970 = vsel %vm1902, %v2962, 0.0
        %s2971 = sld [smem:[#allocation7 + $0x11]]
        %v2972 = vstv %s2971
        %v2973 = vmul.f32 %v2972, %v2963
        %v2974 = vmul.f32 %v2972, %v2964
        %v2975 = vmul.f32 %v2972, %v2965
        %v2976 = vmul.f32 %v2972, %v2966
        %v2977 = vmul.f32 %v2972, %v2967
        %v2978 = vmul.f32 %v2972, %v2968
        %v2979 = vmul.f32 %v2972, %v2969
        %v2980 = vmul.f32 %v2972, %v2970
        %v2981 = vadd.f32 %v2913, %v2973
        %v2982 = vadd.f32 %v2914, %v2974
        %v2983 = vadd.f32 %v2915, %v2975
        %v2984 = vadd.f32 %v2916, %v2976
        %v2985 = vadd.f32 %v2917, %v2977
        %v2986 = vadd.f32 %v2918, %v2978
        %v2987 = vadd.f32 %v2919, %v2979
        %v2988 = vadd.f32 %v2920, %v2980
        %s2989 = sld [smem:[#allocation7 + $0x23]]
        %v2990 = vstv %s2989
        %v2991 = vmul.f32 %v2990, %v2963
        %v2992 = vmul.f32 %v2990, %v2964
        %v2993 = vmul.f32 %v2990, %v2965
        %v2994 = vmul.f32 %v2990, %v2966
        %v2995 = vmul.f32 %v2990, %v2967
        %v2996 = vmul.f32 %v2990, %v2968
        %v2997 = vmul.f32 %v2990, %v2969
        %v2998 = vmul.f32 %v2990, %v2970
        %v2999 = vadd.f32 %v2931, %v2991
        %v3000 = vadd.f32 %v2932, %v2992
        %v3001 = vadd.f32 %v2933, %v2993
        %v3002 = vadd.f32 %v2934, %v2994
        %v3003 = vadd.f32 %v2935, %v2995
        %v3004 = vadd.f32 %v2936, %v2996
        %v3005 = vadd.f32 %v2937, %v2997
        %v3006 = vadd.f32 %v2938, %v2998
        %v3007 = vmax.f32 %v2981, %v2999
        %v3008 = vmax.f32 %v2982, %v3000
        %v3009 = vmax.f32 %v2983, %v3001
        %v3010 = vmax.f32 %v2984, %v3002
        %v3011 = vmax.f32 %v2985, %v3003
        %v3012 = vmax.f32 %v2986, %v3004
        %v3013 = vmax.f32 %v2987, %v3005
        %v3014 = vmax.f32 %v2988, %v3006
        %v3015 = vsub.f32 %v2981, %v3007
        %v3016 = vsub.f32 %v2982, %v3008
        %v3017 = vsub.f32 %v2983, %v3009
        %v3018 = vsub.f32 %v2984, %v3010
        %v3019 = vsub.f32 %v2985, %v3011
        %v3020 = vsub.f32 %v2986, %v3012
        %v3021 = vsub.f32 %v2987, %v3013
        %v3022 = vsub.f32 %v2988, %v3014
        %v3023 = vmul.f32 %v3015, 1.442695
        %v3024 = vpow.pop %v3023
        %v3025 = vmul.f32 %v3016, 1.442695
        %v3026 = vpow.pop %v3025
        %v3027 = vmul.f32 %v3017, 1.442695
        %v3028 = vpow.pop %v3027
        %v3029 = vmul.f32 %v3018, 1.442695
        %v3030 = vpow.pop %v3029
        %v3031 = vmul.f32 %v3019, 1.442695
        %v3032 = vpow.pop %v3031
        %v3033 = vmul.f32 %v3020, 1.442695
        %v3034 = vpow.pop %v3033
        %v3035 = vmul.f32 %v3021, 1.442695
        %v3036 = vpow.pop %v3035
        %v3037 = vmul.f32 %v3022, 1.442695
        %v3038 = vpow.pop %v3037
        %v3039 = vsub.f32 %v2999, %v3007
        %v3040 = vsub.f32 %v3000, %v3008
        %v3041 = vsub.f32 %v3001, %v3009
        %v3042 = vsub.f32 %v3002, %v3010
        %v3043 = vsub.f32 %v3003, %v3011
        %v3044 = vsub.f32 %v3004, %v3012
        %v3045 = vsub.f32 %v3005, %v3013
        %v3046 = vsub.f32 %v3006, %v3014
        %v3047 = vmul.f32 %v3039, 1.442695
        %v3048 = vpow.pop %v3047
        %v3049 = vmul.f32 %v3040, 1.442695
        %v3050 = vpow.pop %v3049
        %v3051 = vmul.f32 %v3041, 1.442695
        %v3052 = vpow.pop %v3051
        %v3053 = vmul.f32 %v3042, 1.442695
        %v3054 = vpow.pop %v3053
        %v3055 = vmul.f32 %v3043, 1.442695
        %v3056 = vpow.pop %v3055
        %v3057 = vmul.f32 %v3044, 1.442695
        %v3058 = vpow.pop %v3057
        %v3059 = vmul.f32 %v3045, 1.442695
        %v3060 = vpow.pop %v3059
        %v3061 = vmul.f32 %v3046, 1.442695
        %v3062 = vpow.pop %v3061
        %v3063 = vadd.f32 %v3024, %v3048
        %v3064 = vadd.f32 %v3026, %v3050
        %v3065 = vadd.f32 %v3028, %v3052
        %v3066 = vadd.f32 %v3030, %v3054
        %v3067 = vadd.f32 %v3032, %v3056
        %v3068 = vadd.f32 %v3034, %v3058
        %v3069 = vadd.f32 %v3036, %v3060
        %v3070 = vadd.f32 %v3038, %v3062
        %v3071 = vrcp.pop %v3063
        %v3072 = vrcp.pop %v3064
        %v3073 = vrcp.pop %v3065
        %v3074 = vrcp.pop %v3066
        %v3075 = vrcp.pop %v3067
        %v3076 = vrcp.pop %v3068
        %v3077 = vrcp.pop %v3069
        %v3078 = vrcp.pop %v3070
        %v3079 = vmul.f32 %v3024, %v3071
        %v3080 = vmul.f32 %v3026, %v3072
        %v3081 = vmul.f32 %v3028, %v3073
        %v3082 = vmul.f32 %v3030, %v3074
        %v3083 = vmul.f32 %v3032, %v3075
        %v3084 = vmul.f32 %v3034, %v3076
        %v3085 = vmul.f32 %v3036, %v3077
        %v3086 = vmul.f32 %v3038, %v3078
        %v3087 = vmul.f32 %v1340, %v3079
        %v3088 = vmul.f32 %v1345, %v3080
        %v3089 = vmul.f32 %v1350, %v3081
        %v3090 = vmul.f32 %v1355, %v3082
        %v3091 = vmul.f32 %v1360, %v3083
        %v3092 = vmul.f32 %v1365, %v3084
        %v3093 = vmul.f32 %v1370, %v3085
        %v3094 = vmul.f32 %v1375, %v3086
        %v3095 = vmul.f32 %v3048, %v3071
        %v3096 = vmul.f32 %v3050, %v3072
        %v3097 = vmul.f32 %v3052, %v3073
        %v3098 = vmul.f32 %v3054, %v3074
        %v3099 = vmul.f32 %v3056, %v3075
        %v3100 = vmul.f32 %v3058, %v3076
        %v3101 = vmul.f32 %v3060, %v3077
        %v3102 = vmul.f32 %v3062, %v3078
        %v3103 = vmul.f32 %v1782, %v3095
        %v3104 = vmul.f32 %v1787, %v3096
        %v3105 = vmul.f32 %v1792, %v3097
        %v3106 = vmul.f32 %v1797, %v3098
        %v3107 = vmul.f32 %v1802, %v3099
        %v3108 = vmul.f32 %v1807, %v3100
        %v3109 = vmul.f32 %v1812, %v3101
        %v3110 = vmul.f32 %v1817, %v3102
        %v3111 = vadd.f32 %v3087, %v3103
        %v3112 = vadd.f32 %v3088, %v3104
        %v3113 = vadd.f32 %v3089, %v3105
        %v3114 = vadd.f32 %v3090, %v3106
        %v3115 = vadd.f32 %v3091, %v3107
        %v3116 = vadd.f32 %v3092, %v3108
        %v3117 = vadd.f32 %v3093, %v3109
        %v3118 = vadd.f32 %v3094, %v3110
        %3119 = vst [vmem:[%s512] sm:$0xff] %v3111
        %3120 = vst [vmem:[%s512 + $0x8] sm:$0xff] %v3112
        %3121 = vst [vmem:[%s512 + $0x10] sm:$0xff] %v3113
        %3122 = vst [vmem:[%s512 + $0x18] sm:$0xff] %v3114
        %3123 = vst [vmem:[%s512 + $0x20] sm:$0xff] %v3115
        %3124 = vst [vmem:[%s512 + $0x28] sm:$0xff] %v3116
        %3125 = vst [vmem:[%s512 + $0x30] sm:$0xff] %v3117
        %3126 = vst [vmem:[%s512 + $0x38] sm:$0xff] %v3118
        %s3127 = sand.u32 %s338, 1
        %s3128 = scalar_lea.sflag [#allocation3], %s3127
        %s3129 = sand.u32 %s338, 1
        %s3130 = smul.addr %s3129, 64
        %s3131 = scalar_lea.vmem [#allocation10], %s3130
        // Predicated region
        $region93: #{tpu_custom_call.1} parent=75 // pred_check
          %p3132 = pneg %p348
        $region94: #{tpu_custom_call.1} parent=75 // pred_check_branch
          %3134 = sbr.rel (%p3132) target = $region96
        $region95: #{tpu_custom_call.1} parent=75 // pred_region
          %s3136 = ssub.s32 1024, 1024
          %3137 = vsyncadd %s3128, %s3136
          %s3138 = smul.addr %s31, 8
          %s3139 = smul.addr %s3138, 128
          %s3140 = scalar_lea.hbm %s14, %s3139
          %s3141 = sshll.u32 %s3131, 4
          %s3142 = int_to_ptr.vmem [resolvable:$true] %s3141
          %3147 = dma.vmem_to_hbm [thread:$0]  %s3142, 1024, %s3140, %s3128, 128, 128, 8
        $region96: #{tpu_custom_call.1} parent=75 // pred_fallthru
          _
      $region76: #{tpu_custom_call.1} parent=5 // pred_fallthru
        _
      %p3148 = scmp.le.s32.totalorder 2, %s26
      // Predicated region
      $region97: #{tpu_custom_call.1} parent=5 // pred_check
        %p3149 = pneg %p3148
      $region98: #{tpu_custom_call.1} parent=5 // pred_check_branch
        %3151 = sbr.rel (%p3149) target = $region100
      $region99: #{tpu_custom_call.1} parent=5 // pred_region
        %s3152 = ssub.s32 %s26, 2
        // Predicated region
        $region101: #{tpu_custom_call.1} parent=99 // pred_check
          %p3153 = pneg %p354
        $region102: #{tpu_custom_call.1} parent=99 // pred_check_branch
          %3155 = sbr.rel (%p3153) target = $region104
        $region103: #{tpu_custom_call.1} parent=99 // pred_region
          %s3156 = sand.u32 %s339, 1
          %s3157 = scalar_lea.sflag [#allocation3], %s3156
          %s3158 = sand.u32 %s339, 1
          %s3159 = smul.addr %s3158, 64
          %s3160 = scalar_lea.vmem [#allocation10], %s3159
          %3161 = dma.done %s3157, 1024
        $region104: #{tpu_custom_call.1} parent=99 // pred_fallthru
          _
      $region100: #{tpu_custom_call.1} parent=5 // pred_fallthru
        _
    $region6: #{tpu_custom_call.1} parent=1 // loop_footer
      %s30 = sadd.s32 1, %s26
    $region7: #{tpu_custom_call.1} parent=1 // loop_footer_branch
      %25 = sbr.rel target = $region3
    $region8: #{tpu_custom_call.1} parent=1 // loop_exit
      _
    %3162 = vsyncpa [#allocation3], 1
    %s3163 = scalar_lea.sflag [#allocation3], 1
    %3164 = vsyncpa %s3163, 1
    %3165 = vsyncpa [#allocation4], 1
    %s3166 = scalar_lea.sflag [#allocation4], 1
    %3167 = vsyncpa %s3166, 1
    %3168 = vsyncpa [#allocation6], 1
    %3169 = vsyncpa [#allocation9], 1

</llo_original>
